<compile_context>
chip_gen: v7x
topology: tpu7x:2x2x1
jax: 0.10.0
libtpu: 0.0.40
codegen_flags: <defaults>
</compile_context>

<pallas_src>
import functools
import math

import jax
import jax.numpy as jnp
from jax.experimental import pallas as pl

# ----------------------------- configuration ------------------------------
B = 2          # batch
S = 8          # sequence length
D = 32         # d_model
H = 4          # nhead
DH = D // H    # head dim
F = 64         # dim_feedforward
NUM_LAYERS = 2
EPS = 1e-5


# ------------------------------ kernel --------------------------------------
def _layernorm(x, g, b):
    mu = jnp.mean(x, axis=-1, keepdims=True)
    var = jnp.mean((x - mu) ** 2, axis=-1, keepdims=True)
    return (x - mu) * jax.lax.rsqrt(var + EPS) * g + b


def fused_encoder_kernel(src_ref, src1_ref, pos_ref,
                         wq_ref, wo_ref, wkv_ref, w1_ref, w2_ref, vec_ref,
                         out_ref, *, num_layers, num_heads, head_dim, seq,
                         batch, d_model, ffn_dim):
    f32, bf16 = jnp.float32, jnp.bfloat16

    # ---- fuse batch along the sublane axis (aligned concat, no reshape) ----
    x = jnp.concatenate([src_ref[b] for b in range(batch)], axis=0).astype(f32)
    src1 = jnp.concatenate([src1_ref[b] for b in range(batch)], axis=0).astype(f32)
    pos = jnp.concatenate([pos_ref[b] for b in range(batch)], axis=0).astype(f32)
    # shapes: (B*S, D)

    vec = vec_ref[...]                      # (10*L + 2, F) f32 bias / LN slab

    def vrow(r, n):                         # (1, n) row of the vector slab
        return vec[r:r + 1, :n]

    # K / V inputs are layer-invariant for this layer variant
    # (k = src1 + pos, v = src1): project them for ALL layers with two dense
    # lane-wide matmuls hoisted out of the layer loop.
    kin = (src1 + pos).astype(bf16)
    vin = src1.astype(bf16)
    k_all = jnp.dot(kin, wkv_ref[0], preferred_element_type=f32)   # (B*S, L*D)
    v_all = jnp.dot(vin, wkv_ref[1], preferred_element_type=f32)   # (B*S, L*D)

    # NOTE: static Python loop is fine at L=2; switch to a layer grid axis /
    # lax.fori_loop when num_layers grows (live-range / code-size control).
    for l in range(num_layers):
        r0 = 10 * l
        bq = vrow(r0 + 0, d_model)
        bk = vrow(r0 + 1, d_model)
        bv = vrow(r0 + 2, d_model)
        bo = vrow(r0 + 3, d_model)
        b1 = vrow(r0 + 4, ffn_dim)
        b2 = vrow(r0 + 5, d_model)

        # ---------------- self attention ----------------
        # Q projection: ONE dense (B*S, D) @ (D, D) matmul; the 1/sqrt(DH)
        # scale is pre-folded into wq/bq at pack time.
        q = jnp.dot((x + pos).astype(bf16), wq_ref[l],
                    preferred_element_type=f32) + bq               # (B*S, D)
        k = k_all[:, l * d_model:(l + 1) * d_model] + bk            # (B*S, D)
        v = v_all[:, l * d_model:(l + 1) * d_model] + bv            # (B*S, D)

        # Scores / PV are intrinsically per-(batch, head) at these sizes.
        # Head outputs land back along lanes, so the output projection is a
        # single dense (B*S, D) @ (D, D) matmul (== concat(heads) @ Wo).
        o_rows = []
        for b in range(batch):
            s0 = b * seq
            o_heads = []
            for h in range(num_heads):
                c0 = h * head_dim
                qh = q[s0:s0 + seq, c0:c0 + head_dim].astype(bf16)
                kh = k[s0:s0 + seq, c0:c0 + head_dim].astype(bf16)
                vh = v[s0:s0 + seq, c0:c0 + head_dim].astype(bf16)
                # scores (S, S): contract head_dim of both (no transpose op)
                sc = jax.lax.dot_general(qh, kh, (((1,), (1,)), ((), ())),
                                         preferred_element_type=f32)
                m = jnp.max(sc, axis=-1, keepdims=True)
                e = jnp.exp(sc - m)
                p = e * pl.reciprocal(jnp.sum(e, axis=-1, keepdims=True),
                                      approx=True)
                o_heads.append(jnp.dot(p.astype(bf16), vh,
                                       preferred_element_type=f32))  # (S, DH)
            o_rows.append(jnp.concatenate(o_heads, axis=-1))          # (S, D)
        o = jnp.concatenate(o_rows, axis=0)                           # (B*S, D)

        attn = jnp.dot(o.astype(bf16), wo_ref[l],
                       preferred_element_type=f32) + bo

        # residual + LayerNorm 1
        x = _layernorm(x + attn, vrow(r0 + 6, d_model), vrow(r0 + 7, d_model))

        # ---------------- feed forward ----------------
        h1 = jnp.dot(x.astype(bf16), w1_ref[l],
                     preferred_element_type=f32) + b1                # (B*S, F)
        h1 = jnp.maximum(h1, 0.0)
        ffn = jnp.dot(h1.astype(bf16), w2_ref[l],
                      preferred_element_type=f32) + b2               # (B*S, D)

        # residual + LayerNorm 2
        x = _layernorm(x + ffn, vrow(r0 + 8, d_model), vrow(r0 + 9, d_model))

    # final LayerNorm (self.norm)
    y = _layernorm(x, vrow(10 * num_layers, d_model),
                   vrow(10 * num_layers + 1, d_model))

    for b in range(batch):
        out_ref[b] = y[b * seq:(b + 1) * seq, :]


# ------------------------------ wrapper --------------------------------------
def transformer_encoder(src, src1, pos, params):
    batch, seq, d_model = src.shape
    kernel = functools.partial(
        fused_encoder_kernel, num_layers=NUM_LAYERS, num_heads=H, head_dim=DH,
        seq=seq, batch=batch, d_model=d_model, ffn_dim=F)
    # Single invocation (no grid): everything is VMEM-resident, the whole
    # residual stream stays on-chip for the full forward pass.
    return pl.pallas_call(
        kernel,
        out_shape=jax.ShapeDtypeStruct((batch, seq, d_model), jnp.float32),
    )(src, src1, pos, *params)


# --------------------------- parameter init / packing ------------------------
def init_layer_params(key):
    ks = jax.random.split(key, 6)
    s = 0.05
    return dict(
        wq=s * jax.random.normal(ks[0], (D, D), jnp.float32),
        wk=s * jax.random.normal(ks[1], (D, D), jnp.float32),
        wv=s * jax.random.normal(ks[2], (D, D), jnp.float32),
        wo=s * jax.random.normal(ks[3], (D, D), jnp.float32),
        w1=s * jax.random.normal(ks[4], (D, F), jnp.float32),
        w2=s * jax.random.normal(ks[5], (F, D), jnp.float32),
        bq=jnp.zeros((D,), jnp.float32), bk=jnp.zeros((D,), jnp.float32),
        bv=jnp.zeros((D,), jnp.float32), bo=jnp.zeros((D,), jnp.float32),
        b1=jnp.zeros((F,), jnp.float32), b2=jnp.zeros((D,), jnp.float32),
        ln1g=jnp.ones((D,), jnp.float32), ln1b=jnp.zeros((D,), jnp.float32),
        ln2g=jnp.ones((D,), jnp.float32), ln2b=jnp.zeros((D,), jnp.float32),
    )


def pack_params(per_layer, final_norm):
    """Consolidate all parameters into 6 slabs:
       wq_all (L,D,D) bf16 [scale folded], wo_all (L,D,D) bf16,
       wkv_all (2,D,L*D) bf16, w1_all (L,D,F) bf16, w2_all (L,F,D) bf16,
       vec_all (10L+2, F) f32 (all biases + LayerNorm vectors, long axis last)."""
    scale = 1.0 / math.sqrt(DH)
    wq_all = jnp.stack([p['wq'] * scale for p in per_layer]).astype(jnp.bfloat16)
    wo_all = jnp.stack([p['wo'] for p in per_layer]).astype(jnp.bfloat16)
    wk_cat = jnp.concatenate([p['wk'] for p in per_layer], axis=1)      # (D, L*D)
    wv_cat = jnp.concatenate([p['wv'] for p in per_layer], axis=1)
    wkv_all = jnp.stack([wk_cat, wv_cat]).astype(jnp.bfloat16)          # (2, D, L*D)
    w1_all = jnp.stack([p['w1'] for p in per_layer]).astype(jnp.bfloat16)
    w2_all = jnp.stack([p['w2'] for p in per_layer]).astype(jnp.bfloat16)

    def row(v):
        return jnp.pad(v, (0, F - v.shape[0]))
    rows = []
    for p in per_layer:
        rows += [row(p['bq'] * scale), row(p['bk']), row(p['bv']), row(p['bo']),
                 row(p['b1']), row(p['b2']),
                 row(p['ln1g']), row(p['ln1b']), row(p['ln2g']), row(p['ln2b'])]
    rows += [row(final_norm[0]), row(final_norm[1])]
    vec_all = jnp.stack(rows).astype(jnp.float32)                       # (10L+2, F)
    return (wq_all, wo_all, wkv_all, w1_all, w2_all, vec_all)


# --------------------------- pure-JAX reference -------------------------------
def reference_forward(src, src1, pos, per_layer, final_g, final_b):
    def ln(x, g, b):
        mu = x.mean(-1, keepdims=True)
        var = ((x - mu) ** 2).mean(-1, keepdims=True)
        return (x - mu) / jnp.sqrt(var + EPS) * g + b

    x = src
    for p in per_layer:
        q = (x + pos) @ p['wq'] + p['bq']
        k = (src1 + pos) @ p['wk'] + p['bk']
        v = src1 @ p['wv'] + p['bv']
        b_, s_, _ = q.shape
        qh = q.reshape(b_, s_, H, DH).transpose(0, 2, 1, 3)
        kh = k.reshape(b_, s_, H, DH).transpose(0, 2, 1, 3)
        vh = v.reshape(b_, s_, H, DH).transpose(0, 2, 1, 3)
        sc = jnp.einsum('bhqe,bhke->bhqk', qh, kh) / math.sqrt(DH)
        pr = jax.nn.softmax(sc, axis=-1)
        o = jnp.einsum('bhqk,bhke->bhqe', pr, vh)
        o = o.transpose(0, 2, 1, 3).reshape(b_, s_, D)
        attn = o @ p['wo'] + p['bo']
        x = ln(x + attn, p['ln1g'], p['ln1b'])
        ffn = jnp.maximum(x @ p['w1'] + p['b1'], 0.0) @ p['w2'] + p['b2']
        x = ln(x + ffn, p['ln2g'], p['ln2b'])
    return ln(x, final_g, final_b)


# ---------------------------------- main -------------------------------------
if __name__ == "__main__":
    key = jax.random.PRNGKey(0)
    k_src, k_src1, k_pos, k_params = jax.random.split(key, 4)

    src = jax.random.normal(k_src, (B, S, D), jnp.float32)
    src1 = jax.random.normal(k_src1, (B, S, D), jnp.float32)
    pos = jax.random.normal(k_pos, (B, S, D), jnp.float32)

    layer_keys = jax.random.split(k_params, NUM_LAYERS)
    per_layer = [init_layer_params(k) for k in layer_keys]
    final_g = jnp.ones((D,), jnp.float32)
    final_b = jnp.zeros((D,), jnp.float32)
    params = pack_params(per_layer, (final_g, final_b))

    out = transformer_encoder(src, src1, pos, params)
    out = jax.block_until_ready(out)

    assert out.shape == (B, S, D)
    assert jnp.all(jnp.isfinite(out))

    ref = reference_forward(src, src1, pos, per_layer, final_g, final_b)
    # bf16 MXU operands + approx reciprocal => loose tolerance vs f32 reference
    assert jnp.allclose(out, ref, atol=1e-1, rtol=0.0), \
        float(jnp.max(jnp.abs(out - ref)))

    print("KERNEL_OK")
</pallas_src>

<mosaic_0001>
module attributes {stable_mosaic.version = 11 : i64} {
  func.func @fused_encoder_kernel(%arg0: memref<2x8x32xf32, #tpu.memory_space<vmem>>, %arg1: memref<2x8x32xf32, #tpu.memory_space<vmem>>, %arg2: memref<2x8x32xf32, #tpu.memory_space<vmem>>, %arg3: memref<2x32x32xbf16, #tpu.memory_space<vmem>>, %arg4: memref<2x32x32xbf16, #tpu.memory_space<vmem>>, %arg5: memref<2x32x64xbf16, #tpu.memory_space<vmem>>, %arg6: memref<2x32x64xbf16, #tpu.memory_space<vmem>>, %arg7: memref<2x64x32xbf16, #tpu.memory_space<vmem>>, %arg8: memref<22x64xf32, #tpu.memory_space<vmem>>, %arg9: memref<2x8x32xf32, #tpu.memory_space<vmem>>) attributes {dimension_semantics = [], scalar_prefetch = 0 : i64, scratch_operands = 0 : i64, tpu.core_type = #tpu.core_type<tc>} {
    %c0 = arith.constant 0 : index
    %c0_0 = arith.constant 0 : index
    %c0_1 = arith.constant 0 : index
    %0 = vector.load %arg0[%c0, %c0_0, %c0_1] : memref<2x8x32xf32, #tpu.memory_space<vmem>>, vector<1x8x32xf32>
    %1 = vector.shape_cast %0 : vector<1x8x32xf32> to vector<8x32xf32>
    %c1 = arith.constant 1 : index
    %c0_2 = arith.constant 0 : index
    %c0_3 = arith.constant 0 : index
    %2 = vector.load %arg0[%c1, %c0_2, %c0_3] : memref<2x8x32xf32, #tpu.memory_space<vmem>>, vector<1x8x32xf32>
    %3 = vector.shape_cast %2 : vector<1x8x32xf32> to vector<8x32xf32>
    %4 = tpu.concatenate %1, %3 in 0 : vector<8x32xf32>, vector<8x32xf32> -> vector<16x32xf32>
    %c0_4 = arith.constant 0 : index
    %c0_5 = arith.constant 0 : index
    %c0_6 = arith.constant 0 : index
    %5 = vector.load %arg1[%c0_4, %c0_5, %c0_6] : memref<2x8x32xf32, #tpu.memory_space<vmem>>, vector<1x8x32xf32>
    %6 = vector.shape_cast %5 : vector<1x8x32xf32> to vector<8x32xf32>
    %c1_7 = arith.constant 1 : index
    %c0_8 = arith.constant 0 : index
    %c0_9 = arith.constant 0 : index
    %7 = vector.load %arg1[%c1_7, %c0_8, %c0_9] : memref<2x8x32xf32, #tpu.memory_space<vmem>>, vector<1x8x32xf32>
    %8 = vector.shape_cast %7 : vector<1x8x32xf32> to vector<8x32xf32>
    %9 = tpu.concatenate %6, %8 in 0 : vector<8x32xf32>, vector<8x32xf32> -> vector<16x32xf32>
    %c0_10 = arith.constant 0 : index
    %c0_11 = arith.constant 0 : index
    %c0_12 = arith.constant 0 : index
    %10 = vector.load %arg2[%c0_10, %c0_11, %c0_12] : memref<2x8x32xf32, #tpu.memory_space<vmem>>, vector<1x8x32xf32>
    %11 = vector.shape_cast %10 : vector<1x8x32xf32> to vector<8x32xf32>
    %c1_13 = arith.constant 1 : index
    %c0_14 = arith.constant 0 : index
    %c0_15 = arith.constant 0 : index
    %12 = vector.load %arg2[%c1_13, %c0_14, %c0_15] : memref<2x8x32xf32, #tpu.memory_space<vmem>>, vector<1x8x32xf32>
    %13 = vector.shape_cast %12 : vector<1x8x32xf32> to vector<8x32xf32>
    %14 = tpu.concatenate %11, %13 in 0 : vector<8x32xf32>, vector<8x32xf32> -> vector<16x32xf32>
    %c0_16 = arith.constant 0 : index
    %c0_17 = arith.constant 0 : index
    %15 = vector.load %arg8[%c0_16, %c0_17] : memref<22x64xf32, #tpu.memory_space<vmem>>, vector<22x64xf32>
    %16 = arith.addf %9, %14 : vector<16x32xf32>
    %17 = arith.truncf %16 : vector<16x32xf32> to vector<16x32xbf16>
    %18 = arith.truncf %9 : vector<16x32xf32> to vector<16x32xbf16>
    %c0_18 = arith.constant 0 : index
    %c0_19 = arith.constant 0 : index
    %c0_20 = arith.constant 0 : index
    %19 = vector.load %arg5[%c0_18, %c0_19, %c0_20] : memref<2x32x64xbf16, #tpu.memory_space<vmem>>, vector<1x32x64xbf16>
    %20 = vector.shape_cast %19 : vector<1x32x64xbf16> to vector<32x64xbf16>
    %cst = arith.constant dense<0.000000e+00> : vector<16x64xf32>
    %21 = tpu.matmul %17, %20, %cst {dimension_numbers = #tpu.dot_dimension_numbers<[1], [0], [0], [1], [0, 0, 1, 1], [], []>} : vector<16x32xbf16>, vector<32x64xbf16>, vector<16x64xf32> -> vector<16x64xf32>
    %c1_21 = arith.constant 1 : index
    %c0_22 = arith.constant 0 : index
    %c0_23 = arith.constant 0 : index
    %22 = vector.load %arg5[%c1_21, %c0_22, %c0_23] : memref<2x32x64xbf16, #tpu.memory_space<vmem>>, vector<1x32x64xbf16>
    %23 = vector.shape_cast %22 : vector<1x32x64xbf16> to vector<32x64xbf16>
    %cst_24 = arith.constant dense<0.000000e+00> : vector<16x64xf32>
    %24 = tpu.matmul %18, %23, %cst_24 {dimension_numbers = #tpu.dot_dimension_numbers<[1], [0], [0], [1], [0, 0, 1, 1], [], []>} : vector<16x32xbf16>, vector<32x64xbf16>, vector<16x64xf32> -> vector<16x64xf32>
    %25 = vector.extract_strided_slice %15 {offsets = [0, 0], sizes = [1, 32], strides = [1, 1]} : vector<22x64xf32> to vector<1x32xf32>
    %26 = vector.extract_strided_slice %15 {offsets = [1, 0], sizes = [1, 32], strides = [1, 1]} : vector<22x64xf32> to vector<1x32xf32>
    %27 = vector.extract_strided_slice %15 {offsets = [2, 0], sizes = [1, 32], strides = [1, 1]} : vector<22x64xf32> to vector<1x32xf32>
    %28 = vector.extract_strided_slice %15 {offsets = [3, 0], sizes = [1, 32], strides = [1, 1]} : vector<22x64xf32> to vector<1x32xf32>
    %29 = vector.extract_strided_slice %15 {offsets = [4, 0], sizes = [1, 64], strides = [1, 1]} : vector<22x64xf32> to vector<1x64xf32>
    %30 = vector.extract_strided_slice %15 {offsets = [5, 0], sizes = [1, 32], strides = [1, 1]} : vector<22x64xf32> to vector<1x32xf32>
    %31 = arith.addf %4, %14 : vector<16x32xf32>
    %32 = arith.truncf %31 : vector<16x32xf32> to vector<16x32xbf16>
    %c0_25 = arith.constant 0 : index
    %c0_26 = arith.constant 0 : index
    %c0_27 = arith.constant 0 : index
    %33 = vector.load %arg3[%c0_25, %c0_26, %c0_27] : memref<2x32x32xbf16, #tpu.memory_space<vmem>>, vector<1x32x32xbf16>
    %34 = vector.shape_cast %33 : vector<1x32x32xbf16> to vector<32x32xbf16>
    %cst_28 = arith.constant dense<0.000000e+00> : vector<16x32xf32>
    %35 = tpu.matmul %32, %34, %cst_28 {dimension_numbers = #tpu.dot_dimension_numbers<[1], [0], [0], [1], [0, 0, 1, 1], [], []>} : vector<16x32xbf16>, vector<32x32xbf16>, vector<16x32xf32> -> vector<16x32xf32>
    %36 = vector.broadcast %25 : vector<1x32xf32> to vector<16x32xf32>
    %37 = arith.addf %35, %36 : vector<16x32xf32>
    %38 = vector.extract_strided_slice %21 {offsets = [0, 0], sizes = [16, 32], strides = [1, 1]} : vector<16x64xf32> to vector<16x32xf32>
    %39 = vector.broadcast %26 : vector<1x32xf32> to vector<16x32xf32>
    %40 = arith.addf %38, %39 : vector<16x32xf32>
    %41 = vector.extract_strided_slice %24 {offsets = [0, 0], sizes = [16, 32], strides = [1, 1]} : vector<16x64xf32> to vector<16x32xf32>
    %42 = vector.broadcast %27 : vector<1x32xf32> to vector<16x32xf32>
    %43 = arith.addf %41, %42 : vector<16x32xf32>
    %44 = vector.extract_strided_slice %37 {offsets = [0, 0], sizes = [8, 8], strides = [1, 1]} : vector<16x32xf32> to vector<8x8xf32>
    %45 = arith.truncf %44 : vector<8x8xf32> to vector<8x8xbf16>
    %46 = vector.extract_strided_slice %40 {offsets = [0, 0], sizes = [8, 8], strides = [1, 1]} : vector<16x32xf32> to vector<8x8xf32>
    %47 = arith.truncf %46 : vector<8x8xf32> to vector<8x8xbf16>
    %48 = vector.extract_strided_slice %43 {offsets = [0, 0], sizes = [8, 8], strides = [1, 1]} : vector<16x32xf32> to vector<8x8xf32>
    %49 = arith.truncf %48 : vector<8x8xf32> to vector<8x8xbf16>
    %cst_29 = arith.constant dense<0.000000e+00> : vector<8x8xf32>
    %50 = tpu.matmul %45, %47, %cst_29 {dimension_numbers = #tpu.dot_dimension_numbers<[1], [1], [0], [0], [0, 0, 1, 0], [], []>} : vector<8x8xbf16>, vector<8x8xbf16>, vector<8x8xf32> -> vector<8x8xf32>
    %cst_30 = arith.constant dense<0xFF800000> : vector<8xf32>
    %51 = vector.multi_reduction <maximumf>, %50, %cst_30 [1] : vector<8x8xf32> to vector<8xf32>
    %52 = vector.shape_cast %51 : vector<8xf32> to vector<8x1xf32>
    %53 = vector.broadcast %52 : vector<8x1xf32> to vector<8x8xf32>
    %54 = arith.subf %50, %53 : vector<8x8xf32>
    %55 = math.exp %54 : vector<8x8xf32>
    %cst_31 = arith.constant dense<0.000000e+00> : vector<8xf32>
    %56 = vector.multi_reduction <add>, %55, %cst_31 [1] : vector<8x8xf32> to vector<8xf32>
    %57 = vector.shape_cast %56 : vector<8xf32> to vector<8x1xf32>
    %58 = tpu.reciprocal %57 {approx = true} : vector<8x1xf32> -> vector<8x1xf32>
    %59 = vector.broadcast %58 : vector<8x1xf32> to vector<8x8xf32>
    %60 = arith.mulf %55, %59 : vector<8x8xf32>
    %61 = arith.truncf %60 : vector<8x8xf32> to vector<8x8xbf16>
    %cst_32 = arith.constant dense<0.000000e+00> : vector<8x8xf32>
    %62 = tpu.matmul %61, %49, %cst_32 {dimension_numbers = #tpu.dot_dimension_numbers<[1], [0], [0], [1], [0, 0, 1, 1], [], []>} : vector<8x8xbf16>, vector<8x8xbf16>, vector<8x8xf32> -> vector<8x8xf32>
    %63 = vector.extract_strided_slice %37 {offsets = [0, 8], sizes = [8, 8], strides = [1, 1]} : vector<16x32xf32> to vector<8x8xf32>
    %64 = arith.truncf %63 : vector<8x8xf32> to vector<8x8xbf16>
    %65 = vector.extract_strided_slice %40 {offsets = [0, 8], sizes = [8, 8], strides = [1, 1]} : vector<16x32xf32> to vector<8x8xf32>
    %66 = arith.truncf %65 : vector<8x8xf32> to vector<8x8xbf16>
    %67 = vector.extract_strided_slice %43 {offsets = [0, 8], sizes = [8, 8], strides = [1, 1]} : vector<16x32xf32> to vector<8x8xf32>
    %68 = arith.truncf %67 : vector<8x8xf32> to vector<8x8xbf16>
    %cst_33 = arith.constant dense<0.000000e+00> : vector<8x8xf32>
    %69 = tpu.matmul %64, %66, %cst_33 {dimension_numbers = #tpu.dot_dimension_numbers<[1], [1], [0], [0], [0, 0, 1, 0], [], []>} : vector<8x8xbf16>, vector<8x8xbf16>, vector<8x8xf32> -> vector<8x8xf32>
    %cst_34 = arith.constant dense<0xFF800000> : vector<8xf32>
    %70 = vector.multi_reduction <maximumf>, %69, %cst_34 [1] : vector<8x8xf32> to vector<8xf32>
    %71 = vector.shape_cast %70 : vector<8xf32> to vector<8x1xf32>
    %72 = vector.broadcast %71 : vector<8x1xf32> to vector<8x8xf32>
    %73 = arith.subf %69, %72 : vector<8x8xf32>
    %74 = math.exp %73 : vector<8x8xf32>
    %cst_35 = arith.constant dense<0.000000e+00> : vector<8xf32>
    %75 = vector.multi_reduction <add>, %74, %cst_35 [1] : vector<8x8xf32> to vector<8xf32>
    %76 = vector.shape_cast %75 : vector<8xf32> to vector<8x1xf32>
    %77 = tpu.reciprocal %76 {approx = true} : vector<8x1xf32> -> vector<8x1xf32>
    %78 = vector.broadcast %77 : vector<8x1xf32> to vector<8x8xf32>
    %79 = arith.mulf %74, %78 : vector<8x8xf32>
    %80 = arith.truncf %79 : vector<8x8xf32> to vector<8x8xbf16>
    %cst_36 = arith.constant dense<0.000000e+00> : vector<8x8xf32>
    %81 = tpu.matmul %80, %68, %cst_36 {dimension_numbers = #tpu.dot_dimension_numbers<[1], [0], [0], [1], [0, 0, 1, 1], [], []>} : vector<8x8xbf16>, vector<8x8xbf16>, vector<8x8xf32> -> vector<8x8xf32>
    %82 = vector.extract_strided_slice %37 {offsets = [0, 16], sizes = [8, 8], strides = [1, 1]} : vector<16x32xf32> to vector<8x8xf32>
    %83 = arith.truncf %82 : vector<8x8xf32> to vector<8x8xbf16>
    %84 = vector.extract_strided_slice %40 {offsets = [0, 16], sizes = [8, 8], strides = [1, 1]} : vector<16x32xf32> to vector<8x8xf32>
    %85 = arith.truncf %84 : vector<8x8xf32> to vector<8x8xbf16>
    %86 = vector.extract_strided_slice %43 {offsets = [0, 16], sizes = [8, 8], strides = [1, 1]} : vector<16x32xf32> to vector<8x8xf32>
    %87 = arith.truncf %86 : vector<8x8xf32> to vector<8x8xbf16>
    %cst_37 = arith.constant dense<0.000000e+00> : vector<8x8xf32>
    %88 = tpu.matmul %83, %85, %cst_37 {dimension_numbers = #tpu.dot_dimension_numbers<[1], [1], [0], [0], [0, 0, 1, 0], [], []>} : vector<8x8xbf16>, vector<8x8xbf16>, vector<8x8xf32> -> vector<8x8xf32>
    %cst_38 = arith.constant dense<0xFF800000> : vector<8xf32>
    %89 = vector.multi_reduction <maximumf>, %88, %cst_38 [1] : vector<8x8xf32> to vector<8xf32>
    %90 = vector.shape_cast %89 : vector<8xf32> to vector<8x1xf32>
    %91 = vector.broadcast %90 : vector<8x1xf32> to vector<8x8xf32>
    %92 = arith.subf %88, %91 : vector<8x8xf32>
    %93 = math.exp %92 : vector<8x8xf32>
    %cst_39 = arith.constant dense<0.000000e+00> : vector<8xf32>
    %94 = vector.multi_reduction <add>, %93, %cst_39 [1] : vector<8x8xf32> to vector<8xf32>
    %95 = vector.shape_cast %94 : vector<8xf32> to vector<8x1xf32>
    %96 = tpu.reciprocal %95 {approx = true} : vector<8x1xf32> -> vector<8x1xf32>
    %97 = vector.broadcast %96 : vector<8x1xf32> to vector<8x8xf32>
    %98 = arith.mulf %93, %97 : vector<8x8xf32>
    %99 = arith.truncf %98 : vector<8x8xf32> to vector<8x8xbf16>
    %cst_40 = arith.constant dense<0.000000e+00> : vector<8x8xf32>
    %100 = tpu.matmul %99, %87, %cst_40 {dimension_numbers = #tpu.dot_dimension_numbers<[1], [0], [0], [1], [0, 0, 1, 1], [], []>} : vector<8x8xbf16>, vector<8x8xbf16>, vector<8x8xf32> -> vector<8x8xf32>
    %101 = vector.extract_strided_slice %37 {offsets = [0, 24], sizes = [8, 8], strides = [1, 1]} : vector<16x32xf32> to vector<8x8xf32>
    %102 = arith.truncf %101 : vector<8x8xf32> to vector<8x8xbf16>
    %103 = vector.extract_strided_slice %40 {offsets = [0, 24], sizes = [8, 8], strides = [1, 1]} : vector<16x32xf32> to vector<8x8xf32>
    %104 = arith.truncf %103 : vector<8x8xf32> to vector<8x8xbf16>
    %105 = vector.extract_strided_slice %43 {offsets = [0, 24], sizes = [8, 8], strides = [1, 1]} : vector<16x32xf32> to vector<8x8xf32>
    %106 = arith.truncf %105 : vector<8x8xf32> to vector<8x8xbf16>
    %cst_41 = arith.constant dense<0.000000e+00> : vector<8x8xf32>
    %107 = tpu.matmul %102, %104, %cst_41 {dimension_numbers = #tpu.dot_dimension_numbers<[1], [1], [0], [0], [0, 0, 1, 0], [], []>} : vector<8x8xbf16>, vector<8x8xbf16>, vector<8x8xf32> -> vector<8x8xf32>
    %cst_42 = arith.constant dense<0xFF800000> : vector<8xf32>
    %108 = vector.multi_reduction <maximumf>, %107, %cst_42 [1] : vector<8x8xf32> to vector<8xf32>
    %109 = vector.shape_cast %108 : vector<8xf32> to vector<8x1xf32>
    %110 = vector.broadcast %109 : vector<8x1xf32> to vector<8x8xf32>
    %111 = arith.subf %107, %110 : vector<8x8xf32>
    %112 = math.exp %111 : vector<8x8xf32>
    %cst_43 = arith.constant dense<0.000000e+00> : vector<8xf32>
    %113 = vector.multi_reduction <add>, %112, %cst_43 [1] : vector<8x8xf32> to vector<8xf32>
    %114 = vector.shape_cast %113 : vector<8xf32> to vector<8x1xf32>
    %115 = tpu.reciprocal %114 {approx = true} : vector<8x1xf32> -> vector<8x1xf32>
    %116 = vector.broadcast %115 : vector<8x1xf32> to vector<8x8xf32>
    %117 = arith.mulf %112, %116 : vector<8x8xf32>
    %118 = arith.truncf %117 : vector<8x8xf32> to vector<8x8xbf16>
    %cst_44 = arith.constant dense<0.000000e+00> : vector<8x8xf32>
    %119 = tpu.matmul %118, %106, %cst_44 {dimension_numbers = #tpu.dot_dimension_numbers<[1], [0], [0], [1], [0, 0, 1, 1], [], []>} : vector<8x8xbf16>, vector<8x8xbf16>, vector<8x8xf32> -> vector<8x8xf32>
    %120 = tpu.concatenate %62, %81, %100, %119 in 1 : vector<8x8xf32>, vector<8x8xf32>, vector<8x8xf32>, vector<8x8xf32> -> vector<8x32xf32>
    %121 = vector.extract_strided_slice %37 {offsets = [8, 0], sizes = [8, 8], strides = [1, 1]} : vector<16x32xf32> to vector<8x8xf32>
    %122 = arith.truncf %121 : vector<8x8xf32> to vector<8x8xbf16>
    %123 = vector.extract_strided_slice %40 {offsets = [8, 0], sizes = [8, 8], strides = [1, 1]} : vector<16x32xf32> to vector<8x8xf32>
    %124 = arith.truncf %123 : vector<8x8xf32> to vector<8x8xbf16>
    %125 = vector.extract_strided_slice %43 {offsets = [8, 0], sizes = [8, 8], strides = [1, 1]} : vector<16x32xf32> to vector<8x8xf32>
    %126 = arith.truncf %125 : vector<8x8xf32> to vector<8x8xbf16>
    %cst_45 = arith.constant dense<0.000000e+00> : vector<8x8xf32>
    %127 = tpu.matmul %122, %124, %cst_45 {dimension_numbers = #tpu.dot_dimension_numbers<[1], [1], [0], [0], [0, 0, 1, 0], [], []>} : vector<8x8xbf16>, vector<8x8xbf16>, vector<8x8xf32> -> vector<8x8xf32>
    %cst_46 = arith.constant dense<0xFF800000> : vector<8xf32>
    %128 = vector.multi_reduction <maximumf>, %127, %cst_46 [1] : vector<8x8xf32> to vector<8xf32>
    %129 = vector.shape_cast %128 : vector<8xf32> to vector<8x1xf32>
    %130 = vector.broadcast %129 : vector<8x1xf32> to vector<8x8xf32>
    %131 = arith.subf %127, %130 : vector<8x8xf32>
    %132 = math.exp %131 : vector<8x8xf32>
    %cst_47 = arith.constant dense<0.000000e+00> : vector<8xf32>
    %133 = vector.multi_reduction <add>, %132, %cst_47 [1] : vector<8x8xf32> to vector<8xf32>
    %134 = vector.shape_cast %133 : vector<8xf32> to vector<8x1xf32>
    %135 = tpu.reciprocal %134 {approx = true} : vector<8x1xf32> -> vector<8x1xf32>
    %136 = vector.broadcast %135 : vector<8x1xf32> to vector<8x8xf32>
    %137 = arith.mulf %132, %136 : vector<8x8xf32>
    %138 = arith.truncf %137 : vector<8x8xf32> to vector<8x8xbf16>
    %cst_48 = arith.constant dense<0.000000e+00> : vector<8x8xf32>
    %139 = tpu.matmul %138, %126, %cst_48 {dimension_numbers = #tpu.dot_dimension_numbers<[1], [0], [0], [1], [0, 0, 1, 1], [], []>} : vector<8x8xbf16>, vector<8x8xbf16>, vector<8x8xf32> -> vector<8x8xf32>
    %140 = vector.extract_strided_slice %37 {offsets = [8, 8], sizes = [8, 8], strides = [1, 1]} : vector<16x32xf32> to vector<8x8xf32>
    %141 = arith.truncf %140 : vector<8x8xf32> to vector<8x8xbf16>
    %142 = vector.extract_strided_slice %40 {offsets = [8, 8], sizes = [8, 8], strides = [1, 1]} : vector<16x32xf32> to vector<8x8xf32>
    %143 = arith.truncf %142 : vector<8x8xf32> to vector<8x8xbf16>
    %144 = vector.extract_strided_slice %43 {offsets = [8, 8], sizes = [8, 8], strides = [1, 1]} : vector<16x32xf32> to vector<8x8xf32>
    %145 = arith.truncf %144 : vector<8x8xf32> to vector<8x8xbf16>
    %cst_49 = arith.constant dense<0.000000e+00> : vector<8x8xf32>
    %146 = tpu.matmul %141, %143, %cst_49 {dimension_numbers = #tpu.dot_dimension_numbers<[1], [1], [0], [0], [0, 0, 1, 0], [], []>} : vector<8x8xbf16>, vector<8x8xbf16>, vector<8x8xf32> -> vector<8x8xf32>
    %cst_50 = arith.constant dense<0xFF800000> : vector<8xf32>
    %147 = vector.multi_reduction <maximumf>, %146, %cst_50 [1] : vector<8x8xf32> to vector<8xf32>
    %148 = vector.shape_cast %147 : vector<8xf32> to vector<8x1xf32>
    %149 = vector.broadcast %148 : vector<8x1xf32> to vector<8x8xf32>
    %150 = arith.subf %146, %149 : vector<8x8xf32>
    %151 = math.exp %150 : vector<8x8xf32>
    %cst_51 = arith.constant dense<0.000000e+00> : vector<8xf32>
    %152 = vector.multi_reduction <add>, %151, %cst_51 [1] : vector<8x8xf32> to vector<8xf32>
    %153 = vector.shape_cast %152 : vector<8xf32> to vector<8x1xf32>
    %154 = tpu.reciprocal %153 {approx = true} : vector<8x1xf32> -> vector<8x1xf32>
    %155 = vector.broadcast %154 : vector<8x1xf32> to vector<8x8xf32>
    %156 = arith.mulf %151, %155 : vector<8x8xf32>
    %157 = arith.truncf %156 : vector<8x8xf32> to vector<8x8xbf16>
    %cst_52 = arith.constant dense<0.000000e+00> : vector<8x8xf32>
    %158 = tpu.matmul %157, %145, %cst_52 {dimension_numbers = #tpu.dot_dimension_numbers<[1], [0], [0], [1], [0, 0, 1, 1], [], []>} : vector<8x8xbf16>, vector<8x8xbf16>, vector<8x8xf32> -> vector<8x8xf32>
    %159 = vector.extract_strided_slice %37 {offsets = [8, 16], sizes = [8, 8], strides = [1, 1]} : vector<16x32xf32> to vector<8x8xf32>
    %160 = arith.truncf %159 : vector<8x8xf32> to vector<8x8xbf16>
    %161 = vector.extract_strided_slice %40 {offsets = [8, 16], sizes = [8, 8], strides = [1, 1]} : vector<16x32xf32> to vector<8x8xf32>
    %162 = arith.truncf %161 : vector<8x8xf32> to vector<8x8xbf16>
    %163 = vector.extract_strided_slice %43 {offsets = [8, 16], sizes = [8, 8], strides = [1, 1]} : vector<16x32xf32> to vector<8x8xf32>
    %164 = arith.truncf %163 : vector<8x8xf32> to vector<8x8xbf16>
    %cst_53 = arith.constant dense<0.000000e+00> : vector<8x8xf32>
    %165 = tpu.matmul %160, %162, %cst_53 {dimension_numbers = #tpu.dot_dimension_numbers<[1], [1], [0], [0], [0, 0, 1, 0], [], []>} : vector<8x8xbf16>, vector<8x8xbf16>, vector<8x8xf32> -> vector<8x8xf32>
    %cst_54 = arith.constant dense<0xFF800000> : vector<8xf32>
    %166 = vector.multi_reduction <maximumf>, %165, %cst_54 [1] : vector<8x8xf32> to vector<8xf32>
    %167 = vector.shape_cast %166 : vector<8xf32> to vector<8x1xf32>
    %168 = vector.broadcast %167 : vector<8x1xf32> to vector<8x8xf32>
    %169 = arith.subf %165, %168 : vector<8x8xf32>
    %170 = math.exp %169 : vector<8x8xf32>
    %cst_55 = arith.constant dense<0.000000e+00> : vector<8xf32>
    %171 = vector.multi_reduction <add>, %170, %cst_55 [1] : vector<8x8xf32> to vector<8xf32>
    %172 = vector.shape_cast %171 : vector<8xf32> to vector<8x1xf32>
    %173 = tpu.reciprocal %172 {approx = true} : vector<8x1xf32> -> vector<8x1xf32>
    %174 = vector.broadcast %173 : vector<8x1xf32> to vector<8x8xf32>
    %175 = arith.mulf %170, %174 : vector<8x8xf32>
    %176 = arith.truncf %175 : vector<8x8xf32> to vector<8x8xbf16>
    %cst_56 = arith.constant dense<0.000000e+00> : vector<8x8xf32>
    %177 = tpu.matmul %176, %164, %cst_56 {dimension_numbers = #tpu.dot_dimension_numbers<[1], [0], [0], [1], [0, 0, 1, 1], [], []>} : vector<8x8xbf16>, vector<8x8xbf16>, vector<8x8xf32> -> vector<8x8xf32>
    %178 = vector.extract_strided_slice %37 {offsets = [8, 24], sizes = [8, 8], strides = [1, 1]} : vector<16x32xf32> to vector<8x8xf32>
    %179 = arith.truncf %178 : vector<8x8xf32> to vector<8x8xbf16>
    %180 = vector.extract_strided_slice %40 {offsets = [8, 24], sizes = [8, 8], strides = [1, 1]} : vector<16x32xf32> to vector<8x8xf32>
    %181 = arith.truncf %180 : vector<8x8xf32> to vector<8x8xbf16>
    %182 = vector.extract_strided_slice %43 {offsets = [8, 24], sizes = [8, 8], strides = [1, 1]} : vector<16x32xf32> to vector<8x8xf32>
    %183 = arith.truncf %182 : vector<8x8xf32> to vector<8x8xbf16>
    %cst_57 = arith.constant dense<0.000000e+00> : vector<8x8xf32>
    %184 = tpu.matmul %179, %181, %cst_57 {dimension_numbers = #tpu.dot_dimension_numbers<[1], [1], [0], [0], [0, 0, 1, 0], [], []>} : vector<8x8xbf16>, vector<8x8xbf16>, vector<8x8xf32> -> vector<8x8xf32>
    %cst_58 = arith.constant dense<0xFF800000> : vector<8xf32>
    %185 = vector.multi_reduction <maximumf>, %184, %cst_58 [1] : vector<8x8xf32> to vector<8xf32>
    %186 = vector.shape_cast %185 : vector<8xf32> to vector<8x1xf32>
    %187 = vector.broadcast %186 : vector<8x1xf32> to vector<8x8xf32>
    %188 = arith.subf %184, %187 : vector<8x8xf32>
    %189 = math.exp %188 : vector<8x8xf32>
    %cst_59 = arith.constant dense<0.000000e+00> : vector<8xf32>
    %190 = vector.multi_reduction <add>, %189, %cst_59 [1] : vector<8x8xf32> to vector<8xf32>
    %191 = vector.shape_cast %190 : vector<8xf32> to vector<8x1xf32>
    %192 = tpu.reciprocal %191 {approx = true} : vector<8x1xf32> -> vector<8x1xf32>
    %193 = vector.broadcast %192 : vector<8x1xf32> to vector<8x8xf32>
    %194 = arith.mulf %189, %193 : vector<8x8xf32>
    %195 = arith.truncf %194 : vector<8x8xf32> to vector<8x8xbf16>
    %cst_60 = arith.constant dense<0.000000e+00> : vector<8x8xf32>
    %196 = tpu.matmul %195, %183, %cst_60 {dimension_numbers = #tpu.dot_dimension_numbers<[1], [0], [0], [1], [0, 0, 1, 1], [], []>} : vector<8x8xbf16>, vector<8x8xbf16>, vector<8x8xf32> -> vector<8x8xf32>
    %197 = tpu.concatenate %139, %158, %177, %196 in 1 : vector<8x8xf32>, vector<8x8xf32>, vector<8x8xf32>, vector<8x8xf32> -> vector<8x32xf32>
    %198 = tpu.concatenate %120, %197 in 0 : vector<8x32xf32>, vector<8x32xf32> -> vector<16x32xf32>
    %199 = arith.truncf %198 : vector<16x32xf32> to vector<16x32xbf16>
    %c0_61 = arith.constant 0 : index
    %c0_62 = arith.constant 0 : index
    %c0_63 = arith.constant 0 : index
    %200 = vector.load %arg4[%c0_61, %c0_62, %c0_63] : memref<2x32x32xbf16, #tpu.memory_space<vmem>>, vector<1x32x32xbf16>
    %201 = vector.shape_cast %200 : vector<1x32x32xbf16> to vector<32x32xbf16>
    %cst_64 = arith.constant dense<0.000000e+00> : vector<16x32xf32>
    %202 = tpu.matmul %199, %201, %cst_64 {dimension_numbers = #tpu.dot_dimension_numbers<[1], [0], [0], [1], [0, 0, 1, 1], [], []>} : vector<16x32xbf16>, vector<32x32xbf16>, vector<16x32xf32> -> vector<16x32xf32>
    %203 = vector.broadcast %28 : vector<1x32xf32> to vector<16x32xf32>
    %204 = arith.addf %202, %203 : vector<16x32xf32>
    %205 = arith.addf %4, %204 : vector<16x32xf32>
    %206 = vector.extract_strided_slice %15 {offsets = [6, 0], sizes = [1, 32], strides = [1, 1]} : vector<22x64xf32> to vector<1x32xf32>
    %207 = vector.extract_strided_slice %15 {offsets = [7, 0], sizes = [1, 32], strides = [1, 1]} : vector<22x64xf32> to vector<1x32xf32>
    %cst_65 = arith.constant dense<0.000000e+00> : vector<16xf32>
    %208 = vector.multi_reduction <add>, %205, %cst_65 [1] : vector<16x32xf32> to vector<16xf32>
    %209 = vector.shape_cast %208 : vector<16xf32> to vector<16x1xf32>
    %cst_66 = arith.constant 3.200000e+01 : f32
    %210 = vector.broadcast %cst_66 : f32 to vector<16x1xf32>
    %211 = arith.divf %209, %210 : vector<16x1xf32>
    %212 = vector.broadcast %211 : vector<16x1xf32> to vector<16x32xf32>
    %213 = arith.subf %205, %212 : vector<16x32xf32>
    %214 = arith.mulf %213, %213 : vector<16x32xf32>
    %cst_67 = arith.constant dense<0.000000e+00> : vector<16xf32>
    %215 = vector.multi_reduction <add>, %214, %cst_67 [1] : vector<16x32xf32> to vector<16xf32>
    %216 = vector.shape_cast %215 : vector<16xf32> to vector<16x1xf32>
    %cst_68 = arith.constant 3.200000e+01 : f32
    %217 = vector.broadcast %cst_68 : f32 to vector<16x1xf32>
    %218 = arith.divf %216, %217 : vector<16x1xf32>
    %219 = vector.broadcast %211 : vector<16x1xf32> to vector<16x32xf32>
    %220 = arith.subf %205, %219 : vector<16x32xf32>
    %cst_69 = arith.constant 9.99999974E-6 : f32
    %221 = vector.broadcast %cst_69 : f32 to vector<16x1xf32>
    %222 = arith.addf %218, %221 : vector<16x1xf32>
    %223 = math.rsqrt %222 : vector<16x1xf32>
    %224 = vector.broadcast %223 : vector<16x1xf32> to vector<16x32xf32>
    %225 = arith.mulf %220, %224 : vector<16x32xf32>
    %226 = vector.broadcast %206 : vector<1x32xf32> to vector<16x32xf32>
    %227 = arith.mulf %225, %226 : vector<16x32xf32>
    %228 = vector.broadcast %207 : vector<1x32xf32> to vector<16x32xf32>
    %229 = arith.addf %227, %228 : vector<16x32xf32>
    %230 = arith.truncf %229 : vector<16x32xf32> to vector<16x32xbf16>
    %c0_70 = arith.constant 0 : index
    %c0_71 = arith.constant 0 : index
    %c0_72 = arith.constant 0 : index
    %231 = vector.load %arg6[%c0_70, %c0_71, %c0_72] : memref<2x32x64xbf16, #tpu.memory_space<vmem>>, vector<1x32x64xbf16>
    %232 = vector.shape_cast %231 : vector<1x32x64xbf16> to vector<32x64xbf16>
    %cst_73 = arith.constant dense<0.000000e+00> : vector<16x64xf32>
    %233 = tpu.matmul %230, %232, %cst_73 {dimension_numbers = #tpu.dot_dimension_numbers<[1], [0], [0], [1], [0, 0, 1, 1], [], []>} : vector<16x32xbf16>, vector<32x64xbf16>, vector<16x64xf32> -> vector<16x64xf32>
    %234 = vector.broadcast %29 : vector<1x64xf32> to vector<16x64xf32>
    %235 = arith.addf %233, %234 : vector<16x64xf32>
    %cst_74 = arith.constant 0.000000e+00 : f32
    %236 = vector.broadcast %cst_74 : f32 to vector<16x64xf32>
    %237 = arith.maximumf %235, %236 : vector<16x64xf32>
    %238 = arith.truncf %237 : vector<16x64xf32> to vector<16x64xbf16>
    %c0_75 = arith.constant 0 : index
    %c0_76 = arith.constant 0 : index
    %c0_77 = arith.constant 0 : index
    %239 = vector.load %arg7[%c0_75, %c0_76, %c0_77] : memref<2x64x32xbf16, #tpu.memory_space<vmem>>, vector<1x64x32xbf16>
    %240 = vector.shape_cast %239 : vector<1x64x32xbf16> to vector<64x32xbf16>
    %cst_78 = arith.constant dense<0.000000e+00> : vector<16x32xf32>
    %241 = tpu.matmul %238, %240, %cst_78 {dimension_numbers = #tpu.dot_dimension_numbers<[1], [0], [0], [1], [0, 0, 1, 1], [], []>} : vector<16x64xbf16>, vector<64x32xbf16>, vector<16x32xf32> -> vector<16x32xf32>
    %242 = vector.broadcast %30 : vector<1x32xf32> to vector<16x32xf32>
    %243 = arith.addf %241, %242 : vector<16x32xf32>
    %244 = arith.addf %229, %243 : vector<16x32xf32>
    %245 = vector.extract_strided_slice %15 {offsets = [8, 0], sizes = [1, 32], strides = [1, 1]} : vector<22x64xf32> to vector<1x32xf32>
    %246 = vector.extract_strided_slice %15 {offsets = [9, 0], sizes = [1, 32], strides = [1, 1]} : vector<22x64xf32> to vector<1x32xf32>
    %cst_79 = arith.constant dense<0.000000e+00> : vector<16xf32>
    %247 = vector.multi_reduction <add>, %244, %cst_79 [1] : vector<16x32xf32> to vector<16xf32>
    %248 = vector.shape_cast %247 : vector<16xf32> to vector<16x1xf32>
    %cst_80 = arith.constant 3.200000e+01 : f32
    %249 = vector.broadcast %cst_80 : f32 to vector<16x1xf32>
    %250 = arith.divf %248, %249 : vector<16x1xf32>
    %251 = vector.broadcast %250 : vector<16x1xf32> to vector<16x32xf32>
    %252 = arith.subf %244, %251 : vector<16x32xf32>
    %253 = arith.mulf %252, %252 : vector<16x32xf32>
    %cst_81 = arith.constant dense<0.000000e+00> : vector<16xf32>
    %254 = vector.multi_reduction <add>, %253, %cst_81 [1] : vector<16x32xf32> to vector<16xf32>
    %255 = vector.shape_cast %254 : vector<16xf32> to vector<16x1xf32>
    %cst_82 = arith.constant 3.200000e+01 : f32
    %256 = vector.broadcast %cst_82 : f32 to vector<16x1xf32>
    %257 = arith.divf %255, %256 : vector<16x1xf32>
    %258 = vector.broadcast %250 : vector<16x1xf32> to vector<16x32xf32>
    %259 = arith.subf %244, %258 : vector<16x32xf32>
    %cst_83 = arith.constant 9.99999974E-6 : f32
    %260 = vector.broadcast %cst_83 : f32 to vector<16x1xf32>
    %261 = arith.addf %257, %260 : vector<16x1xf32>
    %262 = math.rsqrt %261 : vector<16x1xf32>
    %263 = vector.broadcast %262 : vector<16x1xf32> to vector<16x32xf32>
    %264 = arith.mulf %259, %263 : vector<16x32xf32>
    %265 = vector.broadcast %245 : vector<1x32xf32> to vector<16x32xf32>
    %266 = arith.mulf %264, %265 : vector<16x32xf32>
    %267 = vector.broadcast %246 : vector<1x32xf32> to vector<16x32xf32>
    %268 = arith.addf %266, %267 : vector<16x32xf32>
    %269 = vector.extract_strided_slice %15 {offsets = [10, 0], sizes = [1, 32], strides = [1, 1]} : vector<22x64xf32> to vector<1x32xf32>
    %270 = vector.extract_strided_slice %15 {offsets = [11, 0], sizes = [1, 32], strides = [1, 1]} : vector<22x64xf32> to vector<1x32xf32>
    %271 = vector.extract_strided_slice %15 {offsets = [12, 0], sizes = [1, 32], strides = [1, 1]} : vector<22x64xf32> to vector<1x32xf32>
    %272 = vector.extract_strided_slice %15 {offsets = [13, 0], sizes = [1, 32], strides = [1, 1]} : vector<22x64xf32> to vector<1x32xf32>
    %273 = vector.extract_strided_slice %15 {offsets = [14, 0], sizes = [1, 64], strides = [1, 1]} : vector<22x64xf32> to vector<1x64xf32>
    %274 = vector.extract_strided_slice %15 {offsets = [15, 0], sizes = [1, 32], strides = [1, 1]} : vector<22x64xf32> to vector<1x32xf32>
    %275 = arith.addf %268, %14 : vector<16x32xf32>
    %276 = arith.truncf %275 : vector<16x32xf32> to vector<16x32xbf16>
    %c1_84 = arith.constant 1 : index
    %c0_85 = arith.constant 0 : index
    %c0_86 = arith.constant 0 : index
    %277 = vector.load %arg3[%c1_84, %c0_85, %c0_86] : memref<2x32x32xbf16, #tpu.memory_space<vmem>>, vector<1x32x32xbf16>
    %278 = vector.shape_cast %277 : vector<1x32x32xbf16> to vector<32x32xbf16>
    %cst_87 = arith.constant dense<0.000000e+00> : vector<16x32xf32>
    %279 = tpu.matmul %276, %278, %cst_87 {dimension_numbers = #tpu.dot_dimension_numbers<[1], [0], [0], [1], [0, 0, 1, 1], [], []>} : vector<16x32xbf16>, vector<32x32xbf16>, vector<16x32xf32> -> vector<16x32xf32>
    %280 = vector.broadcast %269 : vector<1x32xf32> to vector<16x32xf32>
    %281 = arith.addf %279, %280 : vector<16x32xf32>
    %282 = vector.extract_strided_slice %21 {offsets = [0, 32], sizes = [16, 32], strides = [1, 1]} : vector<16x64xf32> to vector<16x32xf32>
    %283 = vector.broadcast %270 : vector<1x32xf32> to vector<16x32xf32>
    %284 = arith.addf %282, %283 : vector<16x32xf32>
    %285 = vector.extract_strided_slice %24 {offsets = [0, 32], sizes = [16, 32], strides = [1, 1]} : vector<16x64xf32> to vector<16x32xf32>
    %286 = vector.broadcast %271 : vector<1x32xf32> to vector<16x32xf32>
    %287 = arith.addf %285, %286 : vector<16x32xf32>
    %288 = vector.extract_strided_slice %281 {offsets = [0, 0], sizes = [8, 8], strides = [1, 1]} : vector<16x32xf32> to vector<8x8xf32>
    %289 = arith.truncf %288 : vector<8x8xf32> to vector<8x8xbf16>
    %290 = vector.extract_strided_slice %284 {offsets = [0, 0], sizes = [8, 8], strides = [1, 1]} : vector<16x32xf32> to vector<8x8xf32>
    %291 = arith.truncf %290 : vector<8x8xf32> to vector<8x8xbf16>
    %292 = vector.extract_strided_slice %287 {offsets = [0, 0], sizes = [8, 8], strides = [1, 1]} : vector<16x32xf32> to vector<8x8xf32>
    %293 = arith.truncf %292 : vector<8x8xf32> to vector<8x8xbf16>
    %cst_88 = arith.constant dense<0.000000e+00> : vector<8x8xf32>
    %294 = tpu.matmul %289, %291, %cst_88 {dimension_numbers = #tpu.dot_dimension_numbers<[1], [1], [0], [0], [0, 0, 1, 0], [], []>} : vector<8x8xbf16>, vector<8x8xbf16>, vector<8x8xf32> -> vector<8x8xf32>
    %cst_89 = arith.constant dense<0xFF800000> : vector<8xf32>
    %295 = vector.multi_reduction <maximumf>, %294, %cst_89 [1] : vector<8x8xf32> to vector<8xf32>
    %296 = vector.shape_cast %295 : vector<8xf32> to vector<8x1xf32>
    %297 = vector.broadcast %296 : vector<8x1xf32> to vector<8x8xf32>
    %298 = arith.subf %294, %297 : vector<8x8xf32>
    %299 = math.exp %298 : vector<8x8xf32>
    %cst_90 = arith.constant dense<0.000000e+00> : vector<8xf32>
    %300 = vector.multi_reduction <add>, %299, %cst_90 [1] : vector<8x8xf32> to vector<8xf32>
    %301 = vector.shape_cast %300 : vector<8xf32> to vector<8x1xf32>
    %302 = tpu.reciprocal %301 {approx = true} : vector<8x1xf32> -> vector<8x1xf32>
    %303 = vector.broadcast %302 : vector<8x1xf32> to vector<8x8xf32>
    %304 = arith.mulf %299, %303 : vector<8x8xf32>
    %305 = arith.truncf %304 : vector<8x8xf32> to vector<8x8xbf16>
    %cst_91 = arith.constant dense<0.000000e+00> : vector<8x8xf32>
    %306 = tpu.matmul %305, %293, %cst_91 {dimension_numbers = #tpu.dot_dimension_numbers<[1], [0], [0], [1], [0, 0, 1, 1], [], []>} : vector<8x8xbf16>, vector<8x8xbf16>, vector<8x8xf32> -> vector<8x8xf32>
    %307 = vector.extract_strided_slice %281 {offsets = [0, 8], sizes = [8, 8], strides = [1, 1]} : vector<16x32xf32> to vector<8x8xf32>
    %308 = arith.truncf %307 : vector<8x8xf32> to vector<8x8xbf16>
    %309 = vector.extract_strided_slice %284 {offsets = [0, 8], sizes = [8, 8], strides = [1, 1]} : vector<16x32xf32> to vector<8x8xf32>
    %310 = arith.truncf %309 : vector<8x8xf32> to vector<8x8xbf16>
    %311 = vector.extract_strided_slice %287 {offsets = [0, 8], sizes = [8, 8], strides = [1, 1]} : vector<16x32xf32> to vector<8x8xf32>
    %312 = arith.truncf %311 : vector<8x8xf32> to vector<8x8xbf16>
    %cst_92 = arith.constant dense<0.000000e+00> : vector<8x8xf32>
    %313 = tpu.matmul %308, %310, %cst_92 {dimension_numbers = #tpu.dot_dimension_numbers<[1], [1], [0], [0], [0, 0, 1, 0], [], []>} : vector<8x8xbf16>, vector<8x8xbf16>, vector<8x8xf32> -> vector<8x8xf32>
    %cst_93 = arith.constant dense<0xFF800000> : vector<8xf32>
    %314 = vector.multi_reduction <maximumf>, %313, %cst_93 [1] : vector<8x8xf32> to vector<8xf32>
    %315 = vector.shape_cast %314 : vector<8xf32> to vector<8x1xf32>
    %316 = vector.broadcast %315 : vector<8x1xf32> to vector<8x8xf32>
    %317 = arith.subf %313, %316 : vector<8x8xf32>
    %318 = math.exp %317 : vector<8x8xf32>
    %cst_94 = arith.constant dense<0.000000e+00> : vector<8xf32>
    %319 = vector.multi_reduction <add>, %318, %cst_94 [1] : vector<8x8xf32> to vector<8xf32>
    %320 = vector.shape_cast %319 : vector<8xf32> to vector<8x1xf32>
    %321 = tpu.reciprocal %320 {approx = true} : vector<8x1xf32> -> vector<8x1xf32>
    %322 = vector.broadcast %321 : vector<8x1xf32> to vector<8x8xf32>
    %323 = arith.mulf %318, %322 : vector<8x8xf32>
    %324 = arith.truncf %323 : vector<8x8xf32> to vector<8x8xbf16>
    %cst_95 = arith.constant dense<0.000000e+00> : vector<8x8xf32>
    %325 = tpu.matmul %324, %312, %cst_95 {dimension_numbers = #tpu.dot_dimension_numbers<[1], [0], [0], [1], [0, 0, 1, 1], [], []>} : vector<8x8xbf16>, vector<8x8xbf16>, vector<8x8xf32> -> vector<8x8xf32>
    %326 = vector.extract_strided_slice %281 {offsets = [0, 16], sizes = [8, 8], strides = [1, 1]} : vector<16x32xf32> to vector<8x8xf32>
    %327 = arith.truncf %326 : vector<8x8xf32> to vector<8x8xbf16>
    %328 = vector.extract_strided_slice %284 {offsets = [0, 16], sizes = [8, 8], strides = [1, 1]} : vector<16x32xf32> to vector<8x8xf32>
    %329 = arith.truncf %328 : vector<8x8xf32> to vector<8x8xbf16>
    %330 = vector.extract_strided_slice %287 {offsets = [0, 16], sizes = [8, 8], strides = [1, 1]} : vector<16x32xf32> to vector<8x8xf32>
    %331 = arith.truncf %330 : vector<8x8xf32> to vector<8x8xbf16>
    %cst_96 = arith.constant dense<0.000000e+00> : vector<8x8xf32>
    %332 = tpu.matmul %327, %329, %cst_96 {dimension_numbers = #tpu.dot_dimension_numbers<[1], [1], [0], [0], [0, 0, 1, 0], [], []>} : vector<8x8xbf16>, vector<8x8xbf16>, vector<8x8xf32> -> vector<8x8xf32>
    %cst_97 = arith.constant dense<0xFF800000> : vector<8xf32>
    %333 = vector.multi_reduction <maximumf>, %332, %cst_97 [1] : vector<8x8xf32> to vector<8xf32>
    %334 = vector.shape_cast %333 : vector<8xf32> to vector<8x1xf32>
    %335 = vector.broadcast %334 : vector<8x1xf32> to vector<8x8xf32>
    %336 = arith.subf %332, %335 : vector<8x8xf32>
    %337 = math.exp %336 : vector<8x8xf32>
    %cst_98 = arith.constant dense<0.000000e+00> : vector<8xf32>
    %338 = vector.multi_reduction <add>, %337, %cst_98 [1] : vector<8x8xf32> to vector<8xf32>
    %339 = vector.shape_cast %338 : vector<8xf32> to vector<8x1xf32>
    %340 = tpu.reciprocal %339 {approx = true} : vector<8x1xf32> -> vector<8x1xf32>
    %341 = vector.broadcast %340 : vector<8x1xf32> to vector<8x8xf32>
    %342 = arith.mulf %337, %341 : vector<8x8xf32>
    %343 = arith.truncf %342 : vector<8x8xf32> to vector<8x8xbf16>
    %cst_99 = arith.constant dense<0.000000e+00> : vector<8x8xf32>
    %344 = tpu.matmul %343, %331, %cst_99 {dimension_numbers = #tpu.dot_dimension_numbers<[1], [0], [0], [1], [0, 0, 1, 1], [], []>} : vector<8x8xbf16>, vector<8x8xbf16>, vector<8x8xf32> -> vector<8x8xf32>
    %345 = vector.extract_strided_slice %281 {offsets = [0, 24], sizes = [8, 8], strides = [1, 1]} : vector<16x32xf32> to vector<8x8xf32>
    %346 = arith.truncf %345 : vector<8x8xf32> to vector<8x8xbf16>
    %347 = vector.extract_strided_slice %284 {offsets = [0, 24], sizes = [8, 8], strides = [1, 1]} : vector<16x32xf32> to vector<8x8xf32>
    %348 = arith.truncf %347 : vector<8x8xf32> to vector<8x8xbf16>
    %349 = vector.extract_strided_slice %287 {offsets = [0, 24], sizes = [8, 8], strides = [1, 1]} : vector<16x32xf32> to vector<8x8xf32>
    %350 = arith.truncf %349 : vector<8x8xf32> to vector<8x8xbf16>
    %cst_100 = arith.constant dense<0.000000e+00> : vector<8x8xf32>
    %351 = tpu.matmul %346, %348, %cst_100 {dimension_numbers = #tpu.dot_dimension_numbers<[1], [1], [0], [0], [0, 0, 1, 0], [], []>} : vector<8x8xbf16>, vector<8x8xbf16>, vector<8x8xf32> -> vector<8x8xf32>
    %cst_101 = arith.constant dense<0xFF800000> : vector<8xf32>
    %352 = vector.multi_reduction <maximumf>, %351, %cst_101 [1] : vector<8x8xf32> to vector<8xf32>
    %353 = vector.shape_cast %352 : vector<8xf32> to vector<8x1xf32>
    %354 = vector.broadcast %353 : vector<8x1xf32> to vector<8x8xf32>
    %355 = arith.subf %351, %354 : vector<8x8xf32>
    %356 = math.exp %355 : vector<8x8xf32>
    %cst_102 = arith.constant dense<0.000000e+00> : vector<8xf32>
    %357 = vector.multi_reduction <add>, %356, %cst_102 [1] : vector<8x8xf32> to vector<8xf32>
    %358 = vector.shape_cast %357 : vector<8xf32> to vector<8x1xf32>
    %359 = tpu.reciprocal %358 {approx = true} : vector<8x1xf32> -> vector<8x1xf32>
    %360 = vector.broadcast %359 : vector<8x1xf32> to vector<8x8xf32>
    %361 = arith.mulf %356, %360 : vector<8x8xf32>
    %362 = arith.truncf %361 : vector<8x8xf32> to vector<8x8xbf16>
    %cst_103 = arith.constant dense<0.000000e+00> : vector<8x8xf32>
    %363 = tpu.matmul %362, %350, %cst_103 {dimension_numbers = #tpu.dot_dimension_numbers<[1], [0], [0], [1], [0, 0, 1, 1], [], []>} : vector<8x8xbf16>, vector<8x8xbf16>, vector<8x8xf32> -> vector<8x8xf32>
    %364 = tpu.concatenate %306, %325, %344, %363 in 1 : vector<8x8xf32>, vector<8x8xf32>, vector<8x8xf32>, vector<8x8xf32> -> vector<8x32xf32>
    %365 = vector.extract_strided_slice %281 {offsets = [8, 0], sizes = [8, 8], strides = [1, 1]} : vector<16x32xf32> to vector<8x8xf32>
    %366 = arith.truncf %365 : vector<8x8xf32> to vector<8x8xbf16>
    %367 = vector.extract_strided_slice %284 {offsets = [8, 0], sizes = [8, 8], strides = [1, 1]} : vector<16x32xf32> to vector<8x8xf32>
    %368 = arith.truncf %367 : vector<8x8xf32> to vector<8x8xbf16>
    %369 = vector.extract_strided_slice %287 {offsets = [8, 0], sizes = [8, 8], strides = [1, 1]} : vector<16x32xf32> to vector<8x8xf32>
    %370 = arith.truncf %369 : vector<8x8xf32> to vector<8x8xbf16>
    %cst_104 = arith.constant dense<0.000000e+00> : vector<8x8xf32>
    %371 = tpu.matmul %366, %368, %cst_104 {dimension_numbers = #tpu.dot_dimension_numbers<[1], [1], [0], [0], [0, 0, 1, 0], [], []>} : vector<8x8xbf16>, vector<8x8xbf16>, vector<8x8xf32> -> vector<8x8xf32>
    %cst_105 = arith.constant dense<0xFF800000> : vector<8xf32>
    %372 = vector.multi_reduction <maximumf>, %371, %cst_105 [1] : vector<8x8xf32> to vector<8xf32>
    %373 = vector.shape_cast %372 : vector<8xf32> to vector<8x1xf32>
    %374 = vector.broadcast %373 : vector<8x1xf32> to vector<8x8xf32>
    %375 = arith.subf %371, %374 : vector<8x8xf32>
    %376 = math.exp %375 : vector<8x8xf32>
    %cst_106 = arith.constant dense<0.000000e+00> : vector<8xf32>
    %377 = vector.multi_reduction <add>, %376, %cst_106 [1] : vector<8x8xf32> to vector<8xf32>
    %378 = vector.shape_cast %377 : vector<8xf32> to vector<8x1xf32>
    %379 = tpu.reciprocal %378 {approx = true} : vector<8x1xf32> -> vector<8x1xf32>
    %380 = vector.broadcast %379 : vector<8x1xf32> to vector<8x8xf32>
    %381 = arith.mulf %376, %380 : vector<8x8xf32>
    %382 = arith.truncf %381 : vector<8x8xf32> to vector<8x8xbf16>
    %cst_107 = arith.constant dense<0.000000e+00> : vector<8x8xf32>
    %383 = tpu.matmul %382, %370, %cst_107 {dimension_numbers = #tpu.dot_dimension_numbers<[1], [0], [0], [1], [0, 0, 1, 1], [], []>} : vector<8x8xbf16>, vector<8x8xbf16>, vector<8x8xf32> -> vector<8x8xf32>
    %384 = vector.extract_strided_slice %281 {offsets = [8, 8], sizes = [8, 8], strides = [1, 1]} : vector<16x32xf32> to vector<8x8xf32>
    %385 = arith.truncf %384 : vector<8x8xf32> to vector<8x8xbf16>
    %386 = vector.extract_strided_slice %284 {offsets = [8, 8], sizes = [8, 8], strides = [1, 1]} : vector<16x32xf32> to vector<8x8xf32>
    %387 = arith.truncf %386 : vector<8x8xf32> to vector<8x8xbf16>
    %388 = vector.extract_strided_slice %287 {offsets = [8, 8], sizes = [8, 8], strides = [1, 1]} : vector<16x32xf32> to vector<8x8xf32>
    %389 = arith.truncf %388 : vector<8x8xf32> to vector<8x8xbf16>
    %cst_108 = arith.constant dense<0.000000e+00> : vector<8x8xf32>
    %390 = tpu.matmul %385, %387, %cst_108 {dimension_numbers = #tpu.dot_dimension_numbers<[1], [1], [0], [0], [0, 0, 1, 0], [], []>} : vector<8x8xbf16>, vector<8x8xbf16>, vector<8x8xf32> -> vector<8x8xf32>
    %cst_109 = arith.constant dense<0xFF800000> : vector<8xf32>
    %391 = vector.multi_reduction <maximumf>, %390, %cst_109 [1] : vector<8x8xf32> to vector<8xf32>
    %392 = vector.shape_cast %391 : vector<8xf32> to vector<8x1xf32>
    %393 = vector.broadcast %392 : vector<8x1xf32> to vector<8x8xf32>
    %394 = arith.subf %390, %393 : vector<8x8xf32>
    %395 = math.exp %394 : vector<8x8xf32>
    %cst_110 = arith.constant dense<0.000000e+00> : vector<8xf32>
    %396 = vector.multi_reduction <add>, %395, %cst_110 [1] : vector<8x8xf32> to vector<8xf32>
    %397 = vector.shape_cast %396 : vector<8xf32> to vector<8x1xf32>
    %398 = tpu.reciprocal %397 {approx = true} : vector<8x1xf32> -> vector<8x1xf32>
    %399 = vector.broadcast %398 : vector<8x1xf32> to vector<8x8xf32>
    %400 = arith.mulf %395, %399 : vector<8x8xf32>
    %401 = arith.truncf %400 : vector<8x8xf32> to vector<8x8xbf16>
    %cst_111 = arith.constant dense<0.000000e+00> : vector<8x8xf32>
    %402 = tpu.matmul %401, %389, %cst_111 {dimension_numbers = #tpu.dot_dimension_numbers<[1], [0], [0], [1], [0, 0, 1, 1], [], []>} : vector<8x8xbf16>, vector<8x8xbf16>, vector<8x8xf32> -> vector<8x8xf32>
    %403 = vector.extract_strided_slice %281 {offsets = [8, 16], sizes = [8, 8], strides = [1, 1]} : vector<16x32xf32> to vector<8x8xf32>
    %404 = arith.truncf %403 : vector<8x8xf32> to vector<8x8xbf16>
    %405 = vector.extract_strided_slice %284 {offsets = [8, 16], sizes = [8, 8], strides = [1, 1]} : vector<16x32xf32> to vector<8x8xf32>
    %406 = arith.truncf %405 : vector<8x8xf32> to vector<8x8xbf16>
    %407 = vector.extract_strided_slice %287 {offsets = [8, 16], sizes = [8, 8], strides = [1, 1]} : vector<16x32xf32> to vector<8x8xf32>
    %408 = arith.truncf %407 : vector<8x8xf32> to vector<8x8xbf16>
    %cst_112 = arith.constant dense<0.000000e+00> : vector<8x8xf32>
    %409 = tpu.matmul %404, %406, %cst_112 {dimension_numbers = #tpu.dot_dimension_numbers<[1], [1], [0], [0], [0, 0, 1, 0], [], []>} : vector<8x8xbf16>, vector<8x8xbf16>, vector<8x8xf32> -> vector<8x8xf32>
    %cst_113 = arith.constant dense<0xFF800000> : vector<8xf32>
    %410 = vector.multi_reduction <maximumf>, %409, %cst_113 [1] : vector<8x8xf32> to vector<8xf32>
    %411 = vector.shape_cast %410 : vector<8xf32> to vector<8x1xf32>
    %412 = vector.broadcast %411 : vector<8x1xf32> to vector<8x8xf32>
    %413 = arith.subf %409, %412 : vector<8x8xf32>
    %414 = math.exp %413 : vector<8x8xf32>
    %cst_114 = arith.constant dense<0.000000e+00> : vector<8xf32>
    %415 = vector.multi_reduction <add>, %414, %cst_114 [1] : vector<8x8xf32> to vector<8xf32>
    %416 = vector.shape_cast %415 : vector<8xf32> to vector<8x1xf32>
    %417 = tpu.reciprocal %416 {approx = true} : vector<8x1xf32> -> vector<8x1xf32>
    %418 = vector.broadcast %417 : vector<8x1xf32> to vector<8x8xf32>
    %419 = arith.mulf %414, %418 : vector<8x8xf32>
    %420 = arith.truncf %419 : vector<8x8xf32> to vector<8x8xbf16>
    %cst_115 = arith.constant dense<0.000000e+00> : vector<8x8xf32>
    %421 = tpu.matmul %420, %408, %cst_115 {dimension_numbers = #tpu.dot_dimension_numbers<[1], [0], [0], [1], [0, 0, 1, 1], [], []>} : vector<8x8xbf16>, vector<8x8xbf16>, vector<8x8xf32> -> vector<8x8xf32>
    %422 = vector.extract_strided_slice %281 {offsets = [8, 24], sizes = [8, 8], strides = [1, 1]} : vector<16x32xf32> to vector<8x8xf32>
    %423 = arith.truncf %422 : vector<8x8xf32> to vector<8x8xbf16>
    %424 = vector.extract_strided_slice %284 {offsets = [8, 24], sizes = [8, 8], strides = [1, 1]} : vector<16x32xf32> to vector<8x8xf32>
    %425 = arith.truncf %424 : vector<8x8xf32> to vector<8x8xbf16>
    %426 = vector.extract_strided_slice %287 {offsets = [8, 24], sizes = [8, 8], strides = [1, 1]} : vector<16x32xf32> to vector<8x8xf32>
    %427 = arith.truncf %426 : vector<8x8xf32> to vector<8x8xbf16>
    %cst_116 = arith.constant dense<0.000000e+00> : vector<8x8xf32>
    %428 = tpu.matmul %423, %425, %cst_116 {dimension_numbers = #tpu.dot_dimension_numbers<[1], [1], [0], [0], [0, 0, 1, 0], [], []>} : vector<8x8xbf16>, vector<8x8xbf16>, vector<8x8xf32> -> vector<8x8xf32>
    %cst_117 = arith.constant dense<0xFF800000> : vector<8xf32>
    %429 = vector.multi_reduction <maximumf>, %428, %cst_117 [1] : vector<8x8xf32> to vector<8xf32>
    %430 = vector.shape_cast %429 : vector<8xf32> to vector<8x1xf32>
    %431 = vector.broadcast %430 : vector<8x1xf32> to vector<8x8xf32>
    %432 = arith.subf %428, %431 : vector<8x8xf32>
    %433 = math.exp %432 : vector<8x8xf32>
    %cst_118 = arith.constant dense<0.000000e+00> : vector<8xf32>
    %434 = vector.multi_reduction <add>, %433, %cst_118 [1] : vector<8x8xf32> to vector<8xf32>
    %435 = vector.shape_cast %434 : vector<8xf32> to vector<8x1xf32>
    %436 = tpu.reciprocal %435 {approx = true} : vector<8x1xf32> -> vector<8x1xf32>
    %437 = vector.broadcast %436 : vector<8x1xf32> to vector<8x8xf32>
    %438 = arith.mulf %433, %437 : vector<8x8xf32>
    %439 = arith.truncf %438 : vector<8x8xf32> to vector<8x8xbf16>
    %cst_119 = arith.constant dense<0.000000e+00> : vector<8x8xf32>
    %440 = tpu.matmul %439, %427, %cst_119 {dimension_numbers = #tpu.dot_dimension_numbers<[1], [0], [0], [1], [0, 0, 1, 1], [], []>} : vector<8x8xbf16>, vector<8x8xbf16>, vector<8x8xf32> -> vector<8x8xf32>
    %441 = tpu.concatenate %383, %402, %421, %440 in 1 : vector<8x8xf32>, vector<8x8xf32>, vector<8x8xf32>, vector<8x8xf32> -> vector<8x32xf32>
    %442 = tpu.concatenate %364, %441 in 0 : vector<8x32xf32>, vector<8x32xf32> -> vector<16x32xf32>
    %443 = arith.truncf %442 : vector<16x32xf32> to vector<16x32xbf16>
    %c1_120 = arith.constant 1 : index
    %c0_121 = arith.constant 0 : index
    %c0_122 = arith.constant 0 : index
    %444 = vector.load %arg4[%c1_120, %c0_121, %c0_122] : memref<2x32x32xbf16, #tpu.memory_space<vmem>>, vector<1x32x32xbf16>
    %445 = vector.shape_cast %444 : vector<1x32x32xbf16> to vector<32x32xbf16>
    %cst_123 = arith.constant dense<0.000000e+00> : vector<16x32xf32>
    %446 = tpu.matmul %443, %445, %cst_123 {dimension_numbers = #tpu.dot_dimension_numbers<[1], [0], [0], [1], [0, 0, 1, 1], [], []>} : vector<16x32xbf16>, vector<32x32xbf16>, vector<16x32xf32> -> vector<16x32xf32>
    %447 = vector.broadcast %272 : vector<1x32xf32> to vector<16x32xf32>
    %448 = arith.addf %446, %447 : vector<16x32xf32>
    %449 = arith.addf %268, %448 : vector<16x32xf32>
    %450 = vector.extract_strided_slice %15 {offsets = [16, 0], sizes = [1, 32], strides = [1, 1]} : vector<22x64xf32> to vector<1x32xf32>
    %451 = vector.extract_strided_slice %15 {offsets = [17, 0], sizes = [1, 32], strides = [1, 1]} : vector<22x64xf32> to vector<1x32xf32>
    %cst_124 = arith.constant dense<0.000000e+00> : vector<16xf32>
    %452 = vector.multi_reduction <add>, %449, %cst_124 [1] : vector<16x32xf32> to vector<16xf32>
    %453 = vector.shape_cast %452 : vector<16xf32> to vector<16x1xf32>
    %cst_125 = arith.constant 3.200000e+01 : f32
    %454 = vector.broadcast %cst_125 : f32 to vector<16x1xf32>
    %455 = arith.divf %453, %454 : vector<16x1xf32>
    %456 = vector.broadcast %455 : vector<16x1xf32> to vector<16x32xf32>
    %457 = arith.subf %449, %456 : vector<16x32xf32>
    %458 = arith.mulf %457, %457 : vector<16x32xf32>
    %cst_126 = arith.constant dense<0.000000e+00> : vector<16xf32>
    %459 = vector.multi_reduction <add>, %458, %cst_126 [1] : vector<16x32xf32> to vector<16xf32>
    %460 = vector.shape_cast %459 : vector<16xf32> to vector<16x1xf32>
    %cst_127 = arith.constant 3.200000e+01 : f32
    %461 = vector.broadcast %cst_127 : f32 to vector<16x1xf32>
    %462 = arith.divf %460, %461 : vector<16x1xf32>
    %463 = vector.broadcast %455 : vector<16x1xf32> to vector<16x32xf32>
    %464 = arith.subf %449, %463 : vector<16x32xf32>
    %cst_128 = arith.constant 9.99999974E-6 : f32
    %465 = vector.broadcast %cst_128 : f32 to vector<16x1xf32>
    %466 = arith.addf %462, %465 : vector<16x1xf32>
    %467 = math.rsqrt %466 : vector<16x1xf32>
    %468 = vector.broadcast %467 : vector<16x1xf32> to vector<16x32xf32>
    %469 = arith.mulf %464, %468 : vector<16x32xf32>
    %470 = vector.broadcast %450 : vector<1x32xf32> to vector<16x32xf32>
    %471 = arith.mulf %469, %470 : vector<16x32xf32>
    %472 = vector.broadcast %451 : vector<1x32xf32> to vector<16x32xf32>
    %473 = arith.addf %471, %472 : vector<16x32xf32>
    %474 = arith.truncf %473 : vector<16x32xf32> to vector<16x32xbf16>
    %c1_129 = arith.constant 1 : index
    %c0_130 = arith.constant 0 : index
    %c0_131 = arith.constant 0 : index
    %475 = vector.load %arg6[%c1_129, %c0_130, %c0_131] : memref<2x32x64xbf16, #tpu.memory_space<vmem>>, vector<1x32x64xbf16>
    %476 = vector.shape_cast %475 : vector<1x32x64xbf16> to vector<32x64xbf16>
    %cst_132 = arith.constant dense<0.000000e+00> : vector<16x64xf32>
    %477 = tpu.matmul %474, %476, %cst_132 {dimension_numbers = #tpu.dot_dimension_numbers<[1], [0], [0], [1], [0, 0, 1, 1], [], []>} : vector<16x32xbf16>, vector<32x64xbf16>, vector<16x64xf32> -> vector<16x64xf32>
    %478 = vector.broadcast %273 : vector<1x64xf32> to vector<16x64xf32>
    %479 = arith.addf %477, %478 : vector<16x64xf32>
    %cst_133 = arith.constant 0.000000e+00 : f32
    %480 = vector.broadcast %cst_133 : f32 to vector<16x64xf32>
    %481 = arith.maximumf %479, %480 : vector<16x64xf32>
    %482 = arith.truncf %481 : vector<16x64xf32> to vector<16x64xbf16>
    %c1_134 = arith.constant 1 : index
    %c0_135 = arith.constant 0 : index
    %c0_136 = arith.constant 0 : index
    %483 = vector.load %arg7[%c1_134, %c0_135, %c0_136] : memref<2x64x32xbf16, #tpu.memory_space<vmem>>, vector<1x64x32xbf16>
    %484 = vector.shape_cast %483 : vector<1x64x32xbf16> to vector<64x32xbf16>
    %cst_137 = arith.constant dense<0.000000e+00> : vector<16x32xf32>
    %485 = tpu.matmul %482, %484, %cst_137 {dimension_numbers = #tpu.dot_dimension_numbers<[1], [0], [0], [1], [0, 0, 1, 1], [], []>} : vector<16x64xbf16>, vector<64x32xbf16>, vector<16x32xf32> -> vector<16x32xf32>
    %486 = vector.broadcast %274 : vector<1x32xf32> to vector<16x32xf32>
    %487 = arith.addf %485, %486 : vector<16x32xf32>
    %488 = arith.addf %473, %487 : vector<16x32xf32>
    %489 = vector.extract_strided_slice %15 {offsets = [18, 0], sizes = [1, 32], strides = [1, 1]} : vector<22x64xf32> to vector<1x32xf32>
    %490 = vector.extract_strided_slice %15 {offsets = [19, 0], sizes = [1, 32], strides = [1, 1]} : vector<22x64xf32> to vector<1x32xf32>
    %cst_138 = arith.constant dense<0.000000e+00> : vector<16xf32>
    %491 = vector.multi_reduction <add>, %488, %cst_138 [1] : vector<16x32xf32> to vector<16xf32>
    %492 = vector.shape_cast %491 : vector<16xf32> to vector<16x1xf32>
    %cst_139 = arith.constant 3.200000e+01 : f32
    %493 = vector.broadcast %cst_139 : f32 to vector<16x1xf32>
    %494 = arith.divf %492, %493 : vector<16x1xf32>
    %495 = vector.broadcast %494 : vector<16x1xf32> to vector<16x32xf32>
    %496 = arith.subf %488, %495 : vector<16x32xf32>
    %497 = arith.mulf %496, %496 : vector<16x32xf32>
    %cst_140 = arith.constant dense<0.000000e+00> : vector<16xf32>
    %498 = vector.multi_reduction <add>, %497, %cst_140 [1] : vector<16x32xf32> to vector<16xf32>
    %499 = vector.shape_cast %498 : vector<16xf32> to vector<16x1xf32>
    %cst_141 = arith.constant 3.200000e+01 : f32
    %500 = vector.broadcast %cst_141 : f32 to vector<16x1xf32>
    %501 = arith.divf %499, %500 : vector<16x1xf32>
    %502 = vector.broadcast %494 : vector<16x1xf32> to vector<16x32xf32>
    %503 = arith.subf %488, %502 : vector<16x32xf32>
    %cst_142 = arith.constant 9.99999974E-6 : f32
    %504 = vector.broadcast %cst_142 : f32 to vector<16x1xf32>
    %505 = arith.addf %501, %504 : vector<16x1xf32>
    %506 = math.rsqrt %505 : vector<16x1xf32>
    %507 = vector.broadcast %506 : vector<16x1xf32> to vector<16x32xf32>
    %508 = arith.mulf %503, %507 : vector<16x32xf32>
    %509 = vector.broadcast %489 : vector<1x32xf32> to vector<16x32xf32>
    %510 = arith.mulf %508, %509 : vector<16x32xf32>
    %511 = vector.broadcast %490 : vector<1x32xf32> to vector<16x32xf32>
    %512 = arith.addf %510, %511 : vector<16x32xf32>
    %513 = vector.extract_strided_slice %15 {offsets = [20, 0], sizes = [1, 32], strides = [1, 1]} : vector<22x64xf32> to vector<1x32xf32>
    %514 = vector.extract_strided_slice %15 {offsets = [21, 0], sizes = [1, 32], strides = [1, 1]} : vector<22x64xf32> to vector<1x32xf32>
    %cst_143 = arith.constant dense<0.000000e+00> : vector<16xf32>
    %515 = vector.multi_reduction <add>, %512, %cst_143 [1] : vector<16x32xf32> to vector<16xf32>
    %516 = vector.shape_cast %515 : vector<16xf32> to vector<16x1xf32>
    %cst_144 = arith.constant 3.200000e+01 : f32
    %517 = vector.broadcast %cst_144 : f32 to vector<16x1xf32>
    %518 = arith.divf %516, %517 : vector<16x1xf32>
    %519 = vector.broadcast %518 : vector<16x1xf32> to vector<16x32xf32>
    %520 = arith.subf %512, %519 : vector<16x32xf32>
    %521 = arith.mulf %520, %520 : vector<16x32xf32>
    %cst_145 = arith.constant dense<0.000000e+00> : vector<16xf32>
    %522 = vector.multi_reduction <add>, %521, %cst_145 [1] : vector<16x32xf32> to vector<16xf32>
    %523 = vector.shape_cast %522 : vector<16xf32> to vector<16x1xf32>
    %cst_146 = arith.constant 3.200000e+01 : f32
    %524 = vector.broadcast %cst_146 : f32 to vector<16x1xf32>
    %525 = arith.divf %523, %524 : vector<16x1xf32>
    %526 = vector.broadcast %518 : vector<16x1xf32> to vector<16x32xf32>
    %527 = arith.subf %512, %526 : vector<16x32xf32>
    %cst_147 = arith.constant 9.99999974E-6 : f32
    %528 = vector.broadcast %cst_147 : f32 to vector<16x1xf32>
    %529 = arith.addf %525, %528 : vector<16x1xf32>
    %530 = math.rsqrt %529 : vector<16x1xf32>
    %531 = vector.broadcast %530 : vector<16x1xf32> to vector<16x32xf32>
    %532 = arith.mulf %527, %531 : vector<16x32xf32>
    %533 = vector.broadcast %513 : vector<1x32xf32> to vector<16x32xf32>
    %534 = arith.mulf %532, %533 : vector<16x32xf32>
    %535 = vector.broadcast %514 : vector<1x32xf32> to vector<16x32xf32>
    %536 = arith.addf %534, %535 : vector<16x32xf32>
    %537 = vector.extract_strided_slice %536 {offsets = [0, 0], sizes = [8, 32], strides = [1, 1]} : vector<16x32xf32> to vector<8x32xf32>
    %c0_148 = arith.constant 0 : index
    %c0_149 = arith.constant 0 : index
    %c0_150 = arith.constant 0 : index
    %538 = vector.load %arg9[%c0_148, %c0_149, %c0_150] : memref<2x8x32xf32, #tpu.memory_space<vmem>>, vector<1x8x32xf32>
    %539 = vector.shape_cast %538 : vector<1x8x32xf32> to vector<8x32xf32>
    %540 = vector.shape_cast %537 : vector<8x32xf32> to vector<1x8x32xf32>
    tpu.vector_store %arg9[%c0_148, %c0_149, %c0_150], %540 {strides = array<i32>} : memref<2x8x32xf32, #tpu.memory_space<vmem>>, vector<1x8x32xf32>,
    %541 = vector.extract_strided_slice %536 {offsets = [8, 0], sizes = [8, 32], strides = [1, 1]} : vector<16x32xf32> to vector<8x32xf32>
    %c1_151 = arith.constant 1 : index
    %c0_152 = arith.constant 0 : index
    %c0_153 = arith.constant 0 : index
    %542 = vector.load %arg9[%c1_151, %c0_152, %c0_153] : memref<2x8x32xf32, #tpu.memory_space<vmem>>, vector<1x8x32xf32>
    %543 = vector.shape_cast %542 : vector<1x8x32xf32> to vector<8x32xf32>
    %544 = vector.shape_cast %541 : vector<8x32xf32> to vector<1x8x32xf32>
    tpu.vector_store %arg9[%c1_151, %c0_152, %c0_153], %544 {strides = array<i32>} : memref<2x8x32xf32, #tpu.memory_space<vmem>>, vector<1x8x32xf32>,
    return
  }
}

</mosaic_0001>

<llo_original>
// kernel: tpu_custom_call.1
$region0: #{tpu_custom_call.1}
  #allocation0 [shape = 'u32[]', space=smem, size = 0x4, offset = 0x4, fixed_abs, tag = 'smem constant byte address 0x4 - core index']
  #allocation1 [shape = 'u32[144,128]{1,0:T(1,128)}', space=vmem, size = 0x12000, scoped, tag = 'internal scratch']
  %s0 = inlined_call_operand.hbm [shape: f32[2,8,32], index: 0, kind: input, shape index: {}]
  %s1 = inlined_call_operand.hbm [shape: f32[2,8,32], index: 1, kind: input, shape index: {}]
  %s2 = inlined_call_operand.hbm [shape: f32[2,8,32], index: 2, kind: input, shape index: {}]
  %s3 = inlined_call_operand.vmem [shape: bf16[2,32,32], index: 3, kind: input, shape index: {}]
  %s4 = inlined_call_operand.vmem [shape: bf16[2,32,32], index: 4, kind: input, shape index: {}]
  %s5 = inlined_call_operand.vmem [shape: bf16[2,32,64], index: 5, kind: input, shape index: {}]
  %s6 = inlined_call_operand.hbm [shape: bf16[2,32,64], index: 6, kind: input, shape index: {}]
  %s7 = inlined_call_operand.vmem [shape: bf16[2,64,32], index: 7, kind: input, shape index: {}]
  %s8 = inlined_call_operand.vmem [shape: f32[22,64], index: 8, kind: input, shape index: {}]
  %s9 = inlined_call_operand.hbm [shape: f32[2,8,32], index: 9, kind: output, shape index: {}]
  %s10 = sld [smem:[#allocation0]]
  $region62: #{tpu_custom_call.1} parent=0
    _
  %s12 = ssub.s32 1, %s10
  %s13 = scalar_select 0, %s12, %s10
  $region1: #{tpu_custom_call.1} parent=0
    #allocation2 [shape = 'u8[8192]{0}', space=vmem, size = 0x2000, scoped, tag = 'input window, operand 0, single buffered']
    #allocation3 [shape = 's32[1]{0}', space=sflag, size = 0x4, scoped, tag = 'scoped memory for tpu_custom_call.1']
    #allocation4 [shape = 's32[1]{0}', space=sflag, size = 0x4, scoped, tag = 'scoped memory for tpu_custom_call.1']
    #allocation5 [shape = 'u8[8192]{0}', space=vmem, size = 0x2000, scoped, tag = 'input window, operand 1, single buffered']
    #allocation6 [shape = 's32[1]{0}', space=sflag, size = 0x4, scoped, tag = 'scoped memory for tpu_custom_call.1']
    #allocation7 [shape = 'u8[8192]{0}', space=vmem, size = 0x2000, scoped, tag = 'input window, operand 2, single buffered']
    #allocation8 [shape = 'u8[16384]{0}', space=vmem, size = 0x4000, scoped, tag = 'input window, operand 6, single buffered']
    #allocation9 [shape = 's32[1]{0}', space=sflag, size = 0x4, scoped, tag = 'scoped memory for tpu_custom_call.1']
    #allocation10 [shape = 'u8[8192]{0}', space=vmem, size = 0x2000, scoped, tag = 'output window, operand 0, single buffered']
    %14 = vsyncpa [#allocation3], 0
    %15 = vsyncpa [#allocation6], 0
    %16 = vsyncpa [#allocation9], 0
    %17 = vsyncpa [#allocation4], 0
    // Predicated region
    $region2: #{tpu_custom_call.1} parent=1 // pred_check
      _
    $region3: #{tpu_custom_call.1} parent=1 // pred_check_branch
      %19 = sbr.rel (0) target = $region5
    $region4: #{tpu_custom_call.1} parent=1 // pred_region
      %s21 = ssub.s32 256, 256
      %22 = vsyncadd [#allocation3], %s21
      %s23 = sshll.u32 [#allocation2], 4
      %s24 = int_to_ptr.vmem [resolvable:$true] %s23
      %29 = dma.hbm_to_vmem [thread:$0]  %s0, 256, %s24, [#allocation3], 128, 128, 8
    $region5: #{tpu_custom_call.1} parent=1 // pred_fallthru
      _
    // Predicated region
    $region6: #{tpu_custom_call.1} parent=1 // pred_check
      _
    $region7: #{tpu_custom_call.1} parent=1 // pred_check_branch
      %31 = sbr.rel (0) target = $region9
    $region8: #{tpu_custom_call.1} parent=1 // pred_region
      %s33 = ssub.s32 256, 256
      %34 = vsyncadd [#allocation6], %s33
      %s35 = sshll.u32 [#allocation5], 4
      %s36 = int_to_ptr.vmem [resolvable:$true] %s35
      %41 = dma.hbm_to_vmem [thread:$0]  %s1, 256, %s36, [#allocation6], 128, 128, 8
    $region9: #{tpu_custom_call.1} parent=1 // pred_fallthru
      _
    // Predicated region
    $region10: #{tpu_custom_call.1} parent=1 // pred_check
      _
    $region11: #{tpu_custom_call.1} parent=1 // pred_check_branch
      %43 = sbr.rel (0) target = $region13
    $region12: #{tpu_custom_call.1} parent=1 // pred_region
      %s45 = ssub.s32 256, 256
      %46 = vsyncadd [#allocation6], %s45
      %s47 = sshll.u32 [#allocation7], 4
      %s48 = int_to_ptr.vmem [resolvable:$true] %s47
      %53 = dma.hbm_to_vmem [thread:$0]  %s2, 256, %s48, [#allocation6], 128, 128, 8
    $region13: #{tpu_custom_call.1} parent=1 // pred_fallthru
      _
    // Predicated region
    $region14: #{tpu_custom_call.1} parent=1 // pred_check
      _
    $region15: #{tpu_custom_call.1} parent=1 // pred_check_branch
      %55 = sbr.rel (0) target = $region17
    $region16: #{tpu_custom_call.1} parent=1 // pred_region
      _
    $region17: #{tpu_custom_call.1} parent=1 // pred_fallthru
      _
    // Predicated region
    $region18: #{tpu_custom_call.1} parent=1 // pred_check
      _
    $region19: #{tpu_custom_call.1} parent=1 // pred_check_branch
      %57 = sbr.rel (0) target = $region21
    $region20: #{tpu_custom_call.1} parent=1 // pred_region
      _
    $region21: #{tpu_custom_call.1} parent=1 // pred_fallthru
      _
    // Predicated region
    $region22: #{tpu_custom_call.1} parent=1 // pred_check
      _
    $region23: #{tpu_custom_call.1} parent=1 // pred_check_branch
      %59 = sbr.rel (0) target = $region25
    $region24: #{tpu_custom_call.1} parent=1 // pred_region
      _
    $region25: #{tpu_custom_call.1} parent=1 // pred_fallthru
      _
    // Predicated region
    $region26: #{tpu_custom_call.1} parent=1 // pred_check
      _
    $region27: #{tpu_custom_call.1} parent=1 // pred_check_branch
      %61 = sbr.rel (0) target = $region29
    $region28: #{tpu_custom_call.1} parent=1 // pred_region
      %s63 = ssub.s32 512, 512
      %64 = vsyncadd [#allocation9], %s63
      %s65 = sshll.u32 [#allocation8], 4
      %s66 = int_to_ptr.vmem [resolvable:$true] %s65
      %71 = dma.hbm_to_vmem [thread:$0]  %s6, 512, %s66, [#allocation9], 64, 64, 4
    $region29: #{tpu_custom_call.1} parent=1 // pred_fallthru
      _
    // Predicated region
    $region30: #{tpu_custom_call.1} parent=1 // pred_check
      _
    $region31: #{tpu_custom_call.1} parent=1 // pred_check_branch
      %73 = sbr.rel (0) target = $region33
    $region32: #{tpu_custom_call.1} parent=1 // pred_region
      _
    $region33: #{tpu_custom_call.1} parent=1 // pred_fallthru
      _
    // Predicated region
    $region34: #{tpu_custom_call.1} parent=1 // pred_check
      _
    $region35: #{tpu_custom_call.1} parent=1 // pred_check_branch
      %75 = sbr.rel (0) target = $region37
    $region36: #{tpu_custom_call.1} parent=1 // pred_region
      _
    $region37: #{tpu_custom_call.1} parent=1 // pred_fallthru
      _
    // Predicated region
    $region38: #{tpu_custom_call.1} parent=1 // pred_check
      _
    $region39: #{tpu_custom_call.1} parent=1 // pred_check_branch
      %77 = sbr.rel (0) target = $region41
    $region40: #{tpu_custom_call.1} parent=1 // pred_region
      %78 = dma.done [#allocation3], 256
    $region41: #{tpu_custom_call.1} parent=1 // pred_fallthru
      _
    // Predicated region
    $region42: #{tpu_custom_call.1} parent=1 // pred_check
      _
    $region43: #{tpu_custom_call.1} parent=1 // pred_check_branch
      %80 = sbr.rel (0) target = $region45
    $region44: #{tpu_custom_call.1} parent=1 // pred_region
      %81 = dma.done [#allocation6], 256
    $region45: #{tpu_custom_call.1} parent=1 // pred_fallthru
      _
    // Predicated region
    $region46: #{tpu_custom_call.1} parent=1 // pred_check
      _
    $region47: #{tpu_custom_call.1} parent=1 // pred_check_branch
      %83 = sbr.rel (0) target = $region49
    $region48: #{tpu_custom_call.1} parent=1 // pred_region
      %84 = dma.done [#allocation6], 256
    $region49: #{tpu_custom_call.1} parent=1 // pred_fallthru
      _
    // Predicated region
    $region50: #{tpu_custom_call.1} parent=1 // pred_check
      _
    $region51: #{tpu_custom_call.1} parent=1 // pred_check_branch
      %86 = sbr.rel (0) target = $region53
    $region52: #{tpu_custom_call.1} parent=1 // pred_region
      %87 = dma.done [#allocation9], 512
    $region53: #{tpu_custom_call.1} parent=1 // pred_fallthru
      _
    %v89 = vld [vmem:[#allocation2] sm:$0xff]
    %s90 = scalar_lea.vmem [#allocation2], 8
    %v91 = vld [vmem:[%s90] sm:$0xff]
    %v92 = vld [vmem:[#allocation5] sm:$0xff]
    %s93 = scalar_lea.vmem [#allocation5], 8
    %v94 = vld [vmem:[%s93] sm:$0xff]
    %v95 = vld [vmem:[#allocation7] sm:$0xff]
    %s96 = scalar_lea.vmem [#allocation7], 8
    %v97 = vld [vmem:[%s96] sm:$0xff]
    %v98 = vld [vmem:[%s8] sm:$0xff]
    %v99 = vld [vmem:[%s8 + $0x8] sm:$0xff]
    %v100 = vld [vmem:[%s8 + $0x10] sm:$0x3f]
    %v101 = vadd.f32 %v92, %v95
    %v102 = vadd.f32 %v94, %v97
    %v103 = vpack.c.bf16 %v102, %v101
    %v104 = vpack.c.bf16 %v94, %v92
    %v105 = vld [vmem:[%s5] sm:$0xf]
    %v106 = vld [vmem:[%s5 + $0x4] sm:$0xf]
    %v107 = vld [vmem:[%s5 + $0x8] sm:$0xf]
    %v108 = vld [vmem:[%s5 + $0xc] sm:$0xf]
    %v113 = vunpack.c.l.b16 %v105
    %v114 = vunpack.c.l.b16 %v106
    %v115 = vunpack.c.l.b16 %v107
    %v116 = vunpack.c.l.b16 %v108
    %v117 = vpack.c.b16 %v114, %v113
    %v118 = vpack.c.b16 %v116, %v115
    %vm121 = vcmask 261120
    %v123 = vsel %vm121, %v103, 0
    %125 = vmatprep.subr.bf16.mxu0 0
    %126 = vmatpush1.bf16.msra.mxu0 %v117
    %127 = vmatprep.subr.bf16.mxu0 0
    %128 = vmatpush1.bf16.msra.mxu0 %v118
    %129 = vmatprep.subr.bf16.mxu0 0
    %130 = vmatpush1.bf16.msra.mxu0 0
    %131 = vmatprep.subr.bf16.mxu0 0
    %132 = vmatpush1.bf16.msra.mxu0 0
    %133 = vmatprep.subr.bf16.mxu0 0
    %134 = vmatpush1.bf16.msra.mxu0 0
    %135 = vmatprep.subr.bf16.mxu0 0
    %136 = vmatpush1.bf16.msra.mxu0 0
    %137 = vmatprep.subr.bf16.mxu0 0
    %138 = vmatpush1.bf16.msra.mxu0 0
    %139 = vmatprep.subr.bf16.mxu0 0
    %140 = vmatpush1.bf16.msra.mxu0 0
    %141 = vmatprep.subr.bf16.mxu0 0
    %142 = vmatpush1.bf16.msra.mxu0 0
    %143 = vmatprep.subr.bf16.mxu0 0
    %144 = vmatpush1.bf16.msra.mxu0 0
    %145 = vmatprep.subr.bf16.mxu0 0
    %146 = vmatpush1.bf16.msra.mxu0 0
    %147 = vmatprep.subr.bf16.mxu0 0
    %148 = vmatpush1.bf16.msra.mxu0 0
    %149 = vmatprep.subr.bf16.mxu0 0
    %150 = vmatpush1.bf16.msra.mxu0 0
    %151 = vmatprep.subr.bf16.mxu0 0
    %152 = vmatpush1.bf16.msra.mxu0 0
    %153 = vmatprep.subr.bf16.mxu0 0
    %154 = vmatpush1.bf16.msra.mxu0 0
    %155 = vmatprep.subr.bf16.mxu0 0
    %156 = vmatpush1.bf16.msra.mxu0 0
    %157 = vmatprep.mubr.bf16.mxu0 0
    %158 = vmatmul.mubr.bf16.gmra.mrb[0].mxu0 %v123
    %v159 = vpop.f32.mrb[0].mxu0
    %v160 = vadd.f32 0.0, %v159
    %v161 = vpop.f32.mrb[0].mxu0
    %v162 = vpop.f32.mrb[0].mxu0
    %v163 = vadd.f32 0.0, %v162
    %v164 = vpop.f32.mrb[0].mxu0
    %165 = vdwg.mxu0
    %s166 = scalar_lea.vmem %s5, 16
    %v167 = vld [vmem:[%s166] sm:$0xf]
    %v168 = vld [vmem:[%s166 + $0x4] sm:$0xf]
    %v169 = vld [vmem:[%s166 + $0x8] sm:$0xf]
    %v170 = vld [vmem:[%s166 + $0xc] sm:$0xf]
    %v175 = vunpack.c.l.b16 %v167
    %v176 = vunpack.c.l.b16 %v168
    %v177 = vunpack.c.l.b16 %v169
    %v178 = vunpack.c.l.b16 %v170
    %v179 = vpack.c.b16 %v176, %v175
    %v180 = vpack.c.b16 %v178, %v177
    %v184 = vsel %vm121, %v104, 0
    %186 = vmatprep.subr.bf16.mxu0 0
    %187 = vmatpush1.bf16.msra.mxu0 %v179
    %188 = vmatprep.subr.bf16.mxu0 0
    %189 = vmatpush1.bf16.msra.mxu0 %v180
    %190 = vmatprep.subr.bf16.mxu0 0
    %191 = vmatpush1.bf16.msra.mxu0 0
    %192 = vmatprep.subr.bf16.mxu0 0
    %193 = vmatpush1.bf16.msra.mxu0 0
    %194 = vmatprep.subr.bf16.mxu0 0
    %195 = vmatpush1.bf16.msra.mxu0 0
    %196 = vmatprep.subr.bf16.mxu0 0
    %197 = vmatpush1.bf16.msra.mxu0 0
    %198 = vmatprep.subr.bf16.mxu0 0
    %199 = vmatpush1.bf16.msra.mxu0 0
    %200 = vmatprep.subr.bf16.mxu0 0
    %201 = vmatpush1.bf16.msra.mxu0 0
    %202 = vmatprep.subr.bf16.mxu0 0
    %203 = vmatpush1.bf16.msra.mxu0 0
    %204 = vmatprep.subr.bf16.mxu0 0
    %205 = vmatpush1.bf16.msra.mxu0 0
    %206 = vmatprep.subr.bf16.mxu0 0
    %207 = vmatpush1.bf16.msra.mxu0 0
    %208 = vmatprep.subr.bf16.mxu0 0
    %209 = vmatpush1.bf16.msra.mxu0 0
    %210 = vmatprep.subr.bf16.mxu0 0
    %211 = vmatpush1.bf16.msra.mxu0 0
    %212 = vmatprep.subr.bf16.mxu0 0
    %213 = vmatpush1.bf16.msra.mxu0 0
    %214 = vmatprep.subr.bf16.mxu0 0
    %215 = vmatpush1.bf16.msra.mxu0 0
    %216 = vmatprep.subr.bf16.mxu0 0
    %217 = vmatpush1.bf16.msra.mxu0 0
    %218 = vmatprep.mubr.bf16.mxu0 0
    %219 = vmatmul.mubr.bf16.gmra.mrb[0].mxu0 %v184
    %v220 = vpop.f32.mrb[0].mxu0
    %v221 = vadd.f32 0.0, %v220
    %v222 = vpop.f32.mrb[0].mxu0
    %v223 = vpop.f32.mrb[0].mxu0
    %v224 = vadd.f32 0.0, %v223
    %v225 = vpop.f32.mrb[0].mxu0
    %226 = vdwg.mxu0
    %v227 = vadd.f32 %v89, %v95
    %v228 = vadd.f32 %v91, %v97
    %v229 = vpack.c.bf16 %v228, %v227
    %v230 = vld [vmem:[%s3] sm:$0xf]
    %v231 = vld [vmem:[%s3 + $0x4] sm:$0xf]
    %v232 = vld [vmem:[%s3 + $0x8] sm:$0xf]
    %v233 = vld [vmem:[%s3 + $0xc] sm:$0xf]
    %v234 = vlaneseq
    %v235 = vshrl.u32 %v234, 7
    %v236 = vsub.s32 0, %v235
    %v237 = vrot.slane %v98, %v236
    %v242 = vunpack.c.l.b16 %v230
    %v243 = vunpack.c.l.b16 %v231
    %v244 = vunpack.c.l.b16 %v232
    %v245 = vunpack.c.l.b16 %v233
    %v246 = vpack.c.b16 %v243, %v242
    %v247 = vpack.c.b16 %v245, %v244
    %v251 = vsel %vm121, %v229, 0
    %253 = vmatprep.subr.bf16.mxu0 0
    %254 = vmatpush1.bf16.msra.mxu0 %v246
    %255 = vmatprep.subr.bf16.mxu0 0
    %256 = vmatpush1.bf16.msra.mxu0 %v247
    %257 = vmatprep.subr.bf16.mxu0 0
    %258 = vmatpush1.bf16.msra.mxu0 0
    %259 = vmatprep.subr.bf16.mxu0 0
    %260 = vmatpush1.bf16.msra.mxu0 0
    %261 = vmatprep.subr.bf16.mxu0 0
    %262 = vmatpush1.bf16.msra.mxu0 0
    %263 = vmatprep.subr.bf16.mxu0 0
    %264 = vmatpush1.bf16.msra.mxu0 0
    %265 = vmatprep.subr.bf16.mxu0 0
    %266 = vmatpush1.bf16.msra.mxu0 0
    %267 = vmatprep.subr.bf16.mxu0 0
    %268 = vmatpush1.bf16.msra.mxu0 0
    %269 = vmatprep.subr.bf16.mxu0 0
    %270 = vmatpush1.bf16.msra.mxu0 0
    %271 = vmatprep.subr.bf16.mxu0 0
    %272 = vmatpush1.bf16.msra.mxu0 0
    %273 = vmatprep.subr.bf16.mxu0 0
    %274 = vmatpush1.bf16.msra.mxu0 0
    %275 = vmatprep.subr.bf16.mxu0 0
    %276 = vmatpush1.bf16.msra.mxu0 0
    %277 = vmatprep.subr.bf16.mxu0 0
    %278 = vmatpush1.bf16.msra.mxu0 0
    %279 = vmatprep.subr.bf16.mxu0 0
    %280 = vmatpush1.bf16.msra.mxu0 0
    %281 = vmatprep.subr.bf16.mxu0 0
    %282 = vmatpush1.bf16.msra.mxu0 0
    %283 = vmatprep.subr.bf16.mxu0 0
    %284 = vmatpush1.bf16.msra.mxu0 0
    %285 = vmatprep.mubr.bf16.mxu0 0
    %286 = vmatmul.mubr.bf16.gmra.mrb[0].mxu0 %v251
    %v287 = vpop.f32.mrb[0].mxu0
    %v288 = vadd.f32 %v237, %v287
    %v289 = vpop.f32.mrb[0].mxu0
    %v290 = vpop.f32.mrb[0].mxu0
    %v291 = vadd.f32 %v237, %v290
    %v292 = vpop.f32.mrb[0].mxu0
    %293 = vdwg.mxu0
    %v294 = vlaneseq
    %v295 = vshrl.u32 %v294, 7
    %v296 = vsub.s32 1, %v295
    %v297 = vrot.slane %v98, %v296
    %v298 = vadd.f32 %v160, %v297
    %v299 = vadd.f32 %v163, %v297
    %v300 = vlaneseq
    %v301 = vshrl.u32 %v300, 7
    %v302 = vsub.s32 2, %v301
    %v303 = vrot.slane %v98, %v302
    %v304 = vadd.f32 %v221, %v303
    %v305 = vadd.f32 %v224, %v303
    %v306 = vpack.c.bf16 %v288, %v288
    %v307 = vpack.c.bf16 %v298, %v298
    %v308 = vpack.c.bf16 %v304, %v304
    %vm309 = vcmask 64512
    %v311 = vsel %vm309, %v306, 0
    %v314 = vsel %vm309, %v307, 0
    %316 = vmatprep.subr.bf16.mxu0 0
    %317 = vmatpush1.bf16.xpose.msra.mxu0 %v314
    %318 = vmatprep.subr.bf16.mxu0 0
    %319 = vmatpush1.bf16.xpose.msra.mxu0 0
    %320 = vmatprep.subr.bf16.mxu0 0
    %321 = vmatpush1.bf16.xpose.msra.mxu0 0
    %322 = vmatprep.subr.bf16.mxu0 0
    %323 = vmatpush1.bf16.xpose.msra.mxu0 0
    %324 = vmatprep.subr.bf16.mxu0 0
    %325 = vmatpush1.bf16.xpose.msra.mxu0 0
    %326 = vmatprep.subr.bf16.mxu0 0
    %327 = vmatpush1.bf16.xpose.msra.mxu0 0
    %328 = vmatprep.subr.bf16.mxu0 0
    %329 = vmatpush1.bf16.xpose.msra.mxu0 0
    %330 = vmatprep.subr.bf16.mxu0 0
    %331 = vmatpush1.bf16.xpose.msra.mxu0 0
    %332 = vmatprep.subr.bf16.mxu0 0
    %333 = vmatpush1.bf16.xpose.msra.mxu0 0
    %334 = vmatprep.subr.bf16.mxu0 0
    %335 = vmatpush1.bf16.xpose.msra.mxu0 0
    %336 = vmatprep.subr.bf16.mxu0 0
    %337 = vmatpush1.bf16.xpose.msra.mxu0 0
    %338 = vmatprep.subr.bf16.mxu0 0
    %339 = vmatpush1.bf16.xpose.msra.mxu0 0
    %340 = vmatprep.subr.bf16.mxu0 0
    %341 = vmatpush1.bf16.xpose.msra.mxu0 0
    %342 = vmatprep.subr.bf16.mxu0 0
    %343 = vmatpush1.bf16.xpose.msra.mxu0 0
    %344 = vmatprep.subr.bf16.mxu0 0
    %345 = vmatpush1.bf16.xpose.msra.mxu0 0
    %346 = vmatprep.subr.bf16.mxu0 0
    %347 = vmatpush1.bf16.xpose.msra.mxu0 0
    %348 = vmatprep.mubr.bf16.mxu0 0
    %349 = vmatmul.mubr.bf16.gmra.mrb[0].mxu0 %v311
    %v350 = vpop.f32.mrb[0].mxu0
    %v351 = vadd.f32 0.0, %v350
    %v352 = vpop.f32.mrb[0].mxu0
    %v353 = vpop.f32.mrb[0].mxu0
    %v354 = vpop.f32.mrb[0].mxu0
    %355 = vdwg.mxu0
    %v356 = vsel %vm309, %v351, -inf
    %357 = vmax.xlane.f32.xlu0 %v356
    %v358 = vpop.xlane.xlu0 %357
    %v359 = vsub.f32 %v351, %v358
    %v360 = vmul.f32 %v359, 1.442695
    %v361 = vpow.pop %v360
    %v362 = vsel %vm309, %v361, 0.0
    %363 = vadd.xlane.f32.xlu0 %v362
    %v364 = vpop.xlane.xlu0 %363
    %v365 = vrcp.pop %v364
    %v366 = vmul.f32 %v361, %v365
    %v367 = vpack.c.bf16 %v366, %v366
    %v369 = vsel %vm309, %v367, 0
    %vm371 = vcmask 1043456
    %v373 = vsel %vm371, %v308, 0
    %375 = vmatprep.subr.bf16.mxu0 0
    %376 = vmatpush1.bf16.msra.mxu0 %v373
    %377 = vmatprep.subr.bf16.mxu0 0
    %378 = vmatpush1.bf16.msra.mxu0 0
    %379 = vmatprep.subr.bf16.mxu0 0
    %380 = vmatpush1.bf16.msra.mxu0 0
    %381 = vmatprep.subr.bf16.mxu0 0
    %382 = vmatpush1.bf16.msra.mxu0 0
    %383 = vmatprep.subr.bf16.mxu0 0
    %384 = vmatpush1.bf16.msra.mxu0 0
    %385 = vmatprep.subr.bf16.mxu0 0
    %386 = vmatpush1.bf16.msra.mxu0 0
    %387 = vmatprep.subr.bf16.mxu0 0
    %388 = vmatpush1.bf16.msra.mxu0 0
    %389 = vmatprep.subr.bf16.mxu0 0
    %390 = vmatpush1.bf16.msra.mxu0 0
    %391 = vmatprep.subr.bf16.mxu0 0
    %392 = vmatpush1.bf16.msra.mxu0 0
    %393 = vmatprep.subr.bf16.mxu0 0
    %394 = vmatpush1.bf16.msra.mxu0 0
    %395 = vmatprep.subr.bf16.mxu0 0
    %396 = vmatpush1.bf16.msra.mxu0 0
    %397 = vmatprep.subr.bf16.mxu0 0
    %398 = vmatpush1.bf16.msra.mxu0 0
    %399 = vmatprep.subr.bf16.mxu0 0
    %400 = vmatpush1.bf16.msra.mxu0 0
    %401 = vmatprep.subr.bf16.mxu0 0
    %402 = vmatpush1.bf16.msra.mxu0 0
    %403 = vmatprep.subr.bf16.mxu0 0
    %404 = vmatpush1.bf16.msra.mxu0 0
    %405 = vmatprep.subr.bf16.mxu0 0
    %406 = vmatpush1.bf16.msra.mxu0 0
    %407 = vmatprep.mubr.bf16.mxu0 0
    %408 = vmatmul.mubr.bf16.gmra.mrb[0].mxu0 %v369
    %v409 = vpop.f32.mrb[0].mxu0
    %v410 = vadd.f32 0.0, %v409
    %v411 = vpop.f32.mrb[0].mxu0
    %v412 = vpop.f32.mrb[0].mxu0
    %v413 = vpop.f32.mrb[0].mxu0
    %414 = vdwg.mxu0
    %416 = vrot.lane.b32.xlu0 %v306, 120
    %v417 = vpop.permute.xlu0 %416
    %419 = vrot.lane.b32.xlu0 %v307, 120
    %v420 = vpop.permute.xlu0 %419
    %v422 = vsel %vm309, %v417, 0
    %v425 = vsel %vm309, %v420, 0
    %427 = vmatprep.subr.bf16.mxu0 0
    %428 = vmatpush1.bf16.xpose.msra.mxu0 %v425
    %429 = vmatprep.subr.bf16.mxu0 0
    %430 = vmatpush1.bf16.xpose.msra.mxu0 0
    %431 = vmatprep.subr.bf16.mxu0 0
    %432 = vmatpush1.bf16.xpose.msra.mxu0 0
    %433 = vmatprep.subr.bf16.mxu0 0
    %434 = vmatpush1.bf16.xpose.msra.mxu0 0
    %435 = vmatprep.subr.bf16.mxu0 0
    %436 = vmatpush1.bf16.xpose.msra.mxu0 0
    %437 = vmatprep.subr.bf16.mxu0 0
    %438 = vmatpush1.bf16.xpose.msra.mxu0 0
    %439 = vmatprep.subr.bf16.mxu0 0
    %440 = vmatpush1.bf16.xpose.msra.mxu0 0
    %441 = vmatprep.subr.bf16.mxu0 0
    %442 = vmatpush1.bf16.xpose.msra.mxu0 0
    %443 = vmatprep.subr.bf16.mxu0 0
    %444 = vmatpush1.bf16.xpose.msra.mxu0 0
    %445 = vmatprep.subr.bf16.mxu0 0
    %446 = vmatpush1.bf16.xpose.msra.mxu0 0
    %447 = vmatprep.subr.bf16.mxu0 0
    %448 = vmatpush1.bf16.xpose.msra.mxu0 0
    %449 = vmatprep.subr.bf16.mxu0 0
    %450 = vmatpush1.bf16.xpose.msra.mxu0 0
    %451 = vmatprep.subr.bf16.mxu0 0
    %452 = vmatpush1.bf16.xpose.msra.mxu0 0
    %453 = vmatprep.subr.bf16.mxu0 0
    %454 = vmatpush1.bf16.xpose.msra.mxu0 0
    %455 = vmatprep.subr.bf16.mxu0 0
    %456 = vmatpush1.bf16.xpose.msra.mxu0 0
    %457 = vmatprep.subr.bf16.mxu0 0
    %458 = vmatpush1.bf16.xpose.msra.mxu0 0
    %459 = vmatprep.mubr.bf16.mxu0 0
    %460 = vmatmul.mubr.bf16.gmra.mrb[0].mxu0 %v422
    %v461 = vpop.f32.mrb[0].mxu0
    %v462 = vadd.f32 0.0, %v461
    %v463 = vpop.f32.mrb[0].mxu0
    %v464 = vpop.f32.mrb[0].mxu0
    %v465 = vpop.f32.mrb[0].mxu0
    %466 = vdwg.mxu0
    %v467 = vsel %vm309, %v462, -inf
    %468 = vmax.xlane.f32.xlu0 %v467
    %v469 = vpop.xlane.xlu0 %468
    %v470 = vsub.f32 %v462, %v469
    %v471 = vmul.f32 %v470, 1.442695
    %v472 = vpow.pop %v471
    %v473 = vsel %vm309, %v472, 0.0
    %474 = vadd.xlane.f32.xlu0 %v473
    %v475 = vpop.xlane.xlu0 %474
    %v476 = vrcp.pop %v475
    %v477 = vmul.f32 %v472, %v476
    %v478 = vpack.c.bf16 %v477, %v477
    %480 = vrot.lane.b32.xlu0 %v308, 120
    %v481 = vpop.permute.xlu0 %480
    %v483 = vsel %vm309, %v478, 0
    %v486 = vsel %vm371, %v481, 0
    %488 = vmatprep.subr.bf16.mxu0 0
    %489 = vmatpush1.bf16.msra.mxu0 %v486
    %490 = vmatprep.subr.bf16.mxu0 0
    %491 = vmatpush1.bf16.msra.mxu0 0
    %492 = vmatprep.subr.bf16.mxu0 0
    %493 = vmatpush1.bf16.msra.mxu0 0
    %494 = vmatprep.subr.bf16.mxu0 0
    %495 = vmatpush1.bf16.msra.mxu0 0
    %496 = vmatprep.subr.bf16.mxu0 0
    %497 = vmatpush1.bf16.msra.mxu0 0
    %498 = vmatprep.subr.bf16.mxu0 0
    %499 = vmatpush1.bf16.msra.mxu0 0
    %500 = vmatprep.subr.bf16.mxu0 0
    %501 = vmatpush1.bf16.msra.mxu0 0
    %502 = vmatprep.subr.bf16.mxu0 0
    %503 = vmatpush1.bf16.msra.mxu0 0
    %504 = vmatprep.subr.bf16.mxu0 0
    %505 = vmatpush1.bf16.msra.mxu0 0
    %506 = vmatprep.subr.bf16.mxu0 0
    %507 = vmatpush1.bf16.msra.mxu0 0
    %508 = vmatprep.subr.bf16.mxu0 0
    %509 = vmatpush1.bf16.msra.mxu0 0
    %510 = vmatprep.subr.bf16.mxu0 0
    %511 = vmatpush1.bf16.msra.mxu0 0
    %512 = vmatprep.subr.bf16.mxu0 0
    %513 = vmatpush1.bf16.msra.mxu0 0
    %514 = vmatprep.subr.bf16.mxu0 0
    %515 = vmatpush1.bf16.msra.mxu0 0
    %516 = vmatprep.subr.bf16.mxu0 0
    %517 = vmatpush1.bf16.msra.mxu0 0
    %518 = vmatprep.subr.bf16.mxu0 0
    %519 = vmatpush1.bf16.msra.mxu0 0
    %520 = vmatprep.mubr.bf16.mxu0 0
    %521 = vmatmul.mubr.bf16.gmra.mrb[0].mxu0 %v483
    %v522 = vpop.f32.mrb[0].mxu0
    %v523 = vadd.f32 0.0, %v522
    %v524 = vpop.f32.mrb[0].mxu0
    %v525 = vpop.f32.mrb[0].mxu0
    %v526 = vpop.f32.mrb[0].mxu0
    %527 = vdwg.mxu0
    %528 = vrot.lane.b32.xlu0 %v306, 112
    %v529 = vpop.permute.xlu0 %528
    %530 = vrot.lane.b32.xlu0 %v307, 112
    %v531 = vpop.permute.xlu0 %530
    %v533 = vsel %vm309, %v529, 0
    %v536 = vsel %vm309, %v531, 0
    %538 = vmatprep.subr.bf16.mxu0 0
    %539 = vmatpush1.bf16.xpose.msra.mxu0 %v536
    %540 = vmatprep.subr.bf16.mxu0 0
    %541 = vmatpush1.bf16.xpose.msra.mxu0 0
    %542 = vmatprep.subr.bf16.mxu0 0
    %543 = vmatpush1.bf16.xpose.msra.mxu0 0
    %544 = vmatprep.subr.bf16.mxu0 0
    %545 = vmatpush1.bf16.xpose.msra.mxu0 0
    %546 = vmatprep.subr.bf16.mxu0 0
    %547 = vmatpush1.bf16.xpose.msra.mxu0 0
    %548 = vmatprep.subr.bf16.mxu0 0
    %549 = vmatpush1.bf16.xpose.msra.mxu0 0
    %550 = vmatprep.subr.bf16.mxu0 0
    %551 = vmatpush1.bf16.xpose.msra.mxu0 0
    %552 = vmatprep.subr.bf16.mxu0 0
    %553 = vmatpush1.bf16.xpose.msra.mxu0 0
    %554 = vmatprep.subr.bf16.mxu0 0
    %555 = vmatpush1.bf16.xpose.msra.mxu0 0
    %556 = vmatprep.subr.bf16.mxu0 0
    %557 = vmatpush1.bf16.xpose.msra.mxu0 0
    %558 = vmatprep.subr.bf16.mxu0 0
    %559 = vmatpush1.bf16.xpose.msra.mxu0 0
    %560 = vmatprep.subr.bf16.mxu0 0
    %561 = vmatpush1.bf16.xpose.msra.mxu0 0
    %562 = vmatprep.subr.bf16.mxu0 0
    %563 = vmatpush1.bf16.xpose.msra.mxu0 0
    %564 = vmatprep.subr.bf16.mxu0 0
    %565 = vmatpush1.bf16.xpose.msra.mxu0 0
    %566 = vmatprep.subr.bf16.mxu0 0
    %567 = vmatpush1.bf16.xpose.msra.mxu0 0
    %568 = vmatprep.subr.bf16.mxu0 0
    %569 = vmatpush1.bf16.xpose.msra.mxu0 0
    %570 = vmatprep.mubr.bf16.mxu0 0
    %571 = vmatmul.mubr.bf16.gmra.mrb[0].mxu0 %v533
    %v572 = vpop.f32.mrb[0].mxu0
    %v573 = vadd.f32 0.0, %v572
    %v574 = vpop.f32.mrb[0].mxu0
    %v575 = vpop.f32.mrb[0].mxu0
    %v576 = vpop.f32.mrb[0].mxu0
    %577 = vdwg.mxu0
    %v578 = vsel %vm309, %v573, -inf
    %579 = vmax.xlane.f32.xlu0 %v578
    %v580 = vpop.xlane.xlu0 %579
    %v581 = vsub.f32 %v573, %v580
    %v582 = vmul.f32 %v581, 1.442695
    %v583 = vpow.pop %v582
    %v584 = vsel %vm309, %v583, 0.0
    %585 = vadd.xlane.f32.xlu0 %v584
    %v586 = vpop.xlane.xlu0 %585
    %v587 = vrcp.pop %v586
    %v588 = vmul.f32 %v583, %v587
    %v589 = vpack.c.bf16 %v588, %v588
    %590 = vrot.lane.b32.xlu0 %v308, 112
    %v591 = vpop.permute.xlu0 %590
    %v593 = vsel %vm309, %v589, 0
    %v596 = vsel %vm371, %v591, 0
    %598 = vmatprep.subr.bf16.mxu0 0
    %599 = vmatpush1.bf16.msra.mxu0 %v596
    %600 = vmatprep.subr.bf16.mxu0 0
    %601 = vmatpush1.bf16.msra.mxu0 0
    %602 = vmatprep.subr.bf16.mxu0 0
    %603 = vmatpush1.bf16.msra.mxu0 0
    %604 = vmatprep.subr.bf16.mxu0 0
    %605 = vmatpush1.bf16.msra.mxu0 0
    %606 = vmatprep.subr.bf16.mxu0 0
    %607 = vmatpush1.bf16.msra.mxu0 0
    %608 = vmatprep.subr.bf16.mxu0 0
    %609 = vmatpush1.bf16.msra.mxu0 0
    %610 = vmatprep.subr.bf16.mxu0 0
    %611 = vmatpush1.bf16.msra.mxu0 0
    %612 = vmatprep.subr.bf16.mxu0 0
    %613 = vmatpush1.bf16.msra.mxu0 0
    %614 = vmatprep.subr.bf16.mxu0 0
    %615 = vmatpush1.bf16.msra.mxu0 0
    %616 = vmatprep.subr.bf16.mxu0 0
    %617 = vmatpush1.bf16.msra.mxu0 0
    %618 = vmatprep.subr.bf16.mxu0 0
    %619 = vmatpush1.bf16.msra.mxu0 0
    %620 = vmatprep.subr.bf16.mxu0 0
    %621 = vmatpush1.bf16.msra.mxu0 0
    %622 = vmatprep.subr.bf16.mxu0 0
    %623 = vmatpush1.bf16.msra.mxu0 0
    %624 = vmatprep.subr.bf16.mxu0 0
    %625 = vmatpush1.bf16.msra.mxu0 0
    %626 = vmatprep.subr.bf16.mxu0 0
    %627 = vmatpush1.bf16.msra.mxu0 0
    %628 = vmatprep.subr.bf16.mxu0 0
    %629 = vmatpush1.bf16.msra.mxu0 0
    %630 = vmatprep.mubr.bf16.mxu0 0
    %631 = vmatmul.mubr.bf16.gmra.mrb[0].mxu0 %v593
    %v632 = vpop.f32.mrb[0].mxu0
    %v633 = vadd.f32 0.0, %v632
    %v634 = vpop.f32.mrb[0].mxu0
    %v635 = vpop.f32.mrb[0].mxu0
    %v636 = vpop.f32.mrb[0].mxu0
    %637 = vdwg.mxu0
    %638 = vrot.lane.b32.xlu0 %v306, 104
    %v639 = vpop.permute.xlu0 %638
    %640 = vrot.lane.b32.xlu0 %v307, 104
    %v641 = vpop.permute.xlu0 %640
    %v643 = vsel %vm309, %v639, 0
    %v646 = vsel %vm309, %v641, 0
    %648 = vmatprep.subr.bf16.mxu0 0
    %649 = vmatpush1.bf16.xpose.msra.mxu0 %v646
    %650 = vmatprep.subr.bf16.mxu0 0
    %651 = vmatpush1.bf16.xpose.msra.mxu0 0
    %652 = vmatprep.subr.bf16.mxu0 0
    %653 = vmatpush1.bf16.xpose.msra.mxu0 0
    %654 = vmatprep.subr.bf16.mxu0 0
    %655 = vmatpush1.bf16.xpose.msra.mxu0 0
    %656 = vmatprep.subr.bf16.mxu0 0
    %657 = vmatpush1.bf16.xpose.msra.mxu0 0
    %658 = vmatprep.subr.bf16.mxu0 0
    %659 = vmatpush1.bf16.xpose.msra.mxu0 0
    %660 = vmatprep.subr.bf16.mxu0 0
    %661 = vmatpush1.bf16.xpose.msra.mxu0 0
    %662 = vmatprep.subr.bf16.mxu0 0
    %663 = vmatpush1.bf16.xpose.msra.mxu0 0
    %664 = vmatprep.subr.bf16.mxu0 0
    %665 = vmatpush1.bf16.xpose.msra.mxu0 0
    %666 = vmatprep.subr.bf16.mxu0 0
    %667 = vmatpush1.bf16.xpose.msra.mxu0 0
    %668 = vmatprep.subr.bf16.mxu0 0
    %669 = vmatpush1.bf16.xpose.msra.mxu0 0
    %670 = vmatprep.subr.bf16.mxu0 0
    %671 = vmatpush1.bf16.xpose.msra.mxu0 0
    %672 = vmatprep.subr.bf16.mxu0 0
    %673 = vmatpush1.bf16.xpose.msra.mxu0 0
    %674 = vmatprep.subr.bf16.mxu0 0
    %675 = vmatpush1.bf16.xpose.msra.mxu0 0
    %676 = vmatprep.subr.bf16.mxu0 0
    %677 = vmatpush1.bf16.xpose.msra.mxu0 0
    %678 = vmatprep.subr.bf16.mxu0 0
    %679 = vmatpush1.bf16.xpose.msra.mxu0 0
    %680 = vmatprep.mubr.bf16.mxu0 0
    %681 = vmatmul.mubr.bf16.gmra.mrb[0].mxu0 %v643
    %v682 = vpop.f32.mrb[0].mxu0
    %v683 = vadd.f32 0.0, %v682
    %v684 = vpop.f32.mrb[0].mxu0
    %v685 = vpop.f32.mrb[0].mxu0
    %v686 = vpop.f32.mrb[0].mxu0
    %687 = vdwg.mxu0
    %v688 = vsel %vm309, %v683, -inf
    %689 = vmax.xlane.f32.xlu0 %v688
    %v690 = vpop.xlane.xlu0 %689
    %v691 = vsub.f32 %v683, %v690
    %v692 = vmul.f32 %v691, 1.442695
    %v693 = vpow.pop %v692
    %v694 = vsel %vm309, %v693, 0.0
    %695 = vadd.xlane.f32.xlu0 %v694
    %v696 = vpop.xlane.xlu0 %695
    %v697 = vrcp.pop %v696
    %v698 = vmul.f32 %v693, %v697
    %v699 = vpack.c.bf16 %v698, %v698
    %700 = vrot.lane.b32.xlu0 %v308, 104
    %v701 = vpop.permute.xlu0 %700
    %v703 = vsel %vm309, %v699, 0
    %v706 = vsel %vm371, %v701, 0
    %708 = vmatprep.subr.bf16.mxu0 0
    %709 = vmatpush1.bf16.msra.mxu0 %v706
    %710 = vmatprep.subr.bf16.mxu0 0
    %711 = vmatpush1.bf16.msra.mxu0 0
    %712 = vmatprep.subr.bf16.mxu0 0
    %713 = vmatpush1.bf16.msra.mxu0 0
    %714 = vmatprep.subr.bf16.mxu0 0
    %715 = vmatpush1.bf16.msra.mxu0 0
    %716 = vmatprep.subr.bf16.mxu0 0
    %717 = vmatpush1.bf16.msra.mxu0 0
    %718 = vmatprep.subr.bf16.mxu0 0
    %719 = vmatpush1.bf16.msra.mxu0 0
    %720 = vmatprep.subr.bf16.mxu0 0
    %721 = vmatpush1.bf16.msra.mxu0 0
    %722 = vmatprep.subr.bf16.mxu0 0
    %723 = vmatpush1.bf16.msra.mxu0 0
    %724 = vmatprep.subr.bf16.mxu0 0
    %725 = vmatpush1.bf16.msra.mxu0 0
    %726 = vmatprep.subr.bf16.mxu0 0
    %727 = vmatpush1.bf16.msra.mxu0 0
    %728 = vmatprep.subr.bf16.mxu0 0
    %729 = vmatpush1.bf16.msra.mxu0 0
    %730 = vmatprep.subr.bf16.mxu0 0
    %731 = vmatpush1.bf16.msra.mxu0 0
    %732 = vmatprep.subr.bf16.mxu0 0
    %733 = vmatpush1.bf16.msra.mxu0 0
    %734 = vmatprep.subr.bf16.mxu0 0
    %735 = vmatpush1.bf16.msra.mxu0 0
    %736 = vmatprep.subr.bf16.mxu0 0
    %737 = vmatpush1.bf16.msra.mxu0 0
    %738 = vmatprep.subr.bf16.mxu0 0
    %739 = vmatpush1.bf16.msra.mxu0 0
    %740 = vmatprep.mubr.bf16.mxu0 0
    %741 = vmatmul.mubr.bf16.gmra.mrb[0].mxu0 %v703
    %v742 = vpop.f32.mrb[0].mxu0
    %v743 = vadd.f32 0.0, %v742
    %v744 = vpop.f32.mrb[0].mxu0
    %v745 = vpop.f32.mrb[0].mxu0
    %v746 = vpop.f32.mrb[0].mxu0
    %747 = vdwg.mxu0
    %749 = vrot.lane.b32.xlu0 %v523, 8
    %v750 = vpop.permute.xlu0 %749
    %753 = vrot.lane.b32.xlu0 %v633, 16
    %v754 = vpop.permute.xlu0 %753
    %757 = vrot.lane.b32.xlu0 %v743, 24
    %v758 = vpop.permute.xlu0 %757
    %v760 = vsel %vm309, %v410, %v750
    %vm761 = vcmask 130048
    %v762 = vsel %vm761, %v760, %v754
    %vm763 = vcmask 195584
    %v764 = vsel %vm763, %v762, %v758
    %v765 = vpack.c.bf16 %v291, %v291
    %v766 = vpack.c.bf16 %v299, %v299
    %v767 = vpack.c.bf16 %v305, %v305
    %v769 = vsel %vm309, %v765, 0
    %v772 = vsel %vm309, %v766, 0
    %774 = vmatprep.subr.bf16.mxu0 0
    %775 = vmatpush1.bf16.xpose.msra.mxu0 %v772
    %776 = vmatprep.subr.bf16.mxu0 0
    %777 = vmatpush1.bf16.xpose.msra.mxu0 0
    %778 = vmatprep.subr.bf16.mxu0 0
    %779 = vmatpush1.bf16.xpose.msra.mxu0 0
    %780 = vmatprep.subr.bf16.mxu0 0
    %781 = vmatpush1.bf16.xpose.msra.mxu0 0
    %782 = vmatprep.subr.bf16.mxu0 0
    %783 = vmatpush1.bf16.xpose.msra.mxu0 0
    %784 = vmatprep.subr.bf16.mxu0 0
    %785 = vmatpush1.bf16.xpose.msra.mxu0 0
    %786 = vmatprep.subr.bf16.mxu0 0
    %787 = vmatpush1.bf16.xpose.msra.mxu0 0
    %788 = vmatprep.subr.bf16.mxu0 0
    %789 = vmatpush1.bf16.xpose.msra.mxu0 0
    %790 = vmatprep.subr.bf16.mxu0 0
    %791 = vmatpush1.bf16.xpose.msra.mxu0 0
    %792 = vmatprep.subr.bf16.mxu0 0
    %793 = vmatpush1.bf16.xpose.msra.mxu0 0
    %794 = vmatprep.subr.bf16.mxu0 0
    %795 = vmatpush1.bf16.xpose.msra.mxu0 0
    %796 = vmatprep.subr.bf16.mxu0 0
    %797 = vmatpush1.bf16.xpose.msra.mxu0 0
    %798 = vmatprep.subr.bf16.mxu0 0
    %799 = vmatpush1.bf16.xpose.msra.mxu0 0
    %800 = vmatprep.subr.bf16.mxu0 0
    %801 = vmatpush1.bf16.xpose.msra.mxu0 0
    %802 = vmatprep.subr.bf16.mxu0 0
    %803 = vmatpush1.bf16.xpose.msra.mxu0 0
    %804 = vmatprep.subr.bf16.mxu0 0
    %805 = vmatpush1.bf16.xpose.msra.mxu0 0
    %806 = vmatprep.mubr.bf16.mxu0 0
    %807 = vmatmul.mubr.bf16.gmra.mrb[0].mxu0 %v769
    %v808 = vpop.f32.mrb[0].mxu0
    %v809 = vadd.f32 0.0, %v808
    %v810 = vpop.f32.mrb[0].mxu0
    %v811 = vpop.f32.mrb[0].mxu0
    %v812 = vpop.f32.mrb[0].mxu0
    %813 = vdwg.mxu0
    %v814 = vsel %vm309, %v809, -inf
    %815 = vmax.xlane.f32.xlu0 %v814
    %v816 = vpop.xlane.xlu0 %815
    %v817 = vsub.f32 %v809, %v816
    %v818 = vmul.f32 %v817, 1.442695
    %v819 = vpow.pop %v818
    %v820 = vsel %vm309, %v819, 0.0
    %821 = vadd.xlane.f32.xlu0 %v820
    %v822 = vpop.xlane.xlu0 %821
    %v823 = vrcp.pop %v822
    %v824 = vmul.f32 %v819, %v823
    %v825 = vpack.c.bf16 %v824, %v824
    %v827 = vsel %vm309, %v825, 0
    %v830 = vsel %vm371, %v767, 0
    %832 = vmatprep.subr.bf16.mxu0 0
    %833 = vmatpush1.bf16.msra.mxu0 %v830
    %834 = vmatprep.subr.bf16.mxu0 0
    %835 = vmatpush1.bf16.msra.mxu0 0
    %836 = vmatprep.subr.bf16.mxu0 0
    %837 = vmatpush1.bf16.msra.mxu0 0
    %838 = vmatprep.subr.bf16.mxu0 0
    %839 = vmatpush1.bf16.msra.mxu0 0
    %840 = vmatprep.subr.bf16.mxu0 0
    %841 = vmatpush1.bf16.msra.mxu0 0
    %842 = vmatprep.subr.bf16.mxu0 0
    %843 = vmatpush1.bf16.msra.mxu0 0
    %844 = vmatprep.subr.bf16.mxu0 0
    %845 = vmatpush1.bf16.msra.mxu0 0
    %846 = vmatprep.subr.bf16.mxu0 0
    %847 = vmatpush1.bf16.msra.mxu0 0
    %848 = vmatprep.subr.bf16.mxu0 0
    %849 = vmatpush1.bf16.msra.mxu0 0
    %850 = vmatprep.subr.bf16.mxu0 0
    %851 = vmatpush1.bf16.msra.mxu0 0
    %852 = vmatprep.subr.bf16.mxu0 0
    %853 = vmatpush1.bf16.msra.mxu0 0
    %854 = vmatprep.subr.bf16.mxu0 0
    %855 = vmatpush1.bf16.msra.mxu0 0
    %856 = vmatprep.subr.bf16.mxu0 0
    %857 = vmatpush1.bf16.msra.mxu0 0
    %858 = vmatprep.subr.bf16.mxu0 0
    %859 = vmatpush1.bf16.msra.mxu0 0
    %860 = vmatprep.subr.bf16.mxu0 0
    %861 = vmatpush1.bf16.msra.mxu0 0
    %862 = vmatprep.subr.bf16.mxu0 0
    %863 = vmatpush1.bf16.msra.mxu0 0
    %864 = vmatprep.mubr.bf16.mxu0 0
    %865 = vmatmul.mubr.bf16.gmra.mrb[0].mxu0 %v827
    %v866 = vpop.f32.mrb[0].mxu0
    %v867 = vadd.f32 0.0, %v866
    %v868 = vpop.f32.mrb[0].mxu0
    %v869 = vpop.f32.mrb[0].mxu0
    %v870 = vpop.f32.mrb[0].mxu0
    %871 = vdwg.mxu0
    %873 = vrot.lane.b32.xlu0 %v765, 120
    %v874 = vpop.permute.xlu0 %873
    %876 = vrot.lane.b32.xlu0 %v766, 120
    %v877 = vpop.permute.xlu0 %876
    %v879 = vsel %vm309, %v874, 0
    %v882 = vsel %vm309, %v877, 0
    %884 = vmatprep.subr.bf16.mxu0 0
    %885 = vmatpush1.bf16.xpose.msra.mxu0 %v882
    %886 = vmatprep.subr.bf16.mxu0 0
    %887 = vmatpush1.bf16.xpose.msra.mxu0 0
    %888 = vmatprep.subr.bf16.mxu0 0
    %889 = vmatpush1.bf16.xpose.msra.mxu0 0
    %890 = vmatprep.subr.bf16.mxu0 0
    %891 = vmatpush1.bf16.xpose.msra.mxu0 0
    %892 = vmatprep.subr.bf16.mxu0 0
    %893 = vmatpush1.bf16.xpose.msra.mxu0 0
    %894 = vmatprep.subr.bf16.mxu0 0
    %895 = vmatpush1.bf16.xpose.msra.mxu0 0
    %896 = vmatprep.subr.bf16.mxu0 0
    %897 = vmatpush1.bf16.xpose.msra.mxu0 0
    %898 = vmatprep.subr.bf16.mxu0 0
    %899 = vmatpush1.bf16.xpose.msra.mxu0 0
    %900 = vmatprep.subr.bf16.mxu0 0
    %901 = vmatpush1.bf16.xpose.msra.mxu0 0
    %902 = vmatprep.subr.bf16.mxu0 0
    %903 = vmatpush1.bf16.xpose.msra.mxu0 0
    %904 = vmatprep.subr.bf16.mxu0 0
    %905 = vmatpush1.bf16.xpose.msra.mxu0 0
    %906 = vmatprep.subr.bf16.mxu0 0
    %907 = vmatpush1.bf16.xpose.msra.mxu0 0
    %908 = vmatprep.subr.bf16.mxu0 0
    %909 = vmatpush1.bf16.xpose.msra.mxu0 0
    %910 = vmatprep.subr.bf16.mxu0 0
    %911 = vmatpush1.bf16.xpose.msra.mxu0 0
    %912 = vmatprep.subr.bf16.mxu0 0
    %913 = vmatpush1.bf16.xpose.msra.mxu0 0
    %914 = vmatprep.subr.bf16.mxu0 0
    %915 = vmatpush1.bf16.xpose.msra.mxu0 0
    %916 = vmatprep.mubr.bf16.mxu0 0
    %917 = vmatmul.mubr.bf16.gmra.mrb[0].mxu0 %v879
    %v918 = vpop.f32.mrb[0].mxu0
    %v919 = vadd.f32 0.0, %v918
    %v920 = vpop.f32.mrb[0].mxu0
    %v921 = vpop.f32.mrb[0].mxu0
    %v922 = vpop.f32.mrb[0].mxu0
    %923 = vdwg.mxu0
    %v924 = vsel %vm309, %v919, -inf
    %925 = vmax.xlane.f32.xlu0 %v924
    %v926 = vpop.xlane.xlu0 %925
    %v927 = vsub.f32 %v919, %v926
    %v928 = vmul.f32 %v927, 1.442695
    %v929 = vpow.pop %v928
    %v930 = vsel %vm309, %v929, 0.0
    %931 = vadd.xlane.f32.xlu0 %v930
    %v932 = vpop.xlane.xlu0 %931
    %v933 = vrcp.pop %v932
    %v934 = vmul.f32 %v929, %v933
    %v935 = vpack.c.bf16 %v934, %v934
    %937 = vrot.lane.b32.xlu0 %v767, 120
    %v938 = vpop.permute.xlu0 %937
    %v940 = vsel %vm309, %v935, 0
    %v943 = vsel %vm371, %v938, 0
    %945 = vmatprep.subr.bf16.mxu0 0
    %946 = vmatpush1.bf16.msra.mxu0 %v943
    %947 = vmatprep.subr.bf16.mxu0 0
    %948 = vmatpush1.bf16.msra.mxu0 0
    %949 = vmatprep.subr.bf16.mxu0 0
    %950 = vmatpush1.bf16.msra.mxu0 0
    %951 = vmatprep.subr.bf16.mxu0 0
    %952 = vmatpush1.bf16.msra.mxu0 0
    %953 = vmatprep.subr.bf16.mxu0 0
    %954 = vmatpush1.bf16.msra.mxu0 0
    %955 = vmatprep.subr.bf16.mxu0 0
    %956 = vmatpush1.bf16.msra.mxu0 0
    %957 = vmatprep.subr.bf16.mxu0 0
    %958 = vmatpush1.bf16.msra.mxu0 0
    %959 = vmatprep.subr.bf16.mxu0 0
    %960 = vmatpush1.bf16.msra.mxu0 0
    %961 = vmatprep.subr.bf16.mxu0 0
    %962 = vmatpush1.bf16.msra.mxu0 0
    %963 = vmatprep.subr.bf16.mxu0 0
    %964 = vmatpush1.bf16.msra.mxu0 0
    %965 = vmatprep.subr.bf16.mxu0 0
    %966 = vmatpush1.bf16.msra.mxu0 0
    %967 = vmatprep.subr.bf16.mxu0 0
    %968 = vmatpush1.bf16.msra.mxu0 0
    %969 = vmatprep.subr.bf16.mxu0 0
    %970 = vmatpush1.bf16.msra.mxu0 0
    %971 = vmatprep.subr.bf16.mxu0 0
    %972 = vmatpush1.bf16.msra.mxu0 0
    %973 = vmatprep.subr.bf16.mxu0 0
    %974 = vmatpush1.bf16.msra.mxu0 0
    %975 = vmatprep.subr.bf16.mxu0 0
    %976 = vmatpush1.bf16.msra.mxu0 0
    %977 = vmatprep.mubr.bf16.mxu0 0
    %978 = vmatmul.mubr.bf16.gmra.mrb[0].mxu0 %v940
    %v979 = vpop.f32.mrb[0].mxu0
    %v980 = vadd.f32 0.0, %v979
    %v981 = vpop.f32.mrb[0].mxu0
    %v982 = vpop.f32.mrb[0].mxu0
    %v983 = vpop.f32.mrb[0].mxu0
    %984 = vdwg.mxu0
    %985 = vrot.lane.b32.xlu0 %v765, 112
    %v986 = vpop.permute.xlu0 %985
    %987 = vrot.lane.b32.xlu0 %v766, 112
    %v988 = vpop.permute.xlu0 %987
    %v990 = vsel %vm309, %v986, 0
    %v993 = vsel %vm309, %v988, 0
    %995 = vmatprep.subr.bf16.mxu0 0
    %996 = vmatpush1.bf16.xpose.msra.mxu0 %v993
    %997 = vmatprep.subr.bf16.mxu0 0
    %998 = vmatpush1.bf16.xpose.msra.mxu0 0
    %999 = vmatprep.subr.bf16.mxu0 0
    %1000 = vmatpush1.bf16.xpose.msra.mxu0 0
    %1001 = vmatprep.subr.bf16.mxu0 0
    %1002 = vmatpush1.bf16.xpose.msra.mxu0 0
    %1003 = vmatprep.subr.bf16.mxu0 0
    %1004 = vmatpush1.bf16.xpose.msra.mxu0 0
    %1005 = vmatprep.subr.bf16.mxu0 0
    %1006 = vmatpush1.bf16.xpose.msra.mxu0 0
    %1007 = vmatprep.subr.bf16.mxu0 0
    %1008 = vmatpush1.bf16.xpose.msra.mxu0 0
    %1009 = vmatprep.subr.bf16.mxu0 0
    %1010 = vmatpush1.bf16.xpose.msra.mxu0 0
    %1011 = vmatprep.subr.bf16.mxu0 0
    %1012 = vmatpush1.bf16.xpose.msra.mxu0 0
    %1013 = vmatprep.subr.bf16.mxu0 0
    %1014 = vmatpush1.bf16.xpose.msra.mxu0 0
    %1015 = vmatprep.subr.bf16.mxu0 0
    %1016 = vmatpush1.bf16.xpose.msra.mxu0 0
    %1017 = vmatprep.subr.bf16.mxu0 0
    %1018 = vmatpush1.bf16.xpose.msra.mxu0 0
    %1019 = vmatprep.subr.bf16.mxu0 0
    %1020 = vmatpush1.bf16.xpose.msra.mxu0 0
    %1021 = vmatprep.subr.bf16.mxu0 0
    %1022 = vmatpush1.bf16.xpose.msra.mxu0 0
    %1023 = vmatprep.subr.bf16.mxu0 0
    %1024 = vmatpush1.bf16.xpose.msra.mxu0 0
    %1025 = vmatprep.subr.bf16.mxu0 0
    %1026 = vmatpush1.bf16.xpose.msra.mxu0 0
    %1027 = vmatprep.mubr.bf16.mxu0 0
    %1028 = vmatmul.mubr.bf16.gmra.mrb[0].mxu0 %v990
    %v1029 = vpop.f32.mrb[0].mxu0
    %v1030 = vadd.f32 0.0, %v1029
    %v1031 = vpop.f32.mrb[0].mxu0
    %v1032 = vpop.f32.mrb[0].mxu0
    %v1033 = vpop.f32.mrb[0].mxu0
    %1034 = vdwg.mxu0
    %v1035 = vsel %vm309, %v1030, -inf
    %1036 = vmax.xlane.f32.xlu0 %v1035
    %v1037 = vpop.xlane.xlu0 %1036
    %v1038 = vsub.f32 %v1030, %v1037
    %v1039 = vmul.f32 %v1038, 1.442695
    %v1040 = vpow.pop %v1039
    %v1041 = vsel %vm309, %v1040, 0.0
    %1042 = vadd.xlane.f32.xlu0 %v1041
    %v1043 = vpop.xlane.xlu0 %1042
    %v1044 = vrcp.pop %v1043
    %v1045 = vmul.f32 %v1040, %v1044
    %v1046 = vpack.c.bf16 %v1045, %v1045
    %1047 = vrot.lane.b32.xlu0 %v767, 112
    %v1048 = vpop.permute.xlu0 %1047
    %v1050 = vsel %vm309, %v1046, 0
    %v1053 = vsel %vm371, %v1048, 0
    %1055 = vmatprep.subr.bf16.mxu0 0
    %1056 = vmatpush1.bf16.msra.mxu0 %v1053
    %1057 = vmatprep.subr.bf16.mxu0 0
    %1058 = vmatpush1.bf16.msra.mxu0 0
    %1059 = vmatprep.subr.bf16.mxu0 0
    %1060 = vmatpush1.bf16.msra.mxu0 0
    %1061 = vmatprep.subr.bf16.mxu0 0
    %1062 = vmatpush1.bf16.msra.mxu0 0
    %1063 = vmatprep.subr.bf16.mxu0 0
    %1064 = vmatpush1.bf16.msra.mxu0 0
    %1065 = vmatprep.subr.bf16.mxu0 0
    %1066 = vmatpush1.bf16.msra.mxu0 0
    %1067 = vmatprep.subr.bf16.mxu0 0
    %1068 = vmatpush1.bf16.msra.mxu0 0
    %1069 = vmatprep.subr.bf16.mxu0 0
    %1070 = vmatpush1.bf16.msra.mxu0 0
    %1071 = vmatprep.subr.bf16.mxu0 0
    %1072 = vmatpush1.bf16.msra.mxu0 0
    %1073 = vmatprep.subr.bf16.mxu0 0
    %1074 = vmatpush1.bf16.msra.mxu0 0
    %1075 = vmatprep.subr.bf16.mxu0 0
    %1076 = vmatpush1.bf16.msra.mxu0 0
    %1077 = vmatprep.subr.bf16.mxu0 0
    %1078 = vmatpush1.bf16.msra.mxu0 0
    %1079 = vmatprep.subr.bf16.mxu0 0
    %1080 = vmatpush1.bf16.msra.mxu0 0
    %1081 = vmatprep.subr.bf16.mxu0 0
    %1082 = vmatpush1.bf16.msra.mxu0 0
    %1083 = vmatprep.subr.bf16.mxu0 0
    %1084 = vmatpush1.bf16.msra.mxu0 0
    %1085 = vmatprep.subr.bf16.mxu0 0
    %1086 = vmatpush1.bf16.msra.mxu0 0
    %1087 = vmatprep.mubr.bf16.mxu0 0
    %1088 = vmatmul.mubr.bf16.gmra.mrb[0].mxu0 %v1050
    %v1089 = vpop.f32.mrb[0].mxu0
    %v1090 = vadd.f32 0.0, %v1089
    %v1091 = vpop.f32.mrb[0].mxu0
    %v1092 = vpop.f32.mrb[0].mxu0
    %v1093 = vpop.f32.mrb[0].mxu0
    %1094 = vdwg.mxu0
    %1095 = vrot.lane.b32.xlu0 %v765, 104
    %v1096 = vpop.permute.xlu0 %1095
    %1097 = vrot.lane.b32.xlu0 %v766, 104
    %v1098 = vpop.permute.xlu0 %1097
    %v1100 = vsel %vm309, %v1096, 0
    %v1103 = vsel %vm309, %v1098, 0
    %1105 = vmatprep.subr.bf16.mxu0 0
    %1106 = vmatpush1.bf16.xpose.msra.mxu0 %v1103
    %1107 = vmatprep.subr.bf16.mxu0 0
    %1108 = vmatpush1.bf16.xpose.msra.mxu0 0
    %1109 = vmatprep.subr.bf16.mxu0 0
    %1110 = vmatpush1.bf16.xpose.msra.mxu0 0
    %1111 = vmatprep.subr.bf16.mxu0 0
    %1112 = vmatpush1.bf16.xpose.msra.mxu0 0
    %1113 = vmatprep.subr.bf16.mxu0 0
    %1114 = vmatpush1.bf16.xpose.msra.mxu0 0
    %1115 = vmatprep.subr.bf16.mxu0 0
    %1116 = vmatpush1.bf16.xpose.msra.mxu0 0
    %1117 = vmatprep.subr.bf16.mxu0 0
    %1118 = vmatpush1.bf16.xpose.msra.mxu0 0
    %1119 = vmatprep.subr.bf16.mxu0 0
    %1120 = vmatpush1.bf16.xpose.msra.mxu0 0
    %1121 = vmatprep.subr.bf16.mxu0 0
    %1122 = vmatpush1.bf16.xpose.msra.mxu0 0
    %1123 = vmatprep.subr.bf16.mxu0 0
    %1124 = vmatpush1.bf16.xpose.msra.mxu0 0
    %1125 = vmatprep.subr.bf16.mxu0 0
    %1126 = vmatpush1.bf16.xpose.msra.mxu0 0
    %1127 = vmatprep.subr.bf16.mxu0 0
    %1128 = vmatpush1.bf16.xpose.msra.mxu0 0
    %1129 = vmatprep.subr.bf16.mxu0 0
    %1130 = vmatpush1.bf16.xpose.msra.mxu0 0
    %1131 = vmatprep.subr.bf16.mxu0 0
    %1132 = vmatpush1.bf16.xpose.msra.mxu0 0
    %1133 = vmatprep.subr.bf16.mxu0 0
    %1134 = vmatpush1.bf16.xpose.msra.mxu0 0
    %1135 = vmatprep.subr.bf16.mxu0 0
    %1136 = vmatpush1.bf16.xpose.msra.mxu0 0
    %1137 = vmatprep.mubr.bf16.mxu0 0
    %1138 = vmatmul.mubr.bf16.gmra.mrb[0].mxu0 %v1100
    %v1139 = vpop.f32.mrb[0].mxu0
    %v1140 = vadd.f32 0.0, %v1139
    %v1141 = vpop.f32.mrb[0].mxu0
    %v1142 = vpop.f32.mrb[0].mxu0
    %v1143 = vpop.f32.mrb[0].mxu0
    %1144 = vdwg.mxu0
    %v1145 = vsel %vm309, %v1140, -inf
    %1146 = vmax.xlane.f32.xlu0 %v1145
    %v1147 = vpop.xlane.xlu0 %1146
    %v1148 = vsub.f32 %v1140, %v1147
    %v1149 = vmul.f32 %v1148, 1.442695
    %v1150 = vpow.pop %v1149
    %v1151 = vsel %vm309, %v1150, 0.0
    %1152 = vadd.xlane.f32.xlu0 %v1151
    %v1153 = vpop.xlane.xlu0 %1152
    %v1154 = vrcp.pop %v1153
    %v1155 = vmul.f32 %v1150, %v1154
    %v1156 = vpack.c.bf16 %v1155, %v1155
    %1157 = vrot.lane.b32.xlu0 %v767, 104
    %v1158 = vpop.permute.xlu0 %1157
    %v1160 = vsel %vm309, %v1156, 0
    %v1163 = vsel %vm371, %v1158, 0
    %1165 = vmatprep.subr.bf16.mxu0 0
    %1166 = vmatpush1.bf16.msra.mxu0 %v1163
    %1167 = vmatprep.subr.bf16.mxu0 0
    %1168 = vmatpush1.bf16.msra.mxu0 0
    %1169 = vmatprep.subr.bf16.mxu0 0
    %1170 = vmatpush1.bf16.msra.mxu0 0
    %1171 = vmatprep.subr.bf16.mxu0 0
    %1172 = vmatpush1.bf16.msra.mxu0 0
    %1173 = vmatprep.subr.bf16.mxu0 0
    %1174 = vmatpush1.bf16.msra.mxu0 0
    %1175 = vmatprep.subr.bf16.mxu0 0
    %1176 = vmatpush1.bf16.msra.mxu0 0
    %1177 = vmatprep.subr.bf16.mxu0 0
    %1178 = vmatpush1.bf16.msra.mxu0 0
    %1179 = vmatprep.subr.bf16.mxu0 0
    %1180 = vmatpush1.bf16.msra.mxu0 0
    %1181 = vmatprep.subr.bf16.mxu0 0
    %1182 = vmatpush1.bf16.msra.mxu0 0
    %1183 = vmatprep.subr.bf16.mxu0 0
    %1184 = vmatpush1.bf16.msra.mxu0 0
    %1185 = vmatprep.subr.bf16.mxu0 0
    %1186 = vmatpush1.bf16.msra.mxu0 0
    %1187 = vmatprep.subr.bf16.mxu0 0
    %1188 = vmatpush1.bf16.msra.mxu0 0
    %1189 = vmatprep.subr.bf16.mxu0 0
    %1190 = vmatpush1.bf16.msra.mxu0 0
    %1191 = vmatprep.subr.bf16.mxu0 0
    %1192 = vmatpush1.bf16.msra.mxu0 0
    %1193 = vmatprep.subr.bf16.mxu0 0
    %1194 = vmatpush1.bf16.msra.mxu0 0
    %1195 = vmatprep.subr.bf16.mxu0 0
    %1196 = vmatpush1.bf16.msra.mxu0 0
    %1197 = vmatprep.mubr.bf16.mxu0 0
    %1198 = vmatmul.mubr.bf16.gmra.mrb[0].mxu0 %v1160
    %v1199 = vpop.f32.mrb[0].mxu0
    %v1200 = vadd.f32 0.0, %v1199
    %v1201 = vpop.f32.mrb[0].mxu0
    %v1202 = vpop.f32.mrb[0].mxu0
    %v1203 = vpop.f32.mrb[0].mxu0
    %1204 = vdwg.mxu0
    %1206 = vrot.lane.b32.xlu0 %v980, 8
    %v1207 = vpop.permute.xlu0 %1206
    %1210 = vrot.lane.b32.xlu0 %v1090, 16
    %v1211 = vpop.permute.xlu0 %1210
    %1214 = vrot.lane.b32.xlu0 %v1200, 24
    %v1215 = vpop.permute.xlu0 %1214
    %v1217 = vsel %vm309, %v867, %v1207
    %v1218 = vsel %vm761, %v1217, %v1211
    %v1219 = vsel %vm763, %v1218, %v1215
    %v1220 = vpack.c.bf16 %v1219, %v764
    %v1221 = vld [vmem:[%s4] sm:$0xf]
    %v1222 = vld [vmem:[%s4 + $0x4] sm:$0xf]
    %v1223 = vld [vmem:[%s4 + $0x8] sm:$0xf]
    %v1224 = vld [vmem:[%s4 + $0xc] sm:$0xf]
    %v1225 = vlaneseq
    %v1226 = vshrl.u32 %v1225, 7
    %v1227 = vsub.s32 3, %v1226
    %v1228 = vrot.slane %v98, %v1227
    %v1233 = vunpack.c.l.b16 %v1221
    %v1234 = vunpack.c.l.b16 %v1222
    %v1235 = vunpack.c.l.b16 %v1223
    %v1236 = vunpack.c.l.b16 %v1224
    %v1237 = vpack.c.b16 %v1234, %v1233
    %v1238 = vpack.c.b16 %v1236, %v1235
    %v1242 = vsel %vm121, %v1220, 0
    %1244 = vmatprep.subr.bf16.mxu0 0
    %1245 = vmatpush1.bf16.msra.mxu0 %v1237
    %1246 = vmatprep.subr.bf16.mxu0 0
    %1247 = vmatpush1.bf16.msra.mxu0 %v1238
    %1248 = vmatprep.subr.bf16.mxu0 0
    %1249 = vmatpush1.bf16.msra.mxu0 0
    %1250 = vmatprep.subr.bf16.mxu0 0
    %1251 = vmatpush1.bf16.msra.mxu0 0
    %1252 = vmatprep.subr.bf16.mxu0 0
    %1253 = vmatpush1.bf16.msra.mxu0 0
    %1254 = vmatprep.subr.bf16.mxu0 0
    %1255 = vmatpush1.bf16.msra.mxu0 0
    %1256 = vmatprep.subr.bf16.mxu0 0
    %1257 = vmatpush1.bf16.msra.mxu0 0
    %1258 = vmatprep.subr.bf16.mxu0 0
    %1259 = vmatpush1.bf16.msra.mxu0 0
    %1260 = vmatprep.subr.bf16.mxu0 0
    %1261 = vmatpush1.bf16.msra.mxu0 0
    %1262 = vmatprep.subr.bf16.mxu0 0
    %1263 = vmatpush1.bf16.msra.mxu0 0
    %1264 = vmatprep.subr.bf16.mxu0 0
    %1265 = vmatpush1.bf16.msra.mxu0 0
    %1266 = vmatprep.subr.bf16.mxu0 0
    %1267 = vmatpush1.bf16.msra.mxu0 0
    %1268 = vmatprep.subr.bf16.mxu0 0
    %1269 = vmatpush1.bf16.msra.mxu0 0
    %1270 = vmatprep.subr.bf16.mxu0 0
    %1271 = vmatpush1.bf16.msra.mxu0 0
    %1272 = vmatprep.subr.bf16.mxu0 0
    %1273 = vmatpush1.bf16.msra.mxu0 0
    %1274 = vmatprep.subr.bf16.mxu0 0
    %1275 = vmatpush1.bf16.msra.mxu0 0
    %1276 = vmatprep.mubr.bf16.mxu0 0
    %1277 = vmatmul.mubr.bf16.gmra.mrb[0].mxu0 %v1242
    %v1278 = vpop.f32.mrb[0].mxu0
    %v1279 = vadd.f32 %v1228, %v1278
    %v1280 = vpop.f32.mrb[0].mxu0
    %v1281 = vpop.f32.mrb[0].mxu0
    %v1282 = vadd.f32 %v1228, %v1281
    %v1283 = vpop.f32.mrb[0].mxu0
    %1284 = vdwg.mxu0
    %v1285 = vadd.f32 %v89, %v1279
    %v1286 = vadd.f32 %v91, %v1282
    %v1287 = vsel %vm121, %v1285, 0.0
    %1288 = vadd.xlane.f32.xlu0 %v1287
    %v1289 = vpop.xlane.xlu0 %1288
    %v1290 = vsel %vm121, %v1286, 0.0
    %1291 = vadd.xlane.f32.xlu0 %v1290
    %v1292 = vpop.xlane.xlu0 %1291
    %v1293 = vrcp.pop 32.0
    %v1294 = vmul.f32 %v1289, %v1293
    %v1295 = vmul.f32 %v1292, %v1293
    %v1296 = vsub.f32 %v1285, %v1294
    %v1297 = vsub.f32 %v1286, %v1295
    %v1298 = vmul.f32 %v1296, %v1296
    %v1299 = vmul.f32 %v1297, %v1297
    %v1300 = vsel %vm121, %v1298, 0.0
    %1301 = vadd.xlane.f32.xlu0 %v1300
    %v1302 = vpop.xlane.xlu0 %1301
    %v1303 = vsel %vm121, %v1299, 0.0
    %1304 = vadd.xlane.f32.xlu0 %v1303
    %v1305 = vpop.xlane.xlu0 %1304
    %v1306 = vmul.f32 %v1302, %v1293
    %v1307 = vmul.f32 %v1305, %v1293
    %v1308 = vadd.f32 %v1306, 1e-05
    %v1309 = vadd.f32 %v1307, 1e-05
    %v1310 = vrsqrt.pop %v1308
    %v1311 = vrsqrt.pop %v1309
    %v1312 = vmul.f32 %v1296, %v1310
    %v1313 = vmul.f32 %v1297, %v1311
    %v1314 = vlaneseq
    %v1315 = vshrl.u32 %v1314, 7
    %v1316 = vsub.s32 6, %v1315
    %v1317 = vrot.slane %v98, %v1316
    %v1318 = vmul.f32 %v1312, %v1317
    %v1319 = vmul.f32 %v1313, %v1317
    %v1320 = vlaneseq
    %v1321 = vshrl.u32 %v1320, 7
    %v1322 = vsub.s32 7, %v1321
    %v1323 = vrot.slane %v98, %v1322
    %v1324 = vadd.f32 %v1318, %v1323
    %v1325 = vadd.f32 %v1319, %v1323
    %v1326 = vpack.c.bf16 %v1325, %v1324
    %v1327 = vld [vmem:[#allocation8] sm:$0xf]
    %v1328 = vld [vmem:[#allocation8 + $0x4] sm:$0xf]
    %v1329 = vld [vmem:[#allocation8 + $0x8] sm:$0xf]
    %v1330 = vld [vmem:[#allocation8 + $0xc] sm:$0xf]
    %v1331 = vlaneseq
    %v1332 = vshrl.u32 %v1331, 7
    %v1333 = vsub.s32 4, %v1332
    %v1334 = vrot.slane %v98, %v1333
    %v1339 = vunpack.c.l.b16 %v1327
    %v1340 = vunpack.c.l.b16 %v1328
    %v1341 = vunpack.c.l.b16 %v1329
    %v1342 = vunpack.c.l.b16 %v1330
    %v1343 = vpack.c.b16 %v1340, %v1339
    %v1344 = vpack.c.b16 %v1342, %v1341
    %v1348 = vsel %vm121, %v1326, 0
    %1350 = vmatprep.subr.bf16.mxu0 0
    %1351 = vmatpush1.bf16.msra.mxu0 %v1343
    %1352 = vmatprep.subr.bf16.mxu0 0
    %1353 = vmatpush1.bf16.msra.mxu0 %v1344
    %1354 = vmatprep.subr.bf16.mxu0 0
    %1355 = vmatpush1.bf16.msra.mxu0 0
    %1356 = vmatprep.subr.bf16.mxu0 0
    %1357 = vmatpush1.bf16.msra.mxu0 0
    %1358 = vmatprep.subr.bf16.mxu0 0
    %1359 = vmatpush1.bf16.msra.mxu0 0
    %1360 = vmatprep.subr.bf16.mxu0 0
    %1361 = vmatpush1.bf16.msra.mxu0 0
    %1362 = vmatprep.subr.bf16.mxu0 0
    %1363 = vmatpush1.bf16.msra.mxu0 0
    %1364 = vmatprep.subr.bf16.mxu0 0
    %1365 = vmatpush1.bf16.msra.mxu0 0
    %1366 = vmatprep.subr.bf16.mxu0 0
    %1367 = vmatpush1.bf16.msra.mxu0 0
    %1368 = vmatprep.subr.bf16.mxu0 0
    %1369 = vmatpush1.bf16.msra.mxu0 0
    %1370 = vmatprep.subr.bf16.mxu0 0
    %1371 = vmatpush1.bf16.msra.mxu0 0
    %1372 = vmatprep.subr.bf16.mxu0 0
    %1373 = vmatpush1.bf16.msra.mxu0 0
    %1374 = vmatprep.subr.bf16.mxu0 0
    %1375 = vmatpush1.bf16.msra.mxu0 0
    %1376 = vmatprep.subr.bf16.mxu0 0
    %1377 = vmatpush1.bf16.msra.mxu0 0
    %1378 = vmatprep.subr.bf16.mxu0 0
    %1379 = vmatpush1.bf16.msra.mxu0 0
    %1380 = vmatprep.subr.bf16.mxu0 0
    %1381 = vmatpush1.bf16.msra.mxu0 0
    %1382 = vmatprep.mubr.bf16.mxu0 0
    %1383 = vmatmul.mubr.bf16.gmra.mrb[0].mxu0 %v1348
    %v1384 = vpop.f32.mrb[0].mxu0
    %v1385 = vadd.f32 %v1334, %v1384
    %v1386 = vpop.f32.mrb[0].mxu0
    %v1387 = vpop.f32.mrb[0].mxu0
    %v1388 = vadd.f32 %v1334, %v1387
    %v1389 = vpop.f32.mrb[0].mxu0
    %1390 = vdwg.mxu0
    %v1391 = vmax.f32 %v1385, 0.0
    %v1392 = vmax.f32 %v1388, 0.0
    %v1393 = vpack.c.bf16 %v1392, %v1391
    %v1394 = vld [vmem:[%s7] sm:$0xf]
    %v1395 = vld [vmem:[%s7 + $0x4] sm:$0xf]
    %v1396 = vld [vmem:[%s7 + $0x8] sm:$0xf]
    %v1397 = vld [vmem:[%s7 + $0xc] sm:$0xf]
    %v1398 = vld [vmem:[%s7 + $0x10] sm:$0xf]
    %v1399 = vld [vmem:[%s7 + $0x14] sm:$0xf]
    %v1400 = vld [vmem:[%s7 + $0x18] sm:$0xf]
    %v1401 = vld [vmem:[%s7 + $0x1c] sm:$0xf]
    %v1402 = vlaneseq
    %v1403 = vshrl.u32 %v1402, 7
    %v1404 = vsub.s32 5, %v1403
    %v1405 = vrot.slane %v98, %v1404
    %v1414 = vunpack.c.l.b16 %v1394
    %v1415 = vunpack.c.l.b16 %v1395
    %v1416 = vunpack.c.l.b16 %v1396
    %v1417 = vunpack.c.l.b16 %v1397
    %v1418 = vunpack.c.l.b16 %v1398
    %v1419 = vunpack.c.l.b16 %v1399
    %v1420 = vunpack.c.l.b16 %v1400
    %v1421 = vunpack.c.l.b16 %v1401
    %v1422 = vpack.c.b16 %v1415, %v1414
    %v1423 = vpack.c.b16 %v1417, %v1416
    %v1424 = vpack.c.b16 %v1419, %v1418
    %v1425 = vpack.c.b16 %v1421, %v1420
    %vm1430 = vcmask 523264
    %v1432 = vsel %vm1430, %v1393, 0
    %1434 = vmatprep.subr.bf16.mxu0 0
    %1435 = vmatpush1.bf16.msra.mxu0 %v1422
    %1436 = vmatprep.subr.bf16.mxu0 0
    %1437 = vmatpush1.bf16.msra.mxu0 %v1423
    %1438 = vmatprep.subr.bf16.mxu0 0
    %1439 = vmatpush1.bf16.msra.mxu0 %v1424
    %1440 = vmatprep.subr.bf16.mxu0 0
    %1441 = vmatpush1.bf16.msra.mxu0 %v1425
    %1442 = vmatprep.subr.bf16.mxu0 0
    %1443 = vmatpush1.bf16.msra.mxu0 0
    %1444 = vmatprep.subr.bf16.mxu0 0
    %1445 = vmatpush1.bf16.msra.mxu0 0
    %1446 = vmatprep.subr.bf16.mxu0 0
    %1447 = vmatpush1.bf16.msra.mxu0 0
    %1448 = vmatprep.subr.bf16.mxu0 0
    %1449 = vmatpush1.bf16.msra.mxu0 0
    %1450 = vmatprep.subr.bf16.mxu0 0
    %1451 = vmatpush1.bf16.msra.mxu0 0
    %1452 = vmatprep.subr.bf16.mxu0 0
    %1453 = vmatpush1.bf16.msra.mxu0 0
    %1454 = vmatprep.subr.bf16.mxu0 0
    %1455 = vmatpush1.bf16.msra.mxu0 0
    %1456 = vmatprep.subr.bf16.mxu0 0
    %1457 = vmatpush1.bf16.msra.mxu0 0
    %1458 = vmatprep.subr.bf16.mxu0 0
    %1459 = vmatpush1.bf16.msra.mxu0 0
    %1460 = vmatprep.subr.bf16.mxu0 0
    %1461 = vmatpush1.bf16.msra.mxu0 0
    %1462 = vmatprep.subr.bf16.mxu0 0
    %1463 = vmatpush1.bf16.msra.mxu0 0
    %1464 = vmatprep.subr.bf16.mxu0 0
    %1465 = vmatpush1.bf16.msra.mxu0 0
    %1466 = vmatprep.mubr.bf16.mxu0 0
    %1467 = vmatmul.mubr.bf16.gmra.mrb[0].mxu0 %v1432
    %v1468 = vpop.f32.mrb[0].mxu0
    %v1469 = vadd.f32 %v1405, %v1468
    %v1470 = vpop.f32.mrb[0].mxu0
    %v1471 = vpop.f32.mrb[0].mxu0
    %v1472 = vadd.f32 %v1405, %v1471
    %v1473 = vpop.f32.mrb[0].mxu0
    %1474 = vdwg.mxu0
    %v1475 = vadd.f32 %v1324, %v1469
    %v1476 = vadd.f32 %v1325, %v1472
    %v1477 = vsel %vm121, %v1475, 0.0
    %1478 = vadd.xlane.f32.xlu0 %v1477
    %v1479 = vpop.xlane.xlu0 %1478
    %v1480 = vsel %vm121, %v1476, 0.0
    %1481 = vadd.xlane.f32.xlu0 %v1480
    %v1482 = vpop.xlane.xlu0 %1481
    %v1483 = vmul.f32 %v1479, %v1293
    %v1484 = vmul.f32 %v1482, %v1293
    %v1485 = vsub.f32 %v1475, %v1483
    %v1486 = vsub.f32 %v1476, %v1484
    %v1487 = vmul.f32 %v1485, %v1485
    %v1488 = vmul.f32 %v1486, %v1486
    %v1489 = vsel %vm121, %v1487, 0.0
    %1490 = vadd.xlane.f32.xlu0 %v1489
    %v1491 = vpop.xlane.xlu0 %1490
    %v1492 = vsel %vm121, %v1488, 0.0
    %1493 = vadd.xlane.f32.xlu0 %v1492
    %v1494 = vpop.xlane.xlu0 %1493
    %v1495 = vmul.f32 %v1491, %v1293
    %v1496 = vmul.f32 %v1494, %v1293
    %v1497 = vadd.f32 %v1495, 1e-05
    %v1498 = vadd.f32 %v1496, 1e-05
    %v1499 = vrsqrt.pop %v1497
    %v1500 = vrsqrt.pop %v1498
    %v1501 = vmul.f32 %v1485, %v1499
    %v1502 = vmul.f32 %v1486, %v1500
    %v1503 = vlaneseq
    %v1504 = vshrl.u32 %v1503, 7
    %v1505 = vsub.s32 0, %v1504
    %v1506 = vrot.slane %v99, %v1505
    %v1507 = vmul.f32 %v1501, %v1506
    %v1508 = vmul.f32 %v1502, %v1506
    %v1509 = vlaneseq
    %v1510 = vshrl.u32 %v1509, 7
    %v1511 = vsub.s32 1, %v1510
    %v1512 = vrot.slane %v99, %v1511
    %v1513 = vadd.f32 %v1507, %v1512
    %v1514 = vadd.f32 %v1508, %v1512
    %v1515 = vadd.f32 %v1513, %v95
    %v1516 = vadd.f32 %v1514, %v97
    %v1517 = vpack.c.bf16 %v1516, %v1515
    %s1518 = scalar_lea.vmem %s3, 16
    %v1519 = vld [vmem:[%s1518] sm:$0xf]
    %v1520 = vld [vmem:[%s1518 + $0x4] sm:$0xf]
    %v1521 = vld [vmem:[%s1518 + $0x8] sm:$0xf]
    %v1522 = vld [vmem:[%s1518 + $0xc] sm:$0xf]
    %v1523 = vlaneseq
    %v1524 = vshrl.u32 %v1523, 7
    %v1525 = vsub.s32 2, %v1524
    %v1526 = vrot.slane %v99, %v1525
    %v1531 = vunpack.c.l.b16 %v1519
    %v1532 = vunpack.c.l.b16 %v1520
    %v1533 = vunpack.c.l.b16 %v1521
    %v1534 = vunpack.c.l.b16 %v1522
    %v1535 = vpack.c.b16 %v1532, %v1531
    %v1536 = vpack.c.b16 %v1534, %v1533
    %v1540 = vsel %vm121, %v1517, 0
    %1542 = vmatprep.subr.bf16.mxu0 0
    %1543 = vmatpush1.bf16.msra.mxu0 %v1535
    %1544 = vmatprep.subr.bf16.mxu0 0
    %1545 = vmatpush1.bf16.msra.mxu0 %v1536
    %1546 = vmatprep.subr.bf16.mxu0 0
    %1547 = vmatpush1.bf16.msra.mxu0 0
    %1548 = vmatprep.subr.bf16.mxu0 0
    %1549 = vmatpush1.bf16.msra.mxu0 0
    %1550 = vmatprep.subr.bf16.mxu0 0
    %1551 = vmatpush1.bf16.msra.mxu0 0
    %1552 = vmatprep.subr.bf16.mxu0 0
    %1553 = vmatpush1.bf16.msra.mxu0 0
    %1554 = vmatprep.subr.bf16.mxu0 0
    %1555 = vmatpush1.bf16.msra.mxu0 0
    %1556 = vmatprep.subr.bf16.mxu0 0
    %1557 = vmatpush1.bf16.msra.mxu0 0
    %1558 = vmatprep.subr.bf16.mxu0 0
    %1559 = vmatpush1.bf16.msra.mxu0 0
    %1560 = vmatprep.subr.bf16.mxu0 0
    %1561 = vmatpush1.bf16.msra.mxu0 0
    %1562 = vmatprep.subr.bf16.mxu0 0
    %1563 = vmatpush1.bf16.msra.mxu0 0
    %1564 = vmatprep.subr.bf16.mxu0 0
    %1565 = vmatpush1.bf16.msra.mxu0 0
    %1566 = vmatprep.subr.bf16.mxu0 0
    %1567 = vmatpush1.bf16.msra.mxu0 0
    %1568 = vmatprep.subr.bf16.mxu0 0
    %1569 = vmatpush1.bf16.msra.mxu0 0
    %1570 = vmatprep.subr.bf16.mxu0 0
    %1571 = vmatpush1.bf16.msra.mxu0 0
    %1572 = vmatprep.subr.bf16.mxu0 0
    %1573 = vmatpush1.bf16.msra.mxu0 0
    %1574 = vmatprep.mubr.bf16.mxu0 0
    %1575 = vmatmul.mubr.bf16.gmra.mrb[0].mxu0 %v1540
    %v1576 = vpop.f32.mrb[0].mxu0
    %v1577 = vadd.f32 %v1526, %v1576
    %v1578 = vpop.f32.mrb[0].mxu0
    %v1579 = vpop.f32.mrb[0].mxu0
    %v1580 = vadd.f32 %v1526, %v1579
    %v1581 = vpop.f32.mrb[0].mxu0
    %1582 = vdwg.mxu0
    %v1583 = vlaneseq
    %v1584 = vshrl.u32 %v1583, 7
    %v1585 = vsub.s32 3, %v1584
    %v1586 = vrot.slane %v99, %v1585
    %1588 = vrot.lane.b32.xlu0 %v1586, 32
    %v1589 = vpop.permute.xlu0 %1588
    %v1591 = vadd.f32 %v160, %v1589
    %v1592 = vadd.f32 %v163, %v1589
    %v1593 = vlaneseq
    %v1594 = vshrl.u32 %v1593, 7
    %v1595 = vsub.s32 4, %v1594
    %v1596 = vrot.slane %v99, %v1595
    %1598 = vrot.lane.b32.xlu0 %v1596, 32
    %v1599 = vpop.permute.xlu0 %1598
    %v1601 = vadd.f32 %v221, %v1599
    %v1602 = vadd.f32 %v224, %v1599
    %v1603 = vpack.c.bf16 %v1577, %v1577
    %v1604 = vpack.c.bf16 %v1591, %v1591
    %v1605 = vpack.c.bf16 %v1601, %v1601
    %1607 = vrot.lane.b32.xlu0 %v1604, 96
    %v1608 = vpop.permute.xlu0 %1607
    %v1610 = vsel %vm309, %v1603, 0
    %v1613 = vsel %vm309, %v1608, 0
    %1615 = vmatprep.subr.bf16.mxu0 0
    %1616 = vmatpush1.bf16.xpose.msra.mxu0 %v1613
    %1617 = vmatprep.subr.bf16.mxu0 0
    %1618 = vmatpush1.bf16.xpose.msra.mxu0 0
    %1619 = vmatprep.subr.bf16.mxu0 0
    %1620 = vmatpush1.bf16.xpose.msra.mxu0 0
    %1621 = vmatprep.subr.bf16.mxu0 0
    %1622 = vmatpush1.bf16.xpose.msra.mxu0 0
    %1623 = vmatprep.subr.bf16.mxu0 0
    %1624 = vmatpush1.bf16.xpose.msra.mxu0 0
    %1625 = vmatprep.subr.bf16.mxu0 0
    %1626 = vmatpush1.bf16.xpose.msra.mxu0 0
    %1627 = vmatprep.subr.bf16.mxu0 0
    %1628 = vmatpush1.bf16.xpose.msra.mxu0 0
    %1629 = vmatprep.subr.bf16.mxu0 0
    %1630 = vmatpush1.bf16.xpose.msra.mxu0 0
    %1631 = vmatprep.subr.bf16.mxu0 0
    %1632 = vmatpush1.bf16.xpose.msra.mxu0 0
    %1633 = vmatprep.subr.bf16.mxu0 0
    %1634 = vmatpush1.bf16.xpose.msra.mxu0 0
    %1635 = vmatprep.subr.bf16.mxu0 0
    %1636 = vmatpush1.bf16.xpose.msra.mxu0 0
    %1637 = vmatprep.subr.bf16.mxu0 0
    %1638 = vmatpush1.bf16.xpose.msra.mxu0 0
    %1639 = vmatprep.subr.bf16.mxu0 0
    %1640 = vmatpush1.bf16.xpose.msra.mxu0 0
    %1641 = vmatprep.subr.bf16.mxu0 0
    %1642 = vmatpush1.bf16.xpose.msra.mxu0 0
    %1643 = vmatprep.subr.bf16.mxu0 0
    %1644 = vmatpush1.bf16.xpose.msra.mxu0 0
    %1645 = vmatprep.subr.bf16.mxu0 0
    %1646 = vmatpush1.bf16.xpose.msra.mxu0 0
    %1647 = vmatprep.mubr.bf16.mxu0 0
    %1648 = vmatmul.mubr.bf16.gmra.mrb[0].mxu0 %v1610
    %v1649 = vpop.f32.mrb[0].mxu0
    %v1650 = vadd.f32 0.0, %v1649
    %v1651 = vpop.f32.mrb[0].mxu0
    %v1652 = vpop.f32.mrb[0].mxu0
    %v1653 = vpop.f32.mrb[0].mxu0
    %1654 = vdwg.mxu0
    %v1655 = vsel %vm309, %v1650, -inf
    %1656 = vmax.xlane.f32.xlu0 %v1655
    %v1657 = vpop.xlane.xlu0 %1656
    %v1658 = vsub.f32 %v1650, %v1657
    %v1659 = vmul.f32 %v1658, 1.442695
    %v1660 = vpow.pop %v1659
    %v1661 = vsel %vm309, %v1660, 0.0
    %1662 = vadd.xlane.f32.xlu0 %v1661
    %v1663 = vpop.xlane.xlu0 %1662
    %v1664 = vrcp.pop %v1663
    %v1665 = vmul.f32 %v1660, %v1664
    %v1666 = vpack.c.bf16 %v1665, %v1665
    %1668 = vrot.lane.b32.xlu0 %v1605, 96
    %v1669 = vpop.permute.xlu0 %1668
    %v1671 = vsel %vm309, %v1666, 0
    %v1674 = vsel %vm371, %v1669, 0
    %1676 = vmatprep.subr.bf16.mxu0 0
    %1677 = vmatpush1.bf16.msra.mxu0 %v1674
    %1678 = vmatprep.subr.bf16.mxu0 0
    %1679 = vmatpush1.bf16.msra.mxu0 0
    %1680 = vmatprep.subr.bf16.mxu0 0
    %1681 = vmatpush1.bf16.msra.mxu0 0
    %1682 = vmatprep.subr.bf16.mxu0 0
    %1683 = vmatpush1.bf16.msra.mxu0 0
    %1684 = vmatprep.subr.bf16.mxu0 0
    %1685 = vmatpush1.bf16.msra.mxu0 0
    %1686 = vmatprep.subr.bf16.mxu0 0
    %1687 = vmatpush1.bf16.msra.mxu0 0
    %1688 = vmatprep.subr.bf16.mxu0 0
    %1689 = vmatpush1.bf16.msra.mxu0 0
    %1690 = vmatprep.subr.bf16.mxu0 0
    %1691 = vmatpush1.bf16.msra.mxu0 0
    %1692 = vmatprep.subr.bf16.mxu0 0
    %1693 = vmatpush1.bf16.msra.mxu0 0
    %1694 = vmatprep.subr.bf16.mxu0 0
    %1695 = vmatpush1.bf16.msra.mxu0 0
    %1696 = vmatprep.subr.bf16.mxu0 0
    %1697 = vmatpush1.bf16.msra.mxu0 0
    %1698 = vmatprep.subr.bf16.mxu0 0
    %1699 = vmatpush1.bf16.msra.mxu0 0
    %1700 = vmatprep.subr.bf16.mxu0 0
    %1701 = vmatpush1.bf16.msra.mxu0 0
    %1702 = vmatprep.subr.bf16.mxu0 0
    %1703 = vmatpush1.bf16.msra.mxu0 0
    %1704 = vmatprep.subr.bf16.mxu0 0
    %1705 = vmatpush1.bf16.msra.mxu0 0
    %1706 = vmatprep.subr.bf16.mxu0 0
    %1707 = vmatpush1.bf16.msra.mxu0 0
    %1708 = vmatprep.mubr.bf16.mxu0 0
    %1709 = vmatmul.mubr.bf16.gmra.mrb[0].mxu0 %v1671
    %v1710 = vpop.f32.mrb[0].mxu0
    %v1711 = vadd.f32 0.0, %v1710
    %v1712 = vpop.f32.mrb[0].mxu0
    %v1713 = vpop.f32.mrb[0].mxu0
    %v1714 = vpop.f32.mrb[0].mxu0
    %1715 = vdwg.mxu0
    %1717 = vrot.lane.b32.xlu0 %v1603, 120
    %v1718 = vpop.permute.xlu0 %1717
    %1719 = vrot.lane.b32.xlu0 %v1604, 88
    %v1720 = vpop.permute.xlu0 %1719
    %v1722 = vsel %vm309, %v1718, 0
    %v1725 = vsel %vm309, %v1720, 0
    %1727 = vmatprep.subr.bf16.mxu0 0
    %1728 = vmatpush1.bf16.xpose.msra.mxu0 %v1725
    %1729 = vmatprep.subr.bf16.mxu0 0
    %1730 = vmatpush1.bf16.xpose.msra.mxu0 0
    %1731 = vmatprep.subr.bf16.mxu0 0
    %1732 = vmatpush1.bf16.xpose.msra.mxu0 0
    %1733 = vmatprep.subr.bf16.mxu0 0
    %1734 = vmatpush1.bf16.xpose.msra.mxu0 0
    %1735 = vmatprep.subr.bf16.mxu0 0
    %1736 = vmatpush1.bf16.xpose.msra.mxu0 0
    %1737 = vmatprep.subr.bf16.mxu0 0
    %1738 = vmatpush1.bf16.xpose.msra.mxu0 0
    %1739 = vmatprep.subr.bf16.mxu0 0
    %1740 = vmatpush1.bf16.xpose.msra.mxu0 0
    %1741 = vmatprep.subr.bf16.mxu0 0
    %1742 = vmatpush1.bf16.xpose.msra.mxu0 0
    %1743 = vmatprep.subr.bf16.mxu0 0
    %1744 = vmatpush1.bf16.xpose.msra.mxu0 0
    %1745 = vmatprep.subr.bf16.mxu0 0
    %1746 = vmatpush1.bf16.xpose.msra.mxu0 0
    %1747 = vmatprep.subr.bf16.mxu0 0
    %1748 = vmatpush1.bf16.xpose.msra.mxu0 0
    %1749 = vmatprep.subr.bf16.mxu0 0
    %1750 = vmatpush1.bf16.xpose.msra.mxu0 0
    %1751 = vmatprep.subr.bf16.mxu0 0
    %1752 = vmatpush1.bf16.xpose.msra.mxu0 0
    %1753 = vmatprep.subr.bf16.mxu0 0
    %1754 = vmatpush1.bf16.xpose.msra.mxu0 0
    %1755 = vmatprep.subr.bf16.mxu0 0
    %1756 = vmatpush1.bf16.xpose.msra.mxu0 0
    %1757 = vmatprep.subr.bf16.mxu0 0
    %1758 = vmatpush1.bf16.xpose.msra.mxu0 0
    %1759 = vmatprep.mubr.bf16.mxu0 0
    %1760 = vmatmul.mubr.bf16.gmra.mrb[0].mxu0 %v1722
    %v1761 = vpop.f32.mrb[0].mxu0
    %v1762 = vadd.f32 0.0, %v1761
    %v1763 = vpop.f32.mrb[0].mxu0
    %v1764 = vpop.f32.mrb[0].mxu0
    %v1765 = vpop.f32.mrb[0].mxu0
    %1766 = vdwg.mxu0
    %v1767 = vsel %vm309, %v1762, -inf
    %1768 = vmax.xlane.f32.xlu0 %v1767
    %v1769 = vpop.xlane.xlu0 %1768
    %v1770 = vsub.f32 %v1762, %v1769
    %v1771 = vmul.f32 %v1770, 1.442695
    %v1772 = vpow.pop %v1771
    %v1773 = vsel %vm309, %v1772, 0.0
    %1774 = vadd.xlane.f32.xlu0 %v1773
    %v1775 = vpop.xlane.xlu0 %1774
    %v1776 = vrcp.pop %v1775
    %v1777 = vmul.f32 %v1772, %v1776
    %v1778 = vpack.c.bf16 %v1777, %v1777
    %1779 = vrot.lane.b32.xlu0 %v1605, 88
    %v1780 = vpop.permute.xlu0 %1779
    %v1782 = vsel %vm309, %v1778, 0
    %v1785 = vsel %vm371, %v1780, 0
    %1787 = vmatprep.subr.bf16.mxu0 0
    %1788 = vmatpush1.bf16.msra.mxu0 %v1785
    %1789 = vmatprep.subr.bf16.mxu0 0
    %1790 = vmatpush1.bf16.msra.mxu0 0
    %1791 = vmatprep.subr.bf16.mxu0 0
    %1792 = vmatpush1.bf16.msra.mxu0 0
    %1793 = vmatprep.subr.bf16.mxu0 0
    %1794 = vmatpush1.bf16.msra.mxu0 0
    %1795 = vmatprep.subr.bf16.mxu0 0
    %1796 = vmatpush1.bf16.msra.mxu0 0
    %1797 = vmatprep.subr.bf16.mxu0 0
    %1798 = vmatpush1.bf16.msra.mxu0 0
    %1799 = vmatprep.subr.bf16.mxu0 0
    %1800 = vmatpush1.bf16.msra.mxu0 0
    %1801 = vmatprep.subr.bf16.mxu0 0
    %1802 = vmatpush1.bf16.msra.mxu0 0
    %1803 = vmatprep.subr.bf16.mxu0 0
    %1804 = vmatpush1.bf16.msra.mxu0 0
    %1805 = vmatprep.subr.bf16.mxu0 0
    %1806 = vmatpush1.bf16.msra.mxu0 0
    %1807 = vmatprep.subr.bf16.mxu0 0
    %1808 = vmatpush1.bf16.msra.mxu0 0
    %1809 = vmatprep.subr.bf16.mxu0 0
    %1810 = vmatpush1.bf16.msra.mxu0 0
    %1811 = vmatprep.subr.bf16.mxu0 0
    %1812 = vmatpush1.bf16.msra.mxu0 0
    %1813 = vmatprep.subr.bf16.mxu0 0
    %1814 = vmatpush1.bf16.msra.mxu0 0
    %1815 = vmatprep.subr.bf16.mxu0 0
    %1816 = vmatpush1.bf16.msra.mxu0 0
    %1817 = vmatprep.subr.bf16.mxu0 0
    %1818 = vmatpush1.bf16.msra.mxu0 0
    %1819 = vmatprep.mubr.bf16.mxu0 0
    %1820 = vmatmul.mubr.bf16.gmra.mrb[0].mxu0 %v1782
    %v1821 = vpop.f32.mrb[0].mxu0
    %v1822 = vadd.f32 0.0, %v1821
    %v1823 = vpop.f32.mrb[0].mxu0
    %v1824 = vpop.f32.mrb[0].mxu0
    %v1825 = vpop.f32.mrb[0].mxu0
    %1826 = vdwg.mxu0
    %1827 = vrot.lane.b32.xlu0 %v1603, 112
    %v1828 = vpop.permute.xlu0 %1827
    %1829 = vrot.lane.b32.xlu0 %v1604, 80
    %v1830 = vpop.permute.xlu0 %1829
    %v1832 = vsel %vm309, %v1828, 0
    %v1835 = vsel %vm309, %v1830, 0
    %1837 = vmatprep.subr.bf16.mxu0 0
    %1838 = vmatpush1.bf16.xpose.msra.mxu0 %v1835
    %1839 = vmatprep.subr.bf16.mxu0 0
    %1840 = vmatpush1.bf16.xpose.msra.mxu0 0
    %1841 = vmatprep.subr.bf16.mxu0 0
    %1842 = vmatpush1.bf16.xpose.msra.mxu0 0
    %1843 = vmatprep.subr.bf16.mxu0 0
    %1844 = vmatpush1.bf16.xpose.msra.mxu0 0
    %1845 = vmatprep.subr.bf16.mxu0 0
    %1846 = vmatpush1.bf16.xpose.msra.mxu0 0
    %1847 = vmatprep.subr.bf16.mxu0 0
    %1848 = vmatpush1.bf16.xpose.msra.mxu0 0
    %1849 = vmatprep.subr.bf16.mxu0 0
    %1850 = vmatpush1.bf16.xpose.msra.mxu0 0
    %1851 = vmatprep.subr.bf16.mxu0 0
    %1852 = vmatpush1.bf16.xpose.msra.mxu0 0
    %1853 = vmatprep.subr.bf16.mxu0 0
    %1854 = vmatpush1.bf16.xpose.msra.mxu0 0
    %1855 = vmatprep.subr.bf16.mxu0 0
    %1856 = vmatpush1.bf16.xpose.msra.mxu0 0
    %1857 = vmatprep.subr.bf16.mxu0 0
    %1858 = vmatpush1.bf16.xpose.msra.mxu0 0
    %1859 = vmatprep.subr.bf16.mxu0 0
    %1860 = vmatpush1.bf16.xpose.msra.mxu0 0
    %1861 = vmatprep.subr.bf16.mxu0 0
    %1862 = vmatpush1.bf16.xpose.msra.mxu0 0
    %1863 = vmatprep.subr.bf16.mxu0 0
    %1864 = vmatpush1.bf16.xpose.msra.mxu0 0
    %1865 = vmatprep.subr.bf16.mxu0 0
    %1866 = vmatpush1.bf16.xpose.msra.mxu0 0
    %1867 = vmatprep.subr.bf16.mxu0 0
    %1868 = vmatpush1.bf16.xpose.msra.mxu0 0
    %1869 = vmatprep.mubr.bf16.mxu0 0
    %1870 = vmatmul.mubr.bf16.gmra.mrb[0].mxu0 %v1832
    %v1871 = vpop.f32.mrb[0].mxu0
    %v1872 = vadd.f32 0.0, %v1871
    %v1873 = vpop.f32.mrb[0].mxu0
    %v1874 = vpop.f32.mrb[0].mxu0
    %v1875 = vpop.f32.mrb[0].mxu0
    %1876 = vdwg.mxu0
    %v1877 = vsel %vm309, %v1872, -inf
    %1878 = vmax.xlane.f32.xlu0 %v1877
    %v1879 = vpop.xlane.xlu0 %1878
    %v1880 = vsub.f32 %v1872, %v1879
    %v1881 = vmul.f32 %v1880, 1.442695
    %v1882 = vpow.pop %v1881
    %v1883 = vsel %vm309, %v1882, 0.0
    %1884 = vadd.xlane.f32.xlu0 %v1883
    %v1885 = vpop.xlane.xlu0 %1884
    %v1886 = vrcp.pop %v1885
    %v1887 = vmul.f32 %v1882, %v1886
    %v1888 = vpack.c.bf16 %v1887, %v1887
    %1889 = vrot.lane.b32.xlu0 %v1605, 80
    %v1890 = vpop.permute.xlu0 %1889
    %v1892 = vsel %vm309, %v1888, 0
    %v1895 = vsel %vm371, %v1890, 0
    %1897 = vmatprep.subr.bf16.mxu0 0
    %1898 = vmatpush1.bf16.msra.mxu0 %v1895
    %1899 = vmatprep.subr.bf16.mxu0 0
    %1900 = vmatpush1.bf16.msra.mxu0 0
    %1901 = vmatprep.subr.bf16.mxu0 0
    %1902 = vmatpush1.bf16.msra.mxu0 0
    %1903 = vmatprep.subr.bf16.mxu0 0
    %1904 = vmatpush1.bf16.msra.mxu0 0
    %1905 = vmatprep.subr.bf16.mxu0 0
    %1906 = vmatpush1.bf16.msra.mxu0 0
    %1907 = vmatprep.subr.bf16.mxu0 0
    %1908 = vmatpush1.bf16.msra.mxu0 0
    %1909 = vmatprep.subr.bf16.mxu0 0
    %1910 = vmatpush1.bf16.msra.mxu0 0
    %1911 = vmatprep.subr.bf16.mxu0 0
    %1912 = vmatpush1.bf16.msra.mxu0 0
    %1913 = vmatprep.subr.bf16.mxu0 0
    %1914 = vmatpush1.bf16.msra.mxu0 0
    %1915 = vmatprep.subr.bf16.mxu0 0
    %1916 = vmatpush1.bf16.msra.mxu0 0
    %1917 = vmatprep.subr.bf16.mxu0 0
    %1918 = vmatpush1.bf16.msra.mxu0 0
    %1919 = vmatprep.subr.bf16.mxu0 0
    %1920 = vmatpush1.bf16.msra.mxu0 0
    %1921 = vmatprep.subr.bf16.mxu0 0
    %1922 = vmatpush1.bf16.msra.mxu0 0
    %1923 = vmatprep.subr.bf16.mxu0 0
    %1924 = vmatpush1.bf16.msra.mxu0 0
    %1925 = vmatprep.subr.bf16.mxu0 0
    %1926 = vmatpush1.bf16.msra.mxu0 0
    %1927 = vmatprep.subr.bf16.mxu0 0
    %1928 = vmatpush1.bf16.msra.mxu0 0
    %1929 = vmatprep.mubr.bf16.mxu0 0
    %1930 = vmatmul.mubr.bf16.gmra.mrb[0].mxu0 %v1892
    %v1931 = vpop.f32.mrb[0].mxu0
    %v1932 = vadd.f32 0.0, %v1931
    %v1933 = vpop.f32.mrb[0].mxu0
    %v1934 = vpop.f32.mrb[0].mxu0
    %v1935 = vpop.f32.mrb[0].mxu0
    %1936 = vdwg.mxu0
    %1937 = vrot.lane.b32.xlu0 %v1603, 104
    %v1938 = vpop.permute.xlu0 %1937
    %1939 = vrot.lane.b32.xlu0 %v1604, 72
    %v1940 = vpop.permute.xlu0 %1939
    %v1942 = vsel %vm309, %v1938, 0
    %v1945 = vsel %vm309, %v1940, 0
    %1947 = vmatprep.subr.bf16.mxu0 0
    %1948 = vmatpush1.bf16.xpose.msra.mxu0 %v1945
    %1949 = vmatprep.subr.bf16.mxu0 0
    %1950 = vmatpush1.bf16.xpose.msra.mxu0 0
    %1951 = vmatprep.subr.bf16.mxu0 0
    %1952 = vmatpush1.bf16.xpose.msra.mxu0 0
    %1953 = vmatprep.subr.bf16.mxu0 0
    %1954 = vmatpush1.bf16.xpose.msra.mxu0 0
    %1955 = vmatprep.subr.bf16.mxu0 0
    %1956 = vmatpush1.bf16.xpose.msra.mxu0 0
    %1957 = vmatprep.subr.bf16.mxu0 0
    %1958 = vmatpush1.bf16.xpose.msra.mxu0 0
    %1959 = vmatprep.subr.bf16.mxu0 0
    %1960 = vmatpush1.bf16.xpose.msra.mxu0 0
    %1961 = vmatprep.subr.bf16.mxu0 0
    %1962 = vmatpush1.bf16.xpose.msra.mxu0 0
    %1963 = vmatprep.subr.bf16.mxu0 0
    %1964 = vmatpush1.bf16.xpose.msra.mxu0 0
    %1965 = vmatprep.subr.bf16.mxu0 0
    %1966 = vmatpush1.bf16.xpose.msra.mxu0 0
    %1967 = vmatprep.subr.bf16.mxu0 0
    %1968 = vmatpush1.bf16.xpose.msra.mxu0 0
    %1969 = vmatprep.subr.bf16.mxu0 0
    %1970 = vmatpush1.bf16.xpose.msra.mxu0 0
    %1971 = vmatprep.subr.bf16.mxu0 0
    %1972 = vmatpush1.bf16.xpose.msra.mxu0 0
    %1973 = vmatprep.subr.bf16.mxu0 0
    %1974 = vmatpush1.bf16.xpose.msra.mxu0 0
    %1975 = vmatprep.subr.bf16.mxu0 0
    %1976 = vmatpush1.bf16.xpose.msra.mxu0 0
    %1977 = vmatprep.subr.bf16.mxu0 0
    %1978 = vmatpush1.bf16.xpose.msra.mxu0 0
    %1979 = vmatprep.mubr.bf16.mxu0 0
    %1980 = vmatmul.mubr.bf16.gmra.mrb[0].mxu0 %v1942
    %v1981 = vpop.f32.mrb[0].mxu0
    %v1982 = vadd.f32 0.0, %v1981
    %v1983 = vpop.f32.mrb[0].mxu0
    %v1984 = vpop.f32.mrb[0].mxu0
    %v1985 = vpop.f32.mrb[0].mxu0
    %1986 = vdwg.mxu0
    %v1987 = vsel %vm309, %v1982, -inf
    %1988 = vmax.xlane.f32.xlu0 %v1987
    %v1989 = vpop.xlane.xlu0 %1988
    %v1990 = vsub.f32 %v1982, %v1989
    %v1991 = vmul.f32 %v1990, 1.442695
    %v1992 = vpow.pop %v1991
    %v1993 = vsel %vm309, %v1992, 0.0
    %1994 = vadd.xlane.f32.xlu0 %v1993
    %v1995 = vpop.xlane.xlu0 %1994
    %v1996 = vrcp.pop %v1995
    %v1997 = vmul.f32 %v1992, %v1996
    %v1998 = vpack.c.bf16 %v1997, %v1997
    %1999 = vrot.lane.b32.xlu0 %v1605, 72
    %v2000 = vpop.permute.xlu0 %1999
    %v2002 = vsel %vm309, %v1998, 0
    %v2005 = vsel %vm371, %v2000, 0
    %2007 = vmatprep.subr.bf16.mxu0 0
    %2008 = vmatpush1.bf16.msra.mxu0 %v2005
    %2009 = vmatprep.subr.bf16.mxu0 0
    %2010 = vmatpush1.bf16.msra.mxu0 0
    %2011 = vmatprep.subr.bf16.mxu0 0
    %2012 = vmatpush1.bf16.msra.mxu0 0
    %2013 = vmatprep.subr.bf16.mxu0 0
    %2014 = vmatpush1.bf16.msra.mxu0 0
    %2015 = vmatprep.subr.bf16.mxu0 0
    %2016 = vmatpush1.bf16.msra.mxu0 0
    %2017 = vmatprep.subr.bf16.mxu0 0
    %2018 = vmatpush1.bf16.msra.mxu0 0
    %2019 = vmatprep.subr.bf16.mxu0 0
    %2020 = vmatpush1.bf16.msra.mxu0 0
    %2021 = vmatprep.subr.bf16.mxu0 0
    %2022 = vmatpush1.bf16.msra.mxu0 0
    %2023 = vmatprep.subr.bf16.mxu0 0
    %2024 = vmatpush1.bf16.msra.mxu0 0
    %2025 = vmatprep.subr.bf16.mxu0 0
    %2026 = vmatpush1.bf16.msra.mxu0 0
    %2027 = vmatprep.subr.bf16.mxu0 0
    %2028 = vmatpush1.bf16.msra.mxu0 0
    %2029 = vmatprep.subr.bf16.mxu0 0
    %2030 = vmatpush1.bf16.msra.mxu0 0
    %2031 = vmatprep.subr.bf16.mxu0 0
    %2032 = vmatpush1.bf16.msra.mxu0 0
    %2033 = vmatprep.subr.bf16.mxu0 0
    %2034 = vmatpush1.bf16.msra.mxu0 0
    %2035 = vmatprep.subr.bf16.mxu0 0
    %2036 = vmatpush1.bf16.msra.mxu0 0
    %2037 = vmatprep.subr.bf16.mxu0 0
    %2038 = vmatpush1.bf16.msra.mxu0 0
    %2039 = vmatprep.mubr.bf16.mxu0 0
    %2040 = vmatmul.mubr.bf16.gmra.mrb[0].mxu0 %v2002
    %v2041 = vpop.f32.mrb[0].mxu0
    %v2042 = vadd.f32 0.0, %v2041
    %v2043 = vpop.f32.mrb[0].mxu0
    %v2044 = vpop.f32.mrb[0].mxu0
    %v2045 = vpop.f32.mrb[0].mxu0
    %2046 = vdwg.mxu0
    %2048 = vrot.lane.b32.xlu0 %v1822, 8
    %v2049 = vpop.permute.xlu0 %2048
    %2052 = vrot.lane.b32.xlu0 %v1932, 16
    %v2053 = vpop.permute.xlu0 %2052
    %2056 = vrot.lane.b32.xlu0 %v2042, 24
    %v2057 = vpop.permute.xlu0 %2056
    %v2059 = vsel %vm309, %v1711, %v2049
    %v2060 = vsel %vm761, %v2059, %v2053
    %v2061 = vsel %vm763, %v2060, %v2057
    %v2062 = vpack.c.bf16 %v1580, %v1580
    %v2063 = vpack.c.bf16 %v1592, %v1592
    %v2064 = vpack.c.bf16 %v1602, %v1602
    %2066 = vrot.lane.b32.xlu0 %v2063, 96
    %v2067 = vpop.permute.xlu0 %2066
    %v2069 = vsel %vm309, %v2062, 0
    %v2072 = vsel %vm309, %v2067, 0
    %2074 = vmatprep.subr.bf16.mxu0 0
    %2075 = vmatpush1.bf16.xpose.msra.mxu0 %v2072
    %2076 = vmatprep.subr.bf16.mxu0 0
    %2077 = vmatpush1.bf16.xpose.msra.mxu0 0
    %2078 = vmatprep.subr.bf16.mxu0 0
    %2079 = vmatpush1.bf16.xpose.msra.mxu0 0
    %2080 = vmatprep.subr.bf16.mxu0 0
    %2081 = vmatpush1.bf16.xpose.msra.mxu0 0
    %2082 = vmatprep.subr.bf16.mxu0 0
    %2083 = vmatpush1.bf16.xpose.msra.mxu0 0
    %2084 = vmatprep.subr.bf16.mxu0 0
    %2085 = vmatpush1.bf16.xpose.msra.mxu0 0
    %2086 = vmatprep.subr.bf16.mxu0 0
    %2087 = vmatpush1.bf16.xpose.msra.mxu0 0
    %2088 = vmatprep.subr.bf16.mxu0 0
    %2089 = vmatpush1.bf16.xpose.msra.mxu0 0
    %2090 = vmatprep.subr.bf16.mxu0 0
    %2091 = vmatpush1.bf16.xpose.msra.mxu0 0
    %2092 = vmatprep.subr.bf16.mxu0 0
    %2093 = vmatpush1.bf16.xpose.msra.mxu0 0
    %2094 = vmatprep.subr.bf16.mxu0 0
    %2095 = vmatpush1.bf16.xpose.msra.mxu0 0
    %2096 = vmatprep.subr.bf16.mxu0 0
    %2097 = vmatpush1.bf16.xpose.msra.mxu0 0
    %2098 = vmatprep.subr.bf16.mxu0 0
    %2099 = vmatpush1.bf16.xpose.msra.mxu0 0
    %2100 = vmatprep.subr.bf16.mxu0 0
    %2101 = vmatpush1.bf16.xpose.msra.mxu0 0
    %2102 = vmatprep.subr.bf16.mxu0 0
    %2103 = vmatpush1.bf16.xpose.msra.mxu0 0
    %2104 = vmatprep.subr.bf16.mxu0 0
    %2105 = vmatpush1.bf16.xpose.msra.mxu0 0
    %2106 = vmatprep.mubr.bf16.mxu0 0
    %2107 = vmatmul.mubr.bf16.gmra.mrb[0].mxu0 %v2069
    %v2108 = vpop.f32.mrb[0].mxu0
    %v2109 = vadd.f32 0.0, %v2108
    %v2110 = vpop.f32.mrb[0].mxu0
    %v2111 = vpop.f32.mrb[0].mxu0
    %v2112 = vpop.f32.mrb[0].mxu0
    %2113 = vdwg.mxu0
    %v2114 = vsel %vm309, %v2109, -inf
    %2115 = vmax.xlane.f32.xlu0 %v2114
    %v2116 = vpop.xlane.xlu0 %2115
    %v2117 = vsub.f32 %v2109, %v2116
    %v2118 = vmul.f32 %v2117, 1.442695
    %v2119 = vpow.pop %v2118
    %v2120 = vsel %vm309, %v2119, 0.0
    %2121 = vadd.xlane.f32.xlu0 %v2120
    %v2122 = vpop.xlane.xlu0 %2121
    %v2123 = vrcp.pop %v2122
    %v2124 = vmul.f32 %v2119, %v2123
    %v2125 = vpack.c.bf16 %v2124, %v2124
    %2127 = vrot.lane.b32.xlu0 %v2064, 96
    %v2128 = vpop.permute.xlu0 %2127
    %v2130 = vsel %vm309, %v2125, 0
    %v2133 = vsel %vm371, %v2128, 0
    %2135 = vmatprep.subr.bf16.mxu0 0
    %2136 = vmatpush1.bf16.msra.mxu0 %v2133
    %2137 = vmatprep.subr.bf16.mxu0 0
    %2138 = vmatpush1.bf16.msra.mxu0 0
    %2139 = vmatprep.subr.bf16.mxu0 0
    %2140 = vmatpush1.bf16.msra.mxu0 0
    %2141 = vmatprep.subr.bf16.mxu0 0
    %2142 = vmatpush1.bf16.msra.mxu0 0
    %2143 = vmatprep.subr.bf16.mxu0 0
    %2144 = vmatpush1.bf16.msra.mxu0 0
    %2145 = vmatprep.subr.bf16.mxu0 0
    %2146 = vmatpush1.bf16.msra.mxu0 0
    %2147 = vmatprep.subr.bf16.mxu0 0
    %2148 = vmatpush1.bf16.msra.mxu0 0
    %2149 = vmatprep.subr.bf16.mxu0 0
    %2150 = vmatpush1.bf16.msra.mxu0 0
    %2151 = vmatprep.subr.bf16.mxu0 0
    %2152 = vmatpush1.bf16.msra.mxu0 0
    %2153 = vmatprep.subr.bf16.mxu0 0
    %2154 = vmatpush1.bf16.msra.mxu0 0
    %2155 = vmatprep.subr.bf16.mxu0 0
    %2156 = vmatpush1.bf16.msra.mxu0 0
    %2157 = vmatprep.subr.bf16.mxu0 0
    %2158 = vmatpush1.bf16.msra.mxu0 0
    %2159 = vmatprep.subr.bf16.mxu0 0
    %2160 = vmatpush1.bf16.msra.mxu0 0
    %2161 = vmatprep.subr.bf16.mxu0 0
    %2162 = vmatpush1.bf16.msra.mxu0 0
    %2163 = vmatprep.subr.bf16.mxu0 0
    %2164 = vmatpush1.bf16.msra.mxu0 0
    %2165 = vmatprep.subr.bf16.mxu0 0
    %2166 = vmatpush1.bf16.msra.mxu0 0
    %2167 = vmatprep.mubr.bf16.mxu0 0
    %2168 = vmatmul.mubr.bf16.gmra.mrb[0].mxu0 %v2130
    %v2169 = vpop.f32.mrb[0].mxu0
    %v2170 = vadd.f32 0.0, %v2169
    %v2171 = vpop.f32.mrb[0].mxu0
    %v2172 = vpop.f32.mrb[0].mxu0
    %v2173 = vpop.f32.mrb[0].mxu0
    %2174 = vdwg.mxu0
    %2176 = vrot.lane.b32.xlu0 %v2062, 120
    %v2177 = vpop.permute.xlu0 %2176
    %2178 = vrot.lane.b32.xlu0 %v2063, 88
    %v2179 = vpop.permute.xlu0 %2178
    %v2181 = vsel %vm309, %v2177, 0
    %v2184 = vsel %vm309, %v2179, 0
    %2186 = vmatprep.subr.bf16.mxu0 0
    %2187 = vmatpush1.bf16.xpose.msra.mxu0 %v2184
    %2188 = vmatprep.subr.bf16.mxu0 0
    %2189 = vmatpush1.bf16.xpose.msra.mxu0 0
    %2190 = vmatprep.subr.bf16.mxu0 0
    %2191 = vmatpush1.bf16.xpose.msra.mxu0 0
    %2192 = vmatprep.subr.bf16.mxu0 0
    %2193 = vmatpush1.bf16.xpose.msra.mxu0 0
    %2194 = vmatprep.subr.bf16.mxu0 0
    %2195 = vmatpush1.bf16.xpose.msra.mxu0 0
    %2196 = vmatprep.subr.bf16.mxu0 0
    %2197 = vmatpush1.bf16.xpose.msra.mxu0 0
    %2198 = vmatprep.subr.bf16.mxu0 0
    %2199 = vmatpush1.bf16.xpose.msra.mxu0 0
    %2200 = vmatprep.subr.bf16.mxu0 0
    %2201 = vmatpush1.bf16.xpose.msra.mxu0 0
    %2202 = vmatprep.subr.bf16.mxu0 0
    %2203 = vmatpush1.bf16.xpose.msra.mxu0 0
    %2204 = vmatprep.subr.bf16.mxu0 0
    %2205 = vmatpush1.bf16.xpose.msra.mxu0 0
    %2206 = vmatprep.subr.bf16.mxu0 0
    %2207 = vmatpush1.bf16.xpose.msra.mxu0 0
    %2208 = vmatprep.subr.bf16.mxu0 0
    %2209 = vmatpush1.bf16.xpose.msra.mxu0 0
    %2210 = vmatprep.subr.bf16.mxu0 0
    %2211 = vmatpush1.bf16.xpose.msra.mxu0 0
    %2212 = vmatprep.subr.bf16.mxu0 0
    %2213 = vmatpush1.bf16.xpose.msra.mxu0 0
    %2214 = vmatprep.subr.bf16.mxu0 0
    %2215 = vmatpush1.bf16.xpose.msra.mxu0 0
    %2216 = vmatprep.subr.bf16.mxu0 0
    %2217 = vmatpush1.bf16.xpose.msra.mxu0 0
    %2218 = vmatprep.mubr.bf16.mxu0 0
    %2219 = vmatmul.mubr.bf16.gmra.mrb[0].mxu0 %v2181
    %v2220 = vpop.f32.mrb[0].mxu0
    %v2221 = vadd.f32 0.0, %v2220
    %v2222 = vpop.f32.mrb[0].mxu0
    %v2223 = vpop.f32.mrb[0].mxu0
    %v2224 = vpop.f32.mrb[0].mxu0
    %2225 = vdwg.mxu0
    %v2226 = vsel %vm309, %v2221, -inf
    %2227 = vmax.xlane.f32.xlu0 %v2226
    %v2228 = vpop.xlane.xlu0 %2227
    %v2229 = vsub.f32 %v2221, %v2228
    %v2230 = vmul.f32 %v2229, 1.442695
    %v2231 = vpow.pop %v2230
    %v2232 = vsel %vm309, %v2231, 0.0
    %2233 = vadd.xlane.f32.xlu0 %v2232
    %v2234 = vpop.xlane.xlu0 %2233
    %v2235 = vrcp.pop %v2234
    %v2236 = vmul.f32 %v2231, %v2235
    %v2237 = vpack.c.bf16 %v2236, %v2236
    %2238 = vrot.lane.b32.xlu0 %v2064, 88
    %v2239 = vpop.permute.xlu0 %2238
    %v2241 = vsel %vm309, %v2237, 0
    %v2244 = vsel %vm371, %v2239, 0
    %2246 = vmatprep.subr.bf16.mxu0 0
    %2247 = vmatpush1.bf16.msra.mxu0 %v2244
    %2248 = vmatprep.subr.bf16.mxu0 0
    %2249 = vmatpush1.bf16.msra.mxu0 0
    %2250 = vmatprep.subr.bf16.mxu0 0
    %2251 = vmatpush1.bf16.msra.mxu0 0
    %2252 = vmatprep.subr.bf16.mxu0 0
    %2253 = vmatpush1.bf16.msra.mxu0 0
    %2254 = vmatprep.subr.bf16.mxu0 0
    %2255 = vmatpush1.bf16.msra.mxu0 0
    %2256 = vmatprep.subr.bf16.mxu0 0
    %2257 = vmatpush1.bf16.msra.mxu0 0
    %2258 = vmatprep.subr.bf16.mxu0 0
    %2259 = vmatpush1.bf16.msra.mxu0 0
    %2260 = vmatprep.subr.bf16.mxu0 0
    %2261 = vmatpush1.bf16.msra.mxu0 0
    %2262 = vmatprep.subr.bf16.mxu0 0
    %2263 = vmatpush1.bf16.msra.mxu0 0
    %2264 = vmatprep.subr.bf16.mxu0 0
    %2265 = vmatpush1.bf16.msra.mxu0 0
    %2266 = vmatprep.subr.bf16.mxu0 0
    %2267 = vmatpush1.bf16.msra.mxu0 0
    %2268 = vmatprep.subr.bf16.mxu0 0
    %2269 = vmatpush1.bf16.msra.mxu0 0
    %2270 = vmatprep.subr.bf16.mxu0 0
    %2271 = vmatpush1.bf16.msra.mxu0 0
    %2272 = vmatprep.subr.bf16.mxu0 0
    %2273 = vmatpush1.bf16.msra.mxu0 0
    %2274 = vmatprep.subr.bf16.mxu0 0
    %2275 = vmatpush1.bf16.msra.mxu0 0
    %2276 = vmatprep.subr.bf16.mxu0 0
    %2277 = vmatpush1.bf16.msra.mxu0 0
    %2278 = vmatprep.mubr.bf16.mxu0 0
    %2279 = vmatmul.mubr.bf16.gmra.mrb[0].mxu0 %v2241
    %v2280 = vpop.f32.mrb[0].mxu0
    %v2281 = vadd.f32 0.0, %v2280
    %v2282 = vpop.f32.mrb[0].mxu0
    %v2283 = vpop.f32.mrb[0].mxu0
    %v2284 = vpop.f32.mrb[0].mxu0
    %2285 = vdwg.mxu0
    %2286 = vrot.lane.b32.xlu0 %v2062, 112
    %v2287 = vpop.permute.xlu0 %2286
    %2288 = vrot.lane.b32.xlu0 %v2063, 80
    %v2289 = vpop.permute.xlu0 %2288
    %v2291 = vsel %vm309, %v2287, 0
    %v2294 = vsel %vm309, %v2289, 0
    %2296 = vmatprep.subr.bf16.mxu0 0
    %2297 = vmatpush1.bf16.xpose.msra.mxu0 %v2294
    %2298 = vmatprep.subr.bf16.mxu0 0
    %2299 = vmatpush1.bf16.xpose.msra.mxu0 0
    %2300 = vmatprep.subr.bf16.mxu0 0
    %2301 = vmatpush1.bf16.xpose.msra.mxu0 0
    %2302 = vmatprep.subr.bf16.mxu0 0
    %2303 = vmatpush1.bf16.xpose.msra.mxu0 0
    %2304 = vmatprep.subr.bf16.mxu0 0
    %2305 = vmatpush1.bf16.xpose.msra.mxu0 0
    %2306 = vmatprep.subr.bf16.mxu0 0
    %2307 = vmatpush1.bf16.xpose.msra.mxu0 0
    %2308 = vmatprep.subr.bf16.mxu0 0
    %2309 = vmatpush1.bf16.xpose.msra.mxu0 0
    %2310 = vmatprep.subr.bf16.mxu0 0
    %2311 = vmatpush1.bf16.xpose.msra.mxu0 0
    %2312 = vmatprep.subr.bf16.mxu0 0
    %2313 = vmatpush1.bf16.xpose.msra.mxu0 0
    %2314 = vmatprep.subr.bf16.mxu0 0
    %2315 = vmatpush1.bf16.xpose.msra.mxu0 0
    %2316 = vmatprep.subr.bf16.mxu0 0
    %2317 = vmatpush1.bf16.xpose.msra.mxu0 0
    %2318 = vmatprep.subr.bf16.mxu0 0
    %2319 = vmatpush1.bf16.xpose.msra.mxu0 0
    %2320 = vmatprep.subr.bf16.mxu0 0
    %2321 = vmatpush1.bf16.xpose.msra.mxu0 0
    %2322 = vmatprep.subr.bf16.mxu0 0
    %2323 = vmatpush1.bf16.xpose.msra.mxu0 0
    %2324 = vmatprep.subr.bf16.mxu0 0
    %2325 = vmatpush1.bf16.xpose.msra.mxu0 0
    %2326 = vmatprep.subr.bf16.mxu0 0
    %2327 = vmatpush1.bf16.xpose.msra.mxu0 0
    %2328 = vmatprep.mubr.bf16.mxu0 0
    %2329 = vmatmul.mubr.bf16.gmra.mrb[0].mxu0 %v2291
    %v2330 = vpop.f32.mrb[0].mxu0
    %v2331 = vadd.f32 0.0, %v2330
    %v2332 = vpop.f32.mrb[0].mxu0
    %v2333 = vpop.f32.mrb[0].mxu0
    %v2334 = vpop.f32.mrb[0].mxu0
    %2335 = vdwg.mxu0
    %v2336 = vsel %vm309, %v2331, -inf
    %2337 = vmax.xlane.f32.xlu0 %v2336
    %v2338 = vpop.xlane.xlu0 %2337
    %v2339 = vsub.f32 %v2331, %v2338
    %v2340 = vmul.f32 %v2339, 1.442695
    %v2341 = vpow.pop %v2340
    %v2342 = vsel %vm309, %v2341, 0.0
    %2343 = vadd.xlane.f32.xlu0 %v2342
    %v2344 = vpop.xlane.xlu0 %2343
    %v2345 = vrcp.pop %v2344
    %v2346 = vmul.f32 %v2341, %v2345
    %v2347 = vpack.c.bf16 %v2346, %v2346
    %2348 = vrot.lane.b32.xlu0 %v2064, 80
    %v2349 = vpop.permute.xlu0 %2348
    %v2351 = vsel %vm309, %v2347, 0
    %v2354 = vsel %vm371, %v2349, 0
    %2356 = vmatprep.subr.bf16.mxu0 0
    %2357 = vmatpush1.bf16.msra.mxu0 %v2354
    %2358 = vmatprep.subr.bf16.mxu0 0
    %2359 = vmatpush1.bf16.msra.mxu0 0
    %2360 = vmatprep.subr.bf16.mxu0 0
    %2361 = vmatpush1.bf16.msra.mxu0 0
    %2362 = vmatprep.subr.bf16.mxu0 0
    %2363 = vmatpush1.bf16.msra.mxu0 0
    %2364 = vmatprep.subr.bf16.mxu0 0
    %2365 = vmatpush1.bf16.msra.mxu0 0
    %2366 = vmatprep.subr.bf16.mxu0 0
    %2367 = vmatpush1.bf16.msra.mxu0 0
    %2368 = vmatprep.subr.bf16.mxu0 0
    %2369 = vmatpush1.bf16.msra.mxu0 0
    %2370 = vmatprep.subr.bf16.mxu0 0
    %2371 = vmatpush1.bf16.msra.mxu0 0
    %2372 = vmatprep.subr.bf16.mxu0 0
    %2373 = vmatpush1.bf16.msra.mxu0 0
    %2374 = vmatprep.subr.bf16.mxu0 0
    %2375 = vmatpush1.bf16.msra.mxu0 0
    %2376 = vmatprep.subr.bf16.mxu0 0
    %2377 = vmatpush1.bf16.msra.mxu0 0
    %2378 = vmatprep.subr.bf16.mxu0 0
    %2379 = vmatpush1.bf16.msra.mxu0 0
    %2380 = vmatprep.subr.bf16.mxu0 0
    %2381 = vmatpush1.bf16.msra.mxu0 0
    %2382 = vmatprep.subr.bf16.mxu0 0
    %2383 = vmatpush1.bf16.msra.mxu0 0
    %2384 = vmatprep.subr.bf16.mxu0 0
    %2385 = vmatpush1.bf16.msra.mxu0 0
    %2386 = vmatprep.subr.bf16.mxu0 0
    %2387 = vmatpush1.bf16.msra.mxu0 0
    %2388 = vmatprep.mubr.bf16.mxu0 0
    %2389 = vmatmul.mubr.bf16.gmra.mrb[0].mxu0 %v2351
    %v2390 = vpop.f32.mrb[0].mxu0
    %v2391 = vadd.f32 0.0, %v2390
    %v2392 = vpop.f32.mrb[0].mxu0
    %v2393 = vpop.f32.mrb[0].mxu0
    %v2394 = vpop.f32.mrb[0].mxu0
    %2395 = vdwg.mxu0
    %2396 = vrot.lane.b32.xlu0 %v2062, 104
    %v2397 = vpop.permute.xlu0 %2396
    %2398 = vrot.lane.b32.xlu0 %v2063, 72
    %v2399 = vpop.permute.xlu0 %2398
    %v2401 = vsel %vm309, %v2397, 0
    %v2404 = vsel %vm309, %v2399, 0
    %2406 = vmatprep.subr.bf16.mxu0 0
    %2407 = vmatpush1.bf16.xpose.msra.mxu0 %v2404
    %2408 = vmatprep.subr.bf16.mxu0 0
    %2409 = vmatpush1.bf16.xpose.msra.mxu0 0
    %2410 = vmatprep.subr.bf16.mxu0 0
    %2411 = vmatpush1.bf16.xpose.msra.mxu0 0
    %2412 = vmatprep.subr.bf16.mxu0 0
    %2413 = vmatpush1.bf16.xpose.msra.mxu0 0
    %2414 = vmatprep.subr.bf16.mxu0 0
    %2415 = vmatpush1.bf16.xpose.msra.mxu0 0
    %2416 = vmatprep.subr.bf16.mxu0 0
    %2417 = vmatpush1.bf16.xpose.msra.mxu0 0
    %2418 = vmatprep.subr.bf16.mxu0 0
    %2419 = vmatpush1.bf16.xpose.msra.mxu0 0
    %2420 = vmatprep.subr.bf16.mxu0 0
    %2421 = vmatpush1.bf16.xpose.msra.mxu0 0
    %2422 = vmatprep.subr.bf16.mxu0 0
    %2423 = vmatpush1.bf16.xpose.msra.mxu0 0
    %2424 = vmatprep.subr.bf16.mxu0 0
    %2425 = vmatpush1.bf16.xpose.msra.mxu0 0
    %2426 = vmatprep.subr.bf16.mxu0 0
    %2427 = vmatpush1.bf16.xpose.msra.mxu0 0
    %2428 = vmatprep.subr.bf16.mxu0 0
    %2429 = vmatpush1.bf16.xpose.msra.mxu0 0
    %2430 = vmatprep.subr.bf16.mxu0 0
    %2431 = vmatpush1.bf16.xpose.msra.mxu0 0
    %2432 = vmatprep.subr.bf16.mxu0 0
    %2433 = vmatpush1.bf16.xpose.msra.mxu0 0
    %2434 = vmatprep.subr.bf16.mxu0 0
    %2435 = vmatpush1.bf16.xpose.msra.mxu0 0
    %2436 = vmatprep.subr.bf16.mxu0 0
    %2437 = vmatpush1.bf16.xpose.msra.mxu0 0
    %2438 = vmatprep.mubr.bf16.mxu0 0
    %2439 = vmatmul.mubr.bf16.gmra.mrb[0].mxu0 %v2401
    %v2440 = vpop.f32.mrb[0].mxu0
    %v2441 = vadd.f32 0.0, %v2440
    %v2442 = vpop.f32.mrb[0].mxu0
    %v2443 = vpop.f32.mrb[0].mxu0
    %v2444 = vpop.f32.mrb[0].mxu0
    %2445 = vdwg.mxu0
    %v2446 = vsel %vm309, %v2441, -inf
    %2447 = vmax.xlane.f32.xlu0 %v2446
    %v2448 = vpop.xlane.xlu0 %2447
    %v2449 = vsub.f32 %v2441, %v2448
    %v2450 = vmul.f32 %v2449, 1.442695
    %v2451 = vpow.pop %v2450
    %v2452 = vsel %vm309, %v2451, 0.0
    %2453 = vadd.xlane.f32.xlu0 %v2452
    %v2454 = vpop.xlane.xlu0 %2453
    %v2455 = vrcp.pop %v2454
    %v2456 = vmul.f32 %v2451, %v2455
    %v2457 = vpack.c.bf16 %v2456, %v2456
    %2458 = vrot.lane.b32.xlu0 %v2064, 72
    %v2459 = vpop.permute.xlu0 %2458
    %v2461 = vsel %vm309, %v2457, 0
    %v2464 = vsel %vm371, %v2459, 0
    %2466 = vmatprep.subr.bf16.mxu0 0
    %2467 = vmatpush1.bf16.msra.mxu0 %v2464
    %2468 = vmatprep.subr.bf16.mxu0 0
    %2469 = vmatpush1.bf16.msra.mxu0 0
    %2470 = vmatprep.subr.bf16.mxu0 0
    %2471 = vmatpush1.bf16.msra.mxu0 0
    %2472 = vmatprep.subr.bf16.mxu0 0
    %2473 = vmatpush1.bf16.msra.mxu0 0
    %2474 = vmatprep.subr.bf16.mxu0 0
    %2475 = vmatpush1.bf16.msra.mxu0 0
    %2476 = vmatprep.subr.bf16.mxu0 0
    %2477 = vmatpush1.bf16.msra.mxu0 0
    %2478 = vmatprep.subr.bf16.mxu0 0
    %2479 = vmatpush1.bf16.msra.mxu0 0
    %2480 = vmatprep.subr.bf16.mxu0 0
    %2481 = vmatpush1.bf16.msra.mxu0 0
    %2482 = vmatprep.subr.bf16.mxu0 0
    %2483 = vmatpush1.bf16.msra.mxu0 0
    %2484 = vmatprep.subr.bf16.mxu0 0
    %2485 = vmatpush1.bf16.msra.mxu0 0
    %2486 = vmatprep.subr.bf16.mxu0 0
    %2487 = vmatpush1.bf16.msra.mxu0 0
    %2488 = vmatprep.subr.bf16.mxu0 0
    %2489 = vmatpush1.bf16.msra.mxu0 0
    %2490 = vmatprep.subr.bf16.mxu0 0
    %2491 = vmatpush1.bf16.msra.mxu0 0
    %2492 = vmatprep.subr.bf16.mxu0 0
    %2493 = vmatpush1.bf16.msra.mxu0 0
    %2494 = vmatprep.subr.bf16.mxu0 0
    %2495 = vmatpush1.bf16.msra.mxu0 0
    %2496 = vmatprep.subr.bf16.mxu0 0
    %2497 = vmatpush1.bf16.msra.mxu0 0
    %2498 = vmatprep.mubr.bf16.mxu0 0
    %2499 = vmatmul.mubr.bf16.gmra.mrb[0].mxu0 %v2461
    %v2500 = vpop.f32.mrb[0].mxu0
    %v2501 = vadd.f32 0.0, %v2500
    %v2502 = vpop.f32.mrb[0].mxu0
    %v2503 = vpop.f32.mrb[0].mxu0
    %v2504 = vpop.f32.mrb[0].mxu0
    %2505 = vdwg.mxu0
    %2507 = vrot.lane.b32.xlu0 %v2281, 8
    %v2508 = vpop.permute.xlu0 %2507
    %2511 = vrot.lane.b32.xlu0 %v2391, 16
    %v2512 = vpop.permute.xlu0 %2511
    %2515 = vrot.lane.b32.xlu0 %v2501, 24
    %v2516 = vpop.permute.xlu0 %2515
    %v2518 = vsel %vm309, %v2170, %v2508
    %v2519 = vsel %vm761, %v2518, %v2512
    %v2520 = vsel %vm763, %v2519, %v2516
    %v2521 = vpack.c.bf16 %v2520, %v2061
    %s2522 = scalar_lea.vmem %s4, 16
    %v2523 = vld [vmem:[%s2522] sm:$0xf]
    %v2524 = vld [vmem:[%s2522 + $0x4] sm:$0xf]
    %v2525 = vld [vmem:[%s2522 + $0x8] sm:$0xf]
    %v2526 = vld [vmem:[%s2522 + $0xc] sm:$0xf]
    %v2527 = vlaneseq
    %v2528 = vshrl.u32 %v2527, 7
    %v2529 = vsub.s32 5, %v2528
    %v2530 = vrot.slane %v99, %v2529
    %v2535 = vunpack.c.l.b16 %v2523
    %v2536 = vunpack.c.l.b16 %v2524
    %v2537 = vunpack.c.l.b16 %v2525
    %v2538 = vunpack.c.l.b16 %v2526
    %v2539 = vpack.c.b16 %v2536, %v2535
    %v2540 = vpack.c.b16 %v2538, %v2537
    %v2544 = vsel %vm121, %v2521, 0
    %2546 = vmatprep.subr.bf16.mxu0 0
    %2547 = vmatpush1.bf16.msra.mxu0 %v2539
    %2548 = vmatprep.subr.bf16.mxu0 0
    %2549 = vmatpush1.bf16.msra.mxu0 %v2540
    %2550 = vmatprep.subr.bf16.mxu0 0
    %2551 = vmatpush1.bf16.msra.mxu0 0
    %2552 = vmatprep.subr.bf16.mxu0 0
    %2553 = vmatpush1.bf16.msra.mxu0 0
    %2554 = vmatprep.subr.bf16.mxu0 0
    %2555 = vmatpush1.bf16.msra.mxu0 0
    %2556 = vmatprep.subr.bf16.mxu0 0
    %2557 = vmatpush1.bf16.msra.mxu0 0
    %2558 = vmatprep.subr.bf16.mxu0 0
    %2559 = vmatpush1.bf16.msra.mxu0 0
    %2560 = vmatprep.subr.bf16.mxu0 0
    %2561 = vmatpush1.bf16.msra.mxu0 0
    %2562 = vmatprep.subr.bf16.mxu0 0
    %2563 = vmatpush1.bf16.msra.mxu0 0
    %2564 = vmatprep.subr.bf16.mxu0 0
    %2565 = vmatpush1.bf16.msra.mxu0 0
    %2566 = vmatprep.subr.bf16.mxu0 0
    %2567 = vmatpush1.bf16.msra.mxu0 0
    %2568 = vmatprep.subr.bf16.mxu0 0
    %2569 = vmatpush1.bf16.msra.mxu0 0
    %2570 = vmatprep.subr.bf16.mxu0 0
    %2571 = vmatpush1.bf16.msra.mxu0 0
    %2572 = vmatprep.subr.bf16.mxu0 0
    %2573 = vmatpush1.bf16.msra.mxu0 0
    %2574 = vmatprep.subr.bf16.mxu0 0
    %2575 = vmatpush1.bf16.msra.mxu0 0
    %2576 = vmatprep.subr.bf16.mxu0 0
    %2577 = vmatpush1.bf16.msra.mxu0 0
    %2578 = vmatprep.mubr.bf16.mxu0 0
    %2579 = vmatmul.mubr.bf16.gmra.mrb[0].mxu0 %v2544
    %v2580 = vpop.f32.mrb[0].mxu0
    %v2581 = vadd.f32 %v2530, %v2580
    %v2582 = vpop.f32.mrb[0].mxu0
    %v2583 = vpop.f32.mrb[0].mxu0
    %v2584 = vadd.f32 %v2530, %v2583
    %v2585 = vpop.f32.mrb[0].mxu0
    %2586 = vdwg.mxu0
    %v2587 = vadd.f32 %v1513, %v2581
    %v2588 = vadd.f32 %v1514, %v2584
    %v2589 = vsel %vm121, %v2587, 0.0
    %2590 = vadd.xlane.f32.xlu0 %v2589
    %v2591 = vpop.xlane.xlu0 %2590
    %v2592 = vsel %vm121, %v2588, 0.0
    %2593 = vadd.xlane.f32.xlu0 %v2592
    %v2594 = vpop.xlane.xlu0 %2593
    %v2595 = vmul.f32 %v2591, %v1293
    %v2596 = vmul.f32 %v2594, %v1293
    %v2597 = vsub.f32 %v2587, %v2595
    %v2598 = vsub.f32 %v2588, %v2596
    %v2599 = vmul.f32 %v2597, %v2597
    %v2600 = vmul.f32 %v2598, %v2598
    %v2601 = vsel %vm121, %v2599, 0.0
    %2602 = vadd.xlane.f32.xlu0 %v2601
    %v2603 = vpop.xlane.xlu0 %2602
    %v2604 = vsel %vm121, %v2600, 0.0
    %2605 = vadd.xlane.f32.xlu0 %v2604
    %v2606 = vpop.xlane.xlu0 %2605
    %v2607 = vmul.f32 %v2603, %v1293
    %v2608 = vmul.f32 %v2606, %v1293
    %v2609 = vadd.f32 %v2607, 1e-05
    %v2610 = vadd.f32 %v2608, 1e-05
    %v2611 = vrsqrt.pop %v2609
    %v2612 = vrsqrt.pop %v2610
    %v2613 = vmul.f32 %v2597, %v2611
    %v2614 = vmul.f32 %v2598, %v2612
    %v2615 = vlaneseq
    %v2616 = vshrl.u32 %v2615, 7
    %v2617 = vsub.s32 0, %v2616
    %v2618 = vrot.slane %v100, %v2617
    %v2619 = vmul.f32 %v2613, %v2618
    %v2620 = vmul.f32 %v2614, %v2618
    %v2621 = vlaneseq
    %v2622 = vshrl.u32 %v2621, 7
    %v2623 = vsub.s32 1, %v2622
    %v2624 = vrot.slane %v100, %v2623
    %v2625 = vadd.f32 %v2619, %v2624
    %v2626 = vadd.f32 %v2620, %v2624
    %v2627 = vpack.c.bf16 %v2626, %v2625
    %s2628 = scalar_lea.vmem [#allocation8], 16
    %v2629 = vld [vmem:[%s2628] sm:$0xf]
    %v2630 = vld [vmem:[%s2628 + $0x4] sm:$0xf]
    %v2631 = vld [vmem:[%s2628 + $0x8] sm:$0xf]
    %v2632 = vld [vmem:[%s2628 + $0xc] sm:$0xf]
    %v2633 = vlaneseq
    %v2634 = vshrl.u32 %v2633, 7
    %v2635 = vsub.s32 6, %v2634
    %v2636 = vrot.slane %v99, %v2635
    %v2641 = vunpack.c.l.b16 %v2629
    %v2642 = vunpack.c.l.b16 %v2630
    %v2643 = vunpack.c.l.b16 %v2631
    %v2644 = vunpack.c.l.b16 %v2632
    %v2645 = vpack.c.b16 %v2642, %v2641
    %v2646 = vpack.c.b16 %v2644, %v2643
    %v2650 = vsel %vm121, %v2627, 0
    %2652 = vmatprep.subr.bf16.mxu0 0
    %2653 = vmatpush1.bf16.msra.mxu0 %v2645
    %2654 = vmatprep.subr.bf16.mxu0 0
    %2655 = vmatpush1.bf16.msra.mxu0 %v2646
    %2656 = vmatprep.subr.bf16.mxu0 0
    %2657 = vmatpush1.bf16.msra.mxu0 0
    %2658 = vmatprep.subr.bf16.mxu0 0
    %2659 = vmatpush1.bf16.msra.mxu0 0
    %2660 = vmatprep.subr.bf16.mxu0 0
    %2661 = vmatpush1.bf16.msra.mxu0 0
    %2662 = vmatprep.subr.bf16.mxu0 0
    %2663 = vmatpush1.bf16.msra.mxu0 0
    %2664 = vmatprep.subr.bf16.mxu0 0
    %2665 = vmatpush1.bf16.msra.mxu0 0
    %2666 = vmatprep.subr.bf16.mxu0 0
    %2667 = vmatpush1.bf16.msra.mxu0 0
    %2668 = vmatprep.subr.bf16.mxu0 0
    %2669 = vmatpush1.bf16.msra.mxu0 0
    %2670 = vmatprep.subr.bf16.mxu0 0
    %2671 = vmatpush1.bf16.msra.mxu0 0
    %2672 = vmatprep.subr.bf16.mxu0 0
    %2673 = vmatpush1.bf16.msra.mxu0 0
    %2674 = vmatprep.subr.bf16.mxu0 0
    %2675 = vmatpush1.bf16.msra.mxu0 0
    %2676 = vmatprep.subr.bf16.mxu0 0
    %2677 = vmatpush1.bf16.msra.mxu0 0
    %2678 = vmatprep.subr.bf16.mxu0 0
    %2679 = vmatpush1.bf16.msra.mxu0 0
    %2680 = vmatprep.subr.bf16.mxu0 0
    %2681 = vmatpush1.bf16.msra.mxu0 0
    %2682 = vmatprep.subr.bf16.mxu0 0
    %2683 = vmatpush1.bf16.msra.mxu0 0
    %2684 = vmatprep.mubr.bf16.mxu0 0
    %2685 = vmatmul.mubr.bf16.gmra.mrb[0].mxu0 %v2650
    %v2686 = vpop.f32.mrb[0].mxu0
    %v2687 = vadd.f32 %v2636, %v2686
    %v2688 = vpop.f32.mrb[0].mxu0
    %v2689 = vpop.f32.mrb[0].mxu0
    %v2690 = vadd.f32 %v2636, %v2689
    %v2691 = vpop.f32.mrb[0].mxu0
    %2692 = vdwg.mxu0
    %v2693 = vmax.f32 %v2687, 0.0
    %v2694 = vmax.f32 %v2690, 0.0
    %v2695 = vpack.c.bf16 %v2694, %v2693
    %s2696 = scalar_lea.vmem %s7, 32
    %v2697 = vld [vmem:[%s2696] sm:$0xf]
    %v2698 = vld [vmem:[%s2696 + $0x4] sm:$0xf]
    %v2699 = vld [vmem:[%s2696 + $0x8] sm:$0xf]
    %v2700 = vld [vmem:[%s2696 + $0xc] sm:$0xf]
    %v2701 = vld [vmem:[%s2696 + $0x10] sm:$0xf]
    %v2702 = vld [vmem:[%s2696 + $0x14] sm:$0xf]
    %v2703 = vld [vmem:[%s2696 + $0x18] sm:$0xf]
    %v2704 = vld [vmem:[%s2696 + $0x1c] sm:$0xf]
    %v2705 = vlaneseq
    %v2706 = vshrl.u32 %v2705, 7
    %v2707 = vsub.s32 7, %v2706
    %v2708 = vrot.slane %v99, %v2707
    %v2717 = vunpack.c.l.b16 %v2697
    %v2718 = vunpack.c.l.b16 %v2698
    %v2719 = vunpack.c.l.b16 %v2699
    %v2720 = vunpack.c.l.b16 %v2700
    %v2721 = vunpack.c.l.b16 %v2701
    %v2722 = vunpack.c.l.b16 %v2702
    %v2723 = vunpack.c.l.b16 %v2703
    %v2724 = vunpack.c.l.b16 %v2704
    %v2725 = vpack.c.b16 %v2718, %v2717
    %v2726 = vpack.c.b16 %v2720, %v2719
    %v2727 = vpack.c.b16 %v2722, %v2721
    %v2728 = vpack.c.b16 %v2724, %v2723
    %v2734 = vsel %vm1430, %v2695, 0
    %2736 = vmatprep.subr.bf16.mxu0 0
    %2737 = vmatpush1.bf16.msra.mxu0 %v2725
    %2738 = vmatprep.subr.bf16.mxu0 0
    %2739 = vmatpush1.bf16.msra.mxu0 %v2726
    %2740 = vmatprep.subr.bf16.mxu0 0
    %2741 = vmatpush1.bf16.msra.mxu0 %v2727
    %2742 = vmatprep.subr.bf16.mxu0 0
    %2743 = vmatpush1.bf16.msra.mxu0 %v2728
    %2744 = vmatprep.subr.bf16.mxu0 0
    %2745 = vmatpush1.bf16.msra.mxu0 0
    %2746 = vmatprep.subr.bf16.mxu0 0
    %2747 = vmatpush1.bf16.msra.mxu0 0
    %2748 = vmatprep.subr.bf16.mxu0 0
    %2749 = vmatpush1.bf16.msra.mxu0 0
    %2750 = vmatprep.subr.bf16.mxu0 0
    %2751 = vmatpush1.bf16.msra.mxu0 0
    %2752 = vmatprep.subr.bf16.mxu0 0
    %2753 = vmatpush1.bf16.msra.mxu0 0
    %2754 = vmatprep.subr.bf16.mxu0 0
    %2755 = vmatpush1.bf16.msra.mxu0 0
    %2756 = vmatprep.subr.bf16.mxu0 0
    %2757 = vmatpush1.bf16.msra.mxu0 0
    %2758 = vmatprep.subr.bf16.mxu0 0
    %2759 = vmatpush1.bf16.msra.mxu0 0
    %2760 = vmatprep.subr.bf16.mxu0 0
    %2761 = vmatpush1.bf16.msra.mxu0 0
    %2762 = vmatprep.subr.bf16.mxu0 0
    %2763 = vmatpush1.bf16.msra.mxu0 0
    %2764 = vmatprep.subr.bf16.mxu0 0
    %2765 = vmatpush1.bf16.msra.mxu0 0
    %2766 = vmatprep.subr.bf16.mxu0 0
    %2767 = vmatpush1.bf16.msra.mxu0 0
    %2768 = vmatprep.mubr.bf16.mxu0 0
    %2769 = vmatmul.mubr.bf16.gmra.mrb[0].mxu0 %v2734
    %v2770 = vpop.f32.mrb[0].mxu0
    %v2771 = vadd.f32 %v2708, %v2770
    %v2772 = vpop.f32.mrb[0].mxu0
    %v2773 = vpop.f32.mrb[0].mxu0
    %v2774 = vadd.f32 %v2708, %v2773
    %v2775 = vpop.f32.mrb[0].mxu0
    %2776 = vdwg.mxu0
    %v2777 = vadd.f32 %v2625, %v2771
    %v2778 = vadd.f32 %v2626, %v2774
    %v2779 = vsel %vm121, %v2777, 0.0
    %2780 = vadd.xlane.f32.xlu0 %v2779
    %v2781 = vpop.xlane.xlu0 %2780
    %v2782 = vsel %vm121, %v2778, 0.0
    %2783 = vadd.xlane.f32.xlu0 %v2782
    %v2784 = vpop.xlane.xlu0 %2783
    %v2785 = vmul.f32 %v2781, %v1293
    %v2786 = vmul.f32 %v2784, %v1293
    %v2787 = vsub.f32 %v2777, %v2785
    %v2788 = vsub.f32 %v2778, %v2786
    %v2789 = vmul.f32 %v2787, %v2787
    %v2790 = vmul.f32 %v2788, %v2788
    %v2791 = vsel %vm121, %v2789, 0.0
    %2792 = vadd.xlane.f32.xlu0 %v2791
    %v2793 = vpop.xlane.xlu0 %2792
    %v2794 = vsel %vm121, %v2790, 0.0
    %2795 = vadd.xlane.f32.xlu0 %v2794
    %v2796 = vpop.xlane.xlu0 %2795
    %v2797 = vmul.f32 %v2793, %v1293
    %v2798 = vmul.f32 %v2796, %v1293
    %v2799 = vadd.f32 %v2797, 1e-05
    %v2800 = vadd.f32 %v2798, 1e-05
    %v2801 = vrsqrt.pop %v2799
    %v2802 = vrsqrt.pop %v2800
    %v2803 = vmul.f32 %v2787, %v2801
    %v2804 = vmul.f32 %v2788, %v2802
    %v2805 = vlaneseq
    %v2806 = vshrl.u32 %v2805, 7
    %v2807 = vsub.s32 2, %v2806
    %v2808 = vrot.slane %v100, %v2807
    %v2809 = vmul.f32 %v2803, %v2808
    %v2810 = vmul.f32 %v2804, %v2808
    %v2811 = vlaneseq
    %v2812 = vshrl.u32 %v2811, 7
    %v2813 = vsub.s32 3, %v2812
    %v2814 = vrot.slane %v100, %v2813
    %v2815 = vadd.f32 %v2809, %v2814
    %v2816 = vadd.f32 %v2810, %v2814
    %v2817 = vsel %vm121, %v2815, 0.0
    %2818 = vadd.xlane.f32.xlu0 %v2817
    %v2819 = vpop.xlane.xlu0 %2818
    %v2820 = vsel %vm121, %v2816, 0.0
    %2821 = vadd.xlane.f32.xlu0 %v2820
    %v2822 = vpop.xlane.xlu0 %2821
    %v2823 = vmul.f32 %v2819, %v1293
    %v2824 = vmul.f32 %v2822, %v1293
    %v2825 = vsub.f32 %v2815, %v2823
    %v2826 = vsub.f32 %v2816, %v2824
    %v2827 = vmul.f32 %v2825, %v2825
    %v2828 = vmul.f32 %v2826, %v2826
    %v2829 = vsel %vm121, %v2827, 0.0
    %2830 = vadd.xlane.f32.xlu0 %v2829
    %v2831 = vpop.xlane.xlu0 %2830
    %v2832 = vsel %vm121, %v2828, 0.0
    %2833 = vadd.xlane.f32.xlu0 %v2832
    %v2834 = vpop.xlane.xlu0 %2833
    %v2835 = vmul.f32 %v2831, %v1293
    %v2836 = vmul.f32 %v2834, %v1293
    %v2837 = vadd.f32 %v2835, 1e-05
    %v2838 = vadd.f32 %v2836, 1e-05
    %v2839 = vrsqrt.pop %v2837
    %v2840 = vrsqrt.pop %v2838
    %v2841 = vmul.f32 %v2825, %v2839
    %v2842 = vmul.f32 %v2826, %v2840
    %v2843 = vlaneseq
    %v2844 = vshrl.u32 %v2843, 7
    %v2845 = vsub.s32 4, %v2844
    %v2846 = vrot.slane %v100, %v2845
    %v2847 = vmul.f32 %v2841, %v2846
    %v2848 = vmul.f32 %v2842, %v2846
    %v2849 = vlaneseq
    %v2850 = vshrl.u32 %v2849, 7
    %v2851 = vsub.s32 5, %v2850
    %v2852 = vrot.slane %v100, %v2851
    %v2853 = vadd.f32 %v2847, %v2852
    %v2854 = vadd.f32 %v2848, %v2852
    %2855 = vst.msk [vmem:[#allocation10] sm:$0xff] %vm121, %v2853
    %s2856 = scalar_lea.vmem [#allocation10], 8
    %2857 = vst.msk [vmem:[%s2856] sm:$0xff] %vm121, %v2854
    // Predicated region
    $region54: #{tpu_custom_call.1} parent=1 // pred_check
      _
    $region55: #{tpu_custom_call.1} parent=1 // pred_check_branch
      %2859 = sbr.rel (0) target = $region57
    $region56: #{tpu_custom_call.1} parent=1 // pred_region
      %s2861 = ssub.s32 256, 256
      %2862 = vsyncadd [#allocation4], %s2861
      %s2863 = sshll.u32 [#allocation10], 4
      %s2864 = int_to_ptr.vmem [resolvable:$true] %s2863
      %2869 = dma.vmem_to_hbm [thread:$0]  %s2864, 256, %s9, [#allocation4], 128, 128, 8
    $region57: #{tpu_custom_call.1} parent=1 // pred_fallthru
      _
    // Predicated region
    $region58: #{tpu_custom_call.1} parent=1 // pred_check
      _
    $region59: #{tpu_custom_call.1} parent=1 // pred_check_branch
      %2871 = sbr.rel (0) target = $region61
    $region60: #{tpu_custom_call.1} parent=1 // pred_region
      %2872 = dma.done [#allocation4], 256
    $region61: #{tpu_custom_call.1} parent=1 // pred_fallthru
      _
    %2873 = vsyncpa [#allocation3], 1
    %2874 = vsyncpa [#allocation6], 1
    %2875 = vsyncpa [#allocation9], 1
    %2876 = vsyncpa [#allocation4], 1

</llo_original>
